<compile_context>
chip_gen: v7x
topology: tpu7x:2x2x1
jax: 0.10.0
libtpu: 0.0.40
codegen_flags: <defaults>
</compile_context>

<pallas_src>
import jax
import jax.numpy as jnp
from jax import lax
from jax.experimental import pallas as pl
from jax.experimental.pallas import tpu as pltpu

LANE = 128
SUBLANE = 8


def _round_up(x, m):
    return (x + m - 1) // m * m


# ----------------------------- Pallas kernel --------------------------------

def seqback_kernel(ids_ref, lens_ref, root_ref, emb_ref,
                   wih0_ref, whh0_ref, b0_ref,
                   w1_ref, b1_ref,
                   wdec_ref, bdec_ref,
                   out_ref, xp_ref):
    """Single invocation: all sentences folded into one batch of Bp paths.

    ids_ref  : (T*Bp, 1) int32   time-major flattened token ids (row = t*Bp + b)
    lens_ref : (Bp, 1)   int32   valid length per path (0 for padded rows)
    root_ref : (Bp, Hp)  f32     per-path root vector, lane-padded with zeros
    emb_ref  : (V, D)    f32     embedding table
    wih0_ref : (D, 4*Hp) f32     layer-0 input weights; gate order (i, f, o, g),
                                 each gate in its own 128-aligned lane stripe
    whh0_ref : (Hp, 4*Hp) f32    layer-0 recurrent weights (rows >= H are zero)
    b0_ref   : (1, 4*Hp)  f32    combined b_ih0 + b_hh0
    w1_ref   : (2*Hp, 4*Hp) f32  fused layer-1 weights: rows [0,Hp) = w_ih1,
                                 rows [Hp,2Hp) = w_hh1  -> one matmul per step
    b1_ref   : (1, 4*Hp)  f32    combined b_ih1 + b_hh1
    wdec_ref : (Hp, Vpad) f32    decoder (rows >= H zero, cols >= V zero)
    bdec_ref : (1, Vpad)  f32
    out_ref  : (Bp, Vpad) f32    logits at each path's last valid timestep
    xp_ref   : (T*Bp, 4*Hp) f32  VMEM scratch: hoisted layer-0 input projection
    """
    TB = ids_ref.shape[0]
    V, D = emb_ref.shape
    Hp = whh0_ref.shape[0]
    Bp = lens_ref.shape[0]
    T = TB // Bp

    # --- Embedding gather fused as a 2-D one-hot @ emb MXU matmul (exact). ---
    # TODO(synk): at realistic vocab sizes replace with a scalar-prefetched /
    # DMA row gather so cost scales with D instead of V.
    viota = lax.broadcasted_iota(jnp.int32, (TB, V), 1)
    onehot = (ids_ref[...] == viota).astype(jnp.float32)               # (TB, V)
    x = jnp.dot(onehot, emb_ref[...], preferred_element_type=jnp.float32)  # (TB, D)

    # --- Layer-0 input projection hoisted out of the recurrence. -------------
    xp_ref[...] = (jnp.dot(x, wih0_ref[...], preferred_element_type=jnp.float32)
                   + b0_ref[...])

    root = root_ref[...]                                               # (Bp, Hp)
    # Broadcast lengths along lanes ONCE; the per-step mask is then a pure VALU
    # compare against the scalar loop index.
    lens_b = jnp.broadcast_to(lens_ref[...], root.shape)               # (Bp, Hp)

    whh0 = whh0_ref[...]
    w1 = w1_ref[...]
    b1 = b1_ref[...]

    def cell(gates, c_prev):
        # Gate stripes are 128-lane aligned -> slices are vreg-aligned.
        sig = jax.nn.sigmoid(gates[:, :3 * Hp])            # i, f, o in one pass
        i = sig[:, 0 * Hp:1 * Hp]
        f = sig[:, 1 * Hp:2 * Hp]
        o = sig[:, 2 * Hp:3 * Hp]
        g = jnp.tanh(gates[:, 3 * Hp:4 * Hp])
        c_new = f * c_prev + i * g
        h_new = o * jnp.tanh(c_new)
        return h_new, c_new

    def step(t, carry):
        h0, c0, h1, c1, h_last = carry
        start = pl.multiple_of(t * Bp, SUBLANE)            # Bp is a multiple of 8
        xp_t = xp_ref[pl.ds(start, Bp), :]                 # (Bp, 4Hp)
        g0 = xp_t + jnp.dot(h0, whh0, preferred_element_type=jnp.float32)
        h0, c0 = cell(g0, c0)
        # TODO(synk): inter-layer dropout (p=0.5) omitted -- eval-mode semantics.
        # Fused layer-1 matmul: [h0, h1] @ [w_ih1; w_hh1]  (one MXU op per step).
        h01 = jnp.concatenate([h0, h1], axis=1)            # (Bp, 2Hp)
        g1 = jnp.dot(h01, w1, preferred_element_type=jnp.float32) + b1
        h1, c1 = cell(g1, c1)
        h_last = jnp.where(lens_b == t + 1, h1, h_last)    # pick last valid step
        return h0, c0, h1, c1, h_last

    init = (root, root, root, root, jnp.zeros(root.shape, jnp.float32))
    _, _, _, _, h_last = lax.fori_loop(0, T, step, init, unroll=True)

    # --- Decoder (lane-dense output: Vpad is a multiple of 128). -------------
    out_ref[...] = (jnp.dot(h_last, wdec_ref[...], preferred_element_type=jnp.float32)
                    + bdec_ref[...])


# ------------------------------- Wrapper -------------------------------------

@jax.jit
def seqback_lstm_forward(params, path_ids, lengths, roots):
    """All sentences in ONE pallas_call with a single invocation.

    path_ids: (S, B, T) int32  padded token-id paths per sentence
    lengths : (S, B)    int32  valid path lengths (>= 1)
    roots   : (S, H)    f32    sentence root vectors
    returns : (S, B, V) f32    logits at each path's last valid timestep
    """
    emb = params["emb"]
    V, D = emb.shape
    H = params["w_hh0"].shape[0]
    Hp = params["whh0_pad"].shape[0]
    Vpad = params["wdec_pad"].shape[1]
    S, B, T = path_ids.shape

    Bt = S * B
    Bp = _round_up(Bt, SUBLANE)              # sublane-align the folded batch

    ids = path_ids.astype(jnp.int32).reshape(Bt, T)
    ids = jnp.pad(ids, ((0, Bp - Bt), (0, 0)))
    ids_col = ids.T.reshape(T * Bp, 1)       # time-major, one column of ids

    lens = lengths.astype(jnp.int32).reshape(Bt, 1)
    lens = jnp.pad(lens, ((0, Bp - Bt), (0, 0)))    # padded rows: len 0 -> zeros

    roots_rep = jnp.repeat(roots.astype(jnp.float32), B, axis=0)     # (Bt, H)
    roots_p = jnp.pad(roots_rep, ((0, Bp - Bt), (0, Hp - H)))        # (Bp, Hp)

    out = pl.pallas_call(
        seqback_kernel,
        out_shape=jax.ShapeDtypeStruct((Bp, Vpad), jnp.float32),
        scratch_shapes=[pltpu.VMEM((T * Bp, 4 * Hp), jnp.float32)],
    )(ids_col, lens, roots_p,
      emb,
      params["wih0_pad"], params["whh0_pad"], params["b0_pad"],
      params["w1_pad"], params["b1_pad"],
      params["wdec_pad"], params["bdec_pad"])

    return out[:Bt, :V].reshape(S, B, V)


# ------------------------- Parameter initialization --------------------------

def _scatter_gate_cols(w, H, Hp):
    """(rows, 4H) -> (rows, 4Hp): each gate in its own Hp-lane-aligned stripe."""
    rows = w.shape[0]
    out = jnp.zeros((rows, 4 * Hp), w.dtype)
    for g in range(4):
        out = out.at[:, g * Hp:g * Hp + H].set(w[:, g * H:(g + 1) * H])
    return out


def init_params(key, vocab_size, embedding_dim=32, hidden_dim=32):
    D, H, V = embedding_dim, hidden_dim, vocab_size
    Hp = _round_up(H, LANE)
    Vpad = _round_up(V, LANE)
    ks = jax.random.split(key, 10)
    s = 1.0 / jnp.sqrt(jnp.float32(H))       # PyTorch LSTM default init range

    def u(k, shape, r):
        return jax.random.uniform(k, shape, jnp.float32, -r, r)

    # Compact ("reference") weights, pre-transposed to (in, 4H); gate column
    # order (i, f, o, g); biases are combined b_ih + b_hh.
    # NOTE: importing trained PyTorch LSTM weights (gate order i, f, g, o)
    # requires permuting the 4H gate blocks accordingly.
    w_ih0 = u(ks[1], (D, 4 * H), s)
    w_hh0 = u(ks[2], (H, 4 * H), s)
    b0 = u(ks[3], (1, 4 * H), s) + u(ks[4], (1, 4 * H), s)
    w_ih1 = u(ks[5], (H, 4 * H), s)
    w_hh1 = u(ks[6], (H, 4 * H), s)
    b1 = u(ks[7], (1, 4 * H), s) + u(ks[9], (1, 4 * H), s)
    w_dec = u(ks[8], (H, V), 0.1)            # decoder: uniform(-0.1, 0.1)
    b_dec = jnp.zeros((1, V), jnp.float32)   # decoder bias zeroed (init_weights)

    # Kernel ("padded") weights: hidden axis padded to Hp and every gate placed
    # in its own 128-lane stripe -> all gate/state slices are vreg-aligned.
    # Padding is zeros, so valid-lane math is identical to the compact weights.
    wih0_pad = _scatter_gate_cols(w_ih0, H, Hp)
    whh0_pad = jnp.zeros((Hp, 4 * Hp), jnp.float32).at[:H].set(
        _scatter_gate_cols(w_hh0, H, Hp))
    b0_pad = _scatter_gate_cols(b0, H, Hp)
    # Fused layer-1 weight: [w_ih1; w_hh1] stacked on the contraction axis.
    w1_pad = jnp.zeros((2 * Hp, 4 * Hp), jnp.float32)
    w1_pad = w1_pad.at[:H].set(_scatter_gate_cols(w_ih1, H, Hp))
    w1_pad = w1_pad.at[Hp:Hp + H].set(_scatter_gate_cols(w_hh1, H, Hp))
    b1_pad = _scatter_gate_cols(b1, H, Hp)
    wdec_pad = jnp.zeros((Hp, Vpad), jnp.float32).at[:H, :V].set(w_dec)
    bdec_pad = jnp.zeros((1, Vpad), jnp.float32).at[:, :V].set(b_dec)

    # TODO(synk): at real dims (D=300, V~10k) store emb / decoder / LSTM weights
    # in bf16 (f32 accumulation via preferred_element_type), tile Vpad with a
    # grid axis, and set vmem_limit_bytes so the kernel fits v7x's 64 MiB VMEM.
    return {
        "emb": jax.random.normal(ks[0], (V, D), jnp.float32),
        "w_ih0": w_ih0, "w_hh0": w_hh0, "b0": b0,
        "w_ih1": w_ih1, "w_hh1": w_hh1, "b1": b1,
        "w_dec": w_dec, "b_dec": b_dec,
        "wih0_pad": wih0_pad, "whh0_pad": whh0_pad, "b0_pad": b0_pad,
        "w1_pad": w1_pad, "b1_pad": b1_pad,
        "wdec_pad": wdec_pad, "bdec_pad": bdec_pad,
    }


# ----------------------------- Pure-JAX reference ----------------------------

def _cell_ref(gates, c_prev, H):
    i = jax.nn.sigmoid(gates[:, 0 * H:1 * H])
    f = jax.nn.sigmoid(gates[:, 1 * H:2 * H])
    o = jax.nn.sigmoid(gates[:, 2 * H:3 * H])
    g = jnp.tanh(gates[:, 3 * H:4 * H])
    c_new = f * c_prev + i * g
    return o * jnp.tanh(c_new), c_new


def reference_forward(params, path_ids, lengths, roots):
    """Pure-JAX reference with identical math (compact, unpadded weights)."""
    S, B, T = path_ids.shape
    H = params["w_hh0"].shape[0]
    outs = []
    for s in range(S):
        x = jnp.take(params["emb"], path_ids[s], axis=0).astype(jnp.float32)  # (B,T,D)
        h = jnp.broadcast_to(roots[s][None, :], (B, H)).astype(jnp.float32)
        h0, c0, h1, c1 = h, h, h, h
        h_last = jnp.zeros((B, H), jnp.float32)
        lens = lengths[s].astype(jnp.int32).reshape(B, 1)
        for t in range(T):
            g0 = x[:, t, :] @ params["w_ih0"] + h0 @ params["w_hh0"] + params["b0"]
            h0, c0 = _cell_ref(g0, c0, H)
            g1 = h0 @ params["w_ih1"] + h1 @ params["w_hh1"] + params["b1"]
            h1, c1 = _cell_ref(g1, c1, H)
            h_last = jnp.where(lens == (t + 1), h1, h_last)
        outs.append(h_last @ params["w_dec"] + params["b_dec"])
    return jnp.stack(outs, axis=0)


# ---------------------------------- Main --------------------------------------

if __name__ == "__main__":
    key = jax.random.PRNGKey(0)
    k_param, k_ids, k_len, k_root = jax.random.split(key, 4)

    VOCAB = 64          # vocab.size()
    D = 32              # embedding_dim == hidden_dim (scaled from 300)
    NUM_SENT = 2        # len(path_set)
    NUM_PATHS = 8       # paths per sentence
    MAX_LEN = 8         # max path length (T)

    params = init_params(k_param, VOCAB, embedding_dim=D, hidden_dim=D)

    # Synthetic path_set: token ids padded to MAX_LEN, with per-path lengths.
    path_ids = jax.random.randint(k_ids, (NUM_SENT, NUM_PATHS, MAX_LEN),
                                  0, VOCAB, dtype=jnp.int32)
    lengths = jax.random.randint(k_len, (NUM_SENT, NUM_PATHS),
                                 1, MAX_LEN + 1, dtype=jnp.int32)
    # zero out padded positions (matches np.zeros + fill in the PyTorch code)
    pos = jnp.arange(MAX_LEN, dtype=jnp.int32)[None, None, :]
    path_ids = jnp.where(pos < lengths[:, :, None], path_ids, 0)
    roots = jax.random.normal(k_root, (NUM_SENT, D), jnp.float32)

    out = seqback_lstm_forward(params, path_ids, lengths, roots)
    out = jax.block_until_ready(out)

    ref = reference_forward(params, path_ids, lengths, roots)
    assert out.shape == (NUM_SENT, NUM_PATHS, VOCAB), out.shape
    assert jnp.allclose(out, ref, atol=1e-4, rtol=1e-4), "mismatch vs reference"

    print("KERNEL_OK")
</pallas_src>

<mosaic_0001>
module attributes {stable_mosaic.version = 11 : i64} {
  func.func @seqback_kernel(%arg0: memref<128x1xi32, #tpu.memory_space<vmem>>, %arg1: memref<16x1xi32, #tpu.memory_space<vmem>>, %arg2: memref<16x128xf32, #tpu.memory_space<vmem>>, %arg3: memref<64x32xf32, #tpu.memory_space<vmem>>, %arg4: memref<32x512xf32, #tpu.memory_space<vmem>>, %arg5: memref<128x512xf32, #tpu.memory_space<vmem>>, %arg6: memref<1x512xf32, #tpu.memory_space<vmem>>, %arg7: memref<256x512xf32, #tpu.memory_space<vmem>>, %arg8: memref<1x512xf32, #tpu.memory_space<vmem>>, %arg9: memref<128x128xf32, #tpu.memory_space<vmem>>, %arg10: memref<1x128xf32, #tpu.memory_space<vmem>>, %arg11: memref<16x128xf32, #tpu.memory_space<vmem>>, %arg12: memref<128x512xf32, #tpu.memory_space<vmem>>) attributes {dimension_semantics = [], scalar_prefetch = 0 : i64, scratch_operands = 1 : i64, tpu.core_type = #tpu.core_type<tc>} {
    %0 = tpu.iota {dimensions = array<i32: 1>} : vector<128x64xi32>
    %c0 = arith.constant 0 : index
    %c0_0 = arith.constant 0 : index
    %1 = vector.load %arg0[%c0, %c0_0] : memref<128x1xi32, #tpu.memory_space<vmem>>, vector<128x1xi32>
    %2 = vector.broadcast %1 : vector<128x1xi32> to vector<128x64xi32>
    %3 = arith.cmpi eq, %2, %0 : vector<128x64xi32>
    %4 = arith.extui %3 : vector<128x64xi1> to vector<128x64xi32>
    %5 = arith.sitofp %4 : vector<128x64xi32> to vector<128x64xf32>
    %c0_1 = arith.constant 0 : index
    %c0_2 = arith.constant 0 : index
    %6 = vector.load %arg3[%c0_1, %c0_2] : memref<64x32xf32, #tpu.memory_space<vmem>>, vector<64x32xf32>
    %cst = arith.constant dense<0.000000e+00> : vector<128x32xf32>
    %7 = tpu.matmul %5, %6, %cst {dimension_numbers = #tpu.dot_dimension_numbers<[1], [0], [0], [1], [0, 0, 1, 1], [], []>} : vector<128x64xf32>, vector<64x32xf32>, vector<128x32xf32> -> vector<128x32xf32>
    %c0_3 = arith.constant 0 : index
    %c0_4 = arith.constant 0 : index
    %8 = vector.load %arg4[%c0_3, %c0_4] : memref<32x512xf32, #tpu.memory_space<vmem>>, vector<32x512xf32>
    %cst_5 = arith.constant dense<0.000000e+00> : vector<128x512xf32>
    %9 = tpu.matmul %7, %8, %cst_5 {dimension_numbers = #tpu.dot_dimension_numbers<[1], [0], [0], [1], [0, 0, 1, 1], [], []>} : vector<128x32xf32>, vector<32x512xf32>, vector<128x512xf32> -> vector<128x512xf32>
    %c0_6 = arith.constant 0 : index
    %c0_7 = arith.constant 0 : index
    %10 = vector.load %arg6[%c0_6, %c0_7] : memref<1x512xf32, #tpu.memory_space<vmem>>, vector<1x512xf32>
    %11 = vector.broadcast %10 : vector<1x512xf32> to vector<128x512xf32>
    %12 = arith.addf %9, %11 : vector<128x512xf32>
    %c0_8 = arith.constant 0 : index
    %c0_9 = arith.constant 0 : index
    %13 = vector.load %arg12[%c0_8, %c0_9] : memref<128x512xf32, #tpu.memory_space<vmem>>, vector<128x512xf32>
    tpu.vector_store %arg12[%c0_8, %c0_9], %12 {strides = array<i32>} : memref<128x512xf32, #tpu.memory_space<vmem>>, vector<128x512xf32>,
    %c0_10 = arith.constant 0 : index
    %c0_11 = arith.constant 0 : index
    %14 = vector.load %arg2[%c0_10, %c0_11] : memref<16x128xf32, #tpu.memory_space<vmem>>, vector<16x128xf32>
    %c0_12 = arith.constant 0 : index
    %c0_13 = arith.constant 0 : index
    %15 = vector.load %arg1[%c0_12, %c0_13] : memref<16x1xi32, #tpu.memory_space<vmem>>, vector<16x1xi32>
    %16 = vector.shape_cast %15 : vector<16x1xi32> to vector<16x1xi32>
    %17 = vector.broadcast %16 : vector<16x1xi32> to vector<16x128xi32>
    %c0_14 = arith.constant 0 : index
    %c0_15 = arith.constant 0 : index
    %18 = vector.load %arg5[%c0_14, %c0_15] : memref<128x512xf32, #tpu.memory_space<vmem>>, vector<128x512xf32>
    %c0_16 = arith.constant 0 : index
    %c0_17 = arith.constant 0 : index
    %19 = vector.load %arg7[%c0_16, %c0_17] : memref<256x512xf32, #tpu.memory_space<vmem>>, vector<256x512xf32>
    %c0_18 = arith.constant 0 : index
    %c0_19 = arith.constant 0 : index
    %20 = vector.load %arg8[%c0_18, %c0_19] : memref<1x512xf32, #tpu.memory_space<vmem>>, vector<1x512xf32>
    %cst_20 = arith.constant 0.000000e+00 : f32
    %21 = vector.broadcast %cst_20 : f32 to vector<16x128xf32>
    %c0_i32 = arith.constant 0 : i32
    %c16_i32 = arith.constant 16 : i32
    %22 = arith.muli %c0_i32, %c16_i32 : i32
    %23 = tpu.assume_multiple %22, 8 : i32
    %24 = arith.index_cast %23 : i32 to index
    %c0_21 = arith.constant 0 : index
    %25 = vector.load %arg12[%24, %c0_21] : memref<128x512xf32, #tpu.memory_space<vmem>>, vector<16x512xf32>
    %cst_22 = arith.constant dense<0.000000e+00> : vector<16x512xf32>
    %26 = tpu.matmul %14, %18, %cst_22 {dimension_numbers = #tpu.dot_dimension_numbers<[1], [0], [0], [1], [0, 0, 1, 1], [], []>} : vector<16x128xf32>, vector<128x512xf32>, vector<16x512xf32> -> vector<16x512xf32>
    %27 = arith.addf %25, %26 : vector<16x512xf32>
    %28 = vector.extract_strided_slice %27 {offsets = [0, 0], sizes = [16, 384], strides = [1, 1]} : vector<16x512xf32> to vector<16x384xf32>
    %29 = arith.negf %28 : vector<16x384xf32>
    %30 = math.exp %29 : vector<16x384xf32>
    %cst_23 = arith.constant 1.000000e+00 : f32
    %31 = vector.broadcast %cst_23 : f32 to vector<16x384xf32>
    %32 = arith.addf %31, %30 : vector<16x384xf32>
    %33 = arith.divf %31, %32 : vector<16x384xf32>
    %34 = vector.extract_strided_slice %33 {offsets = [0, 0], sizes = [16, 128], strides = [1, 1]} : vector<16x384xf32> to vector<16x128xf32>
    %35 = vector.extract_strided_slice %33 {offsets = [0, 128], sizes = [16, 128], strides = [1, 1]} : vector<16x384xf32> to vector<16x128xf32>
    %36 = vector.extract_strided_slice %33 {offsets = [0, 256], sizes = [16, 128], strides = [1, 1]} : vector<16x384xf32> to vector<16x128xf32>
    %37 = vector.extract_strided_slice %27 {offsets = [0, 384], sizes = [16, 128], strides = [1, 1]} : vector<16x512xf32> to vector<16x128xf32>
    %38 = math.tanh %37 : vector<16x128xf32>
    %39 = arith.mulf %35, %14 : vector<16x128xf32>
    %40 = arith.mulf %34, %38 : vector<16x128xf32>
    %41 = arith.addf %39, %40 : vector<16x128xf32>
    %42 = math.tanh %41 : vector<16x128xf32>
    %43 = arith.mulf %36, %42 : vector<16x128xf32>
    %44 = tpu.concatenate %43, %14 in 1 : vector<16x128xf32>, vector<16x128xf32> -> vector<16x256xf32>
    %cst_24 = arith.constant dense<0.000000e+00> : vector<16x512xf32>
    %45 = tpu.matmul %44, %19, %cst_24 {dimension_numbers = #tpu.dot_dimension_numbers<[1], [0], [0], [1], [0, 0, 1, 1], [], []>} : vector<16x256xf32>, vector<256x512xf32>, vector<16x512xf32> -> vector<16x512xf32>
    %46 = vector.broadcast %20 : vector<1x512xf32> to vector<16x512xf32>
    %47 = arith.addf %45, %46 : vector<16x512xf32>
    %48 = vector.extract_strided_slice %47 {offsets = [0, 0], sizes = [16, 384], strides = [1, 1]} : vector<16x512xf32> to vector<16x384xf32>
    %49 = arith.negf %48 : vector<16x384xf32>
    %50 = math.exp %49 : vector<16x384xf32>
    %cst_25 = arith.constant 1.000000e+00 : f32
    %51 = vector.broadcast %cst_25 : f32 to vector<16x384xf32>
    %52 = arith.addf %51, %50 : vector<16x384xf32>
    %53 = arith.divf %51, %52 : vector<16x384xf32>
    %54 = vector.extract_strided_slice %53 {offsets = [0, 0], sizes = [16, 128], strides = [1, 1]} : vector<16x384xf32> to vector<16x128xf32>
    %55 = vector.extract_strided_slice %53 {offsets = [0, 128], sizes = [16, 128], strides = [1, 1]} : vector<16x384xf32> to vector<16x128xf32>
    %56 = vector.extract_strided_slice %53 {offsets = [0, 256], sizes = [16, 128], strides = [1, 1]} : vector<16x384xf32> to vector<16x128xf32>
    %57 = vector.extract_strided_slice %47 {offsets = [0, 384], sizes = [16, 128], strides = [1, 1]} : vector<16x512xf32> to vector<16x128xf32>
    %58 = math.tanh %57 : vector<16x128xf32>
    %59 = arith.mulf %55, %14 : vector<16x128xf32>
    %60 = arith.mulf %54, %58 : vector<16x128xf32>
    %61 = arith.addf %59, %60 : vector<16x128xf32>
    %62 = math.tanh %61 : vector<16x128xf32>
    %63 = arith.mulf %56, %62 : vector<16x128xf32>
    %c1_i32 = arith.constant 1 : i32
    %64 = arith.addi %c0_i32, %c1_i32 : i32
    %65 = vector.broadcast %64 : i32 to vector<16x128xi32>
    %66 = arith.cmpi eq, %17, %65 : vector<16x128xi32>
    %67 = arith.select %66, %63, %21 : vector<16x128xi1>, vector<16x128xf32>
    %c1_i32_26 = arith.constant 1 : i32
    %c16_i32_27 = arith.constant 16 : i32
    %68 = arith.muli %c1_i32_26, %c16_i32_27 : i32
    %69 = tpu.assume_multiple %68, 8 : i32
    %70 = arith.index_cast %69 : i32 to index
    %c0_28 = arith.constant 0 : index
    %71 = vector.load %arg12[%70, %c0_28] : memref<128x512xf32, #tpu.memory_space<vmem>>, vector<16x512xf32>
    %cst_29 = arith.constant dense<0.000000e+00> : vector<16x512xf32>
    %72 = tpu.matmul %43, %18, %cst_29 {dimension_numbers = #tpu.dot_dimension_numbers<[1], [0], [0], [1], [0, 0, 1, 1], [], []>} : vector<16x128xf32>, vector<128x512xf32>, vector<16x512xf32> -> vector<16x512xf32>
    %73 = arith.addf %71, %72 : vector<16x512xf32>
    %74 = vector.extract_strided_slice %73 {offsets = [0, 0], sizes = [16, 384], strides = [1, 1]} : vector<16x512xf32> to vector<16x384xf32>
    %75 = arith.negf %74 : vector<16x384xf32>
    %76 = math.exp %75 : vector<16x384xf32>
    %cst_30 = arith.constant 1.000000e+00 : f32
    %77 = vector.broadcast %cst_30 : f32 to vector<16x384xf32>
    %78 = arith.addf %77, %76 : vector<16x384xf32>
    %79 = arith.divf %77, %78 : vector<16x384xf32>
    %80 = vector.extract_strided_slice %79 {offsets = [0, 0], sizes = [16, 128], strides = [1, 1]} : vector<16x384xf32> to vector<16x128xf32>
    %81 = vector.extract_strided_slice %79 {offsets = [0, 128], sizes = [16, 128], strides = [1, 1]} : vector<16x384xf32> to vector<16x128xf32>
    %82 = vector.extract_strided_slice %79 {offsets = [0, 256], sizes = [16, 128], strides = [1, 1]} : vector<16x384xf32> to vector<16x128xf32>
    %83 = vector.extract_strided_slice %73 {offsets = [0, 384], sizes = [16, 128], strides = [1, 1]} : vector<16x512xf32> to vector<16x128xf32>
    %84 = math.tanh %83 : vector<16x128xf32>
    %85 = arith.mulf %81, %41 : vector<16x128xf32>
    %86 = arith.mulf %80, %84 : vector<16x128xf32>
    %87 = arith.addf %85, %86 : vector<16x128xf32>
    %88 = math.tanh %87 : vector<16x128xf32>
    %89 = arith.mulf %82, %88 : vector<16x128xf32>
    %90 = tpu.concatenate %89, %63 in 1 : vector<16x128xf32>, vector<16x128xf32> -> vector<16x256xf32>
    %cst_31 = arith.constant dense<0.000000e+00> : vector<16x512xf32>
    %91 = tpu.matmul %90, %19, %cst_31 {dimension_numbers = #tpu.dot_dimension_numbers<[1], [0], [0], [1], [0, 0, 1, 1], [], []>} : vector<16x256xf32>, vector<256x512xf32>, vector<16x512xf32> -> vector<16x512xf32>
    %92 = vector.broadcast %20 : vector<1x512xf32> to vector<16x512xf32>
    %93 = arith.addf %91, %92 : vector<16x512xf32>
    %94 = vector.extract_strided_slice %93 {offsets = [0, 0], sizes = [16, 384], strides = [1, 1]} : vector<16x512xf32> to vector<16x384xf32>
    %95 = arith.negf %94 : vector<16x384xf32>
    %96 = math.exp %95 : vector<16x384xf32>
    %cst_32 = arith.constant 1.000000e+00 : f32
    %97 = vector.broadcast %cst_32 : f32 to vector<16x384xf32>
    %98 = arith.addf %97, %96 : vector<16x384xf32>
    %99 = arith.divf %97, %98 : vector<16x384xf32>
    %100 = vector.extract_strided_slice %99 {offsets = [0, 0], sizes = [16, 128], strides = [1, 1]} : vector<16x384xf32> to vector<16x128xf32>
    %101 = vector.extract_strided_slice %99 {offsets = [0, 128], sizes = [16, 128], strides = [1, 1]} : vector<16x384xf32> to vector<16x128xf32>
    %102 = vector.extract_strided_slice %99 {offsets = [0, 256], sizes = [16, 128], strides = [1, 1]} : vector<16x384xf32> to vector<16x128xf32>
    %103 = vector.extract_strided_slice %93 {offsets = [0, 384], sizes = [16, 128], strides = [1, 1]} : vector<16x512xf32> to vector<16x128xf32>
    %104 = math.tanh %103 : vector<16x128xf32>
    %105 = arith.mulf %101, %61 : vector<16x128xf32>
    %106 = arith.mulf %100, %104 : vector<16x128xf32>
    %107 = arith.addf %105, %106 : vector<16x128xf32>
    %108 = math.tanh %107 : vector<16x128xf32>
    %109 = arith.mulf %102, %108 : vector<16x128xf32>
    %c1_i32_33 = arith.constant 1 : i32
    %110 = arith.addi %c1_i32_26, %c1_i32_33 : i32
    %111 = vector.broadcast %110 : i32 to vector<16x128xi32>
    %112 = arith.cmpi eq, %17, %111 : vector<16x128xi32>
    %113 = arith.select %112, %109, %67 : vector<16x128xi1>, vector<16x128xf32>
    %c2_i32 = arith.constant 2 : i32
    %c16_i32_34 = arith.constant 16 : i32
    %114 = arith.muli %c2_i32, %c16_i32_34 : i32
    %115 = tpu.assume_multiple %114, 8 : i32
    %116 = arith.index_cast %115 : i32 to index
    %c0_35 = arith.constant 0 : index
    %117 = vector.load %arg12[%116, %c0_35] : memref<128x512xf32, #tpu.memory_space<vmem>>, vector<16x512xf32>
    %cst_36 = arith.constant dense<0.000000e+00> : vector<16x512xf32>
    %118 = tpu.matmul %89, %18, %cst_36 {dimension_numbers = #tpu.dot_dimension_numbers<[1], [0], [0], [1], [0, 0, 1, 1], [], []>} : vector<16x128xf32>, vector<128x512xf32>, vector<16x512xf32> -> vector<16x512xf32>
    %119 = arith.addf %117, %118 : vector<16x512xf32>
    %120 = vector.extract_strided_slice %119 {offsets = [0, 0], sizes = [16, 384], strides = [1, 1]} : vector<16x512xf32> to vector<16x384xf32>
    %121 = arith.negf %120 : vector<16x384xf32>
    %122 = math.exp %121 : vector<16x384xf32>
    %cst_37 = arith.constant 1.000000e+00 : f32
    %123 = vector.broadcast %cst_37 : f32 to vector<16x384xf32>
    %124 = arith.addf %123, %122 : vector<16x384xf32>
    %125 = arith.divf %123, %124 : vector<16x384xf32>
    %126 = vector.extract_strided_slice %125 {offsets = [0, 0], sizes = [16, 128], strides = [1, 1]} : vector<16x384xf32> to vector<16x128xf32>
    %127 = vector.extract_strided_slice %125 {offsets = [0, 128], sizes = [16, 128], strides = [1, 1]} : vector<16x384xf32> to vector<16x128xf32>
    %128 = vector.extract_strided_slice %125 {offsets = [0, 256], sizes = [16, 128], strides = [1, 1]} : vector<16x384xf32> to vector<16x128xf32>
    %129 = vector.extract_strided_slice %119 {offsets = [0, 384], sizes = [16, 128], strides = [1, 1]} : vector<16x512xf32> to vector<16x128xf32>
    %130 = math.tanh %129 : vector<16x128xf32>
    %131 = arith.mulf %127, %87 : vector<16x128xf32>
    %132 = arith.mulf %126, %130 : vector<16x128xf32>
    %133 = arith.addf %131, %132 : vector<16x128xf32>
    %134 = math.tanh %133 : vector<16x128xf32>
    %135 = arith.mulf %128, %134 : vector<16x128xf32>
    %136 = tpu.concatenate %135, %109 in 1 : vector<16x128xf32>, vector<16x128xf32> -> vector<16x256xf32>
    %cst_38 = arith.constant dense<0.000000e+00> : vector<16x512xf32>
    %137 = tpu.matmul %136, %19, %cst_38 {dimension_numbers = #tpu.dot_dimension_numbers<[1], [0], [0], [1], [0, 0, 1, 1], [], []>} : vector<16x256xf32>, vector<256x512xf32>, vector<16x512xf32> -> vector<16x512xf32>
    %138 = vector.broadcast %20 : vector<1x512xf32> to vector<16x512xf32>
    %139 = arith.addf %137, %138 : vector<16x512xf32>
    %140 = vector.extract_strided_slice %139 {offsets = [0, 0], sizes = [16, 384], strides = [1, 1]} : vector<16x512xf32> to vector<16x384xf32>
    %141 = arith.negf %140 : vector<16x384xf32>
    %142 = math.exp %141 : vector<16x384xf32>
    %cst_39 = arith.constant 1.000000e+00 : f32
    %143 = vector.broadcast %cst_39 : f32 to vector<16x384xf32>
    %144 = arith.addf %143, %142 : vector<16x384xf32>
    %145 = arith.divf %143, %144 : vector<16x384xf32>
    %146 = vector.extract_strided_slice %145 {offsets = [0, 0], sizes = [16, 128], strides = [1, 1]} : vector<16x384xf32> to vector<16x128xf32>
    %147 = vector.extract_strided_slice %145 {offsets = [0, 128], sizes = [16, 128], strides = [1, 1]} : vector<16x384xf32> to vector<16x128xf32>
    %148 = vector.extract_strided_slice %145 {offsets = [0, 256], sizes = [16, 128], strides = [1, 1]} : vector<16x384xf32> to vector<16x128xf32>
    %149 = vector.extract_strided_slice %139 {offsets = [0, 384], sizes = [16, 128], strides = [1, 1]} : vector<16x512xf32> to vector<16x128xf32>
    %150 = math.tanh %149 : vector<16x128xf32>
    %151 = arith.mulf %147, %107 : vector<16x128xf32>
    %152 = arith.mulf %146, %150 : vector<16x128xf32>
    %153 = arith.addf %151, %152 : vector<16x128xf32>
    %154 = math.tanh %153 : vector<16x128xf32>
    %155 = arith.mulf %148, %154 : vector<16x128xf32>
    %c1_i32_40 = arith.constant 1 : i32
    %156 = arith.addi %c2_i32, %c1_i32_40 : i32
    %157 = vector.broadcast %156 : i32 to vector<16x128xi32>
    %158 = arith.cmpi eq, %17, %157 : vector<16x128xi32>
    %159 = arith.select %158, %155, %113 : vector<16x128xi1>, vector<16x128xf32>
    %c3_i32 = arith.constant 3 : i32
    %c16_i32_41 = arith.constant 16 : i32
    %160 = arith.muli %c3_i32, %c16_i32_41 : i32
    %161 = tpu.assume_multiple %160, 8 : i32
    %162 = arith.index_cast %161 : i32 to index
    %c0_42 = arith.constant 0 : index
    %163 = vector.load %arg12[%162, %c0_42] : memref<128x512xf32, #tpu.memory_space<vmem>>, vector<16x512xf32>
    %cst_43 = arith.constant dense<0.000000e+00> : vector<16x512xf32>
    %164 = tpu.matmul %135, %18, %cst_43 {dimension_numbers = #tpu.dot_dimension_numbers<[1], [0], [0], [1], [0, 0, 1, 1], [], []>} : vector<16x128xf32>, vector<128x512xf32>, vector<16x512xf32> -> vector<16x512xf32>
    %165 = arith.addf %163, %164 : vector<16x512xf32>
    %166 = vector.extract_strided_slice %165 {offsets = [0, 0], sizes = [16, 384], strides = [1, 1]} : vector<16x512xf32> to vector<16x384xf32>
    %167 = arith.negf %166 : vector<16x384xf32>
    %168 = math.exp %167 : vector<16x384xf32>
    %cst_44 = arith.constant 1.000000e+00 : f32
    %169 = vector.broadcast %cst_44 : f32 to vector<16x384xf32>
    %170 = arith.addf %169, %168 : vector<16x384xf32>
    %171 = arith.divf %169, %170 : vector<16x384xf32>
    %172 = vector.extract_strided_slice %171 {offsets = [0, 0], sizes = [16, 128], strides = [1, 1]} : vector<16x384xf32> to vector<16x128xf32>
    %173 = vector.extract_strided_slice %171 {offsets = [0, 128], sizes = [16, 128], strides = [1, 1]} : vector<16x384xf32> to vector<16x128xf32>
    %174 = vector.extract_strided_slice %171 {offsets = [0, 256], sizes = [16, 128], strides = [1, 1]} : vector<16x384xf32> to vector<16x128xf32>
    %175 = vector.extract_strided_slice %165 {offsets = [0, 384], sizes = [16, 128], strides = [1, 1]} : vector<16x512xf32> to vector<16x128xf32>
    %176 = math.tanh %175 : vector<16x128xf32>
    %177 = arith.mulf %173, %133 : vector<16x128xf32>
    %178 = arith.mulf %172, %176 : vector<16x128xf32>
    %179 = arith.addf %177, %178 : vector<16x128xf32>
    %180 = math.tanh %179 : vector<16x128xf32>
    %181 = arith.mulf %174, %180 : vector<16x128xf32>
    %182 = tpu.concatenate %181, %155 in 1 : vector<16x128xf32>, vector<16x128xf32> -> vector<16x256xf32>
    %cst_45 = arith.constant dense<0.000000e+00> : vector<16x512xf32>
    %183 = tpu.matmul %182, %19, %cst_45 {dimension_numbers = #tpu.dot_dimension_numbers<[1], [0], [0], [1], [0, 0, 1, 1], [], []>} : vector<16x256xf32>, vector<256x512xf32>, vector<16x512xf32> -> vector<16x512xf32>
    %184 = vector.broadcast %20 : vector<1x512xf32> to vector<16x512xf32>
    %185 = arith.addf %183, %184 : vector<16x512xf32>
    %186 = vector.extract_strided_slice %185 {offsets = [0, 0], sizes = [16, 384], strides = [1, 1]} : vector<16x512xf32> to vector<16x384xf32>
    %187 = arith.negf %186 : vector<16x384xf32>
    %188 = math.exp %187 : vector<16x384xf32>
    %cst_46 = arith.constant 1.000000e+00 : f32
    %189 = vector.broadcast %cst_46 : f32 to vector<16x384xf32>
    %190 = arith.addf %189, %188 : vector<16x384xf32>
    %191 = arith.divf %189, %190 : vector<16x384xf32>
    %192 = vector.extract_strided_slice %191 {offsets = [0, 0], sizes = [16, 128], strides = [1, 1]} : vector<16x384xf32> to vector<16x128xf32>
    %193 = vector.extract_strided_slice %191 {offsets = [0, 128], sizes = [16, 128], strides = [1, 1]} : vector<16x384xf32> to vector<16x128xf32>
    %194 = vector.extract_strided_slice %191 {offsets = [0, 256], sizes = [16, 128], strides = [1, 1]} : vector<16x384xf32> to vector<16x128xf32>
    %195 = vector.extract_strided_slice %185 {offsets = [0, 384], sizes = [16, 128], strides = [1, 1]} : vector<16x512xf32> to vector<16x128xf32>
    %196 = math.tanh %195 : vector<16x128xf32>
    %197 = arith.mulf %193, %153 : vector<16x128xf32>
    %198 = arith.mulf %192, %196 : vector<16x128xf32>
    %199 = arith.addf %197, %198 : vector<16x128xf32>
    %200 = math.tanh %199 : vector<16x128xf32>
    %201 = arith.mulf %194, %200 : vector<16x128xf32>
    %c1_i32_47 = arith.constant 1 : i32
    %202 = arith.addi %c3_i32, %c1_i32_47 : i32
    %203 = vector.broadcast %202 : i32 to vector<16x128xi32>
    %204 = arith.cmpi eq, %17, %203 : vector<16x128xi32>
    %205 = arith.select %204, %201, %159 : vector<16x128xi1>, vector<16x128xf32>
    %c4_i32 = arith.constant 4 : i32
    %c16_i32_48 = arith.constant 16 : i32
    %206 = arith.muli %c4_i32, %c16_i32_48 : i32
    %207 = tpu.assume_multiple %206, 8 : i32
    %208 = arith.index_cast %207 : i32 to index
    %c0_49 = arith.constant 0 : index
    %209 = vector.load %arg12[%208, %c0_49] : memref<128x512xf32, #tpu.memory_space<vmem>>, vector<16x512xf32>
    %cst_50 = arith.constant dense<0.000000e+00> : vector<16x512xf32>
    %210 = tpu.matmul %181, %18, %cst_50 {dimension_numbers = #tpu.dot_dimension_numbers<[1], [0], [0], [1], [0, 0, 1, 1], [], []>} : vector<16x128xf32>, vector<128x512xf32>, vector<16x512xf32> -> vector<16x512xf32>
    %211 = arith.addf %209, %210 : vector<16x512xf32>
    %212 = vector.extract_strided_slice %211 {offsets = [0, 0], sizes = [16, 384], strides = [1, 1]} : vector<16x512xf32> to vector<16x384xf32>
    %213 = arith.negf %212 : vector<16x384xf32>
    %214 = math.exp %213 : vector<16x384xf32>
    %cst_51 = arith.constant 1.000000e+00 : f32
    %215 = vector.broadcast %cst_51 : f32 to vector<16x384xf32>
    %216 = arith.addf %215, %214 : vector<16x384xf32>
    %217 = arith.divf %215, %216 : vector<16x384xf32>
    %218 = vector.extract_strided_slice %217 {offsets = [0, 0], sizes = [16, 128], strides = [1, 1]} : vector<16x384xf32> to vector<16x128xf32>
    %219 = vector.extract_strided_slice %217 {offsets = [0, 128], sizes = [16, 128], strides = [1, 1]} : vector<16x384xf32> to vector<16x128xf32>
    %220 = vector.extract_strided_slice %217 {offsets = [0, 256], sizes = [16, 128], strides = [1, 1]} : vector<16x384xf32> to vector<16x128xf32>
    %221 = vector.extract_strided_slice %211 {offsets = [0, 384], sizes = [16, 128], strides = [1, 1]} : vector<16x512xf32> to vector<16x128xf32>
    %222 = math.tanh %221 : vector<16x128xf32>
    %223 = arith.mulf %219, %179 : vector<16x128xf32>
    %224 = arith.mulf %218, %222 : vector<16x128xf32>
    %225 = arith.addf %223, %224 : vector<16x128xf32>
    %226 = math.tanh %225 : vector<16x128xf32>
    %227 = arith.mulf %220, %226 : vector<16x128xf32>
    %228 = tpu.concatenate %227, %201 in 1 : vector<16x128xf32>, vector<16x128xf32> -> vector<16x256xf32>
    %cst_52 = arith.constant dense<0.000000e+00> : vector<16x512xf32>
    %229 = tpu.matmul %228, %19, %cst_52 {dimension_numbers = #tpu.dot_dimension_numbers<[1], [0], [0], [1], [0, 0, 1, 1], [], []>} : vector<16x256xf32>, vector<256x512xf32>, vector<16x512xf32> -> vector<16x512xf32>
    %230 = vector.broadcast %20 : vector<1x512xf32> to vector<16x512xf32>
    %231 = arith.addf %229, %230 : vector<16x512xf32>
    %232 = vector.extract_strided_slice %231 {offsets = [0, 0], sizes = [16, 384], strides = [1, 1]} : vector<16x512xf32> to vector<16x384xf32>
    %233 = arith.negf %232 : vector<16x384xf32>
    %234 = math.exp %233 : vector<16x384xf32>
    %cst_53 = arith.constant 1.000000e+00 : f32
    %235 = vector.broadcast %cst_53 : f32 to vector<16x384xf32>
    %236 = arith.addf %235, %234 : vector<16x384xf32>
    %237 = arith.divf %235, %236 : vector<16x384xf32>
    %238 = vector.extract_strided_slice %237 {offsets = [0, 0], sizes = [16, 128], strides = [1, 1]} : vector<16x384xf32> to vector<16x128xf32>
    %239 = vector.extract_strided_slice %237 {offsets = [0, 128], sizes = [16, 128], strides = [1, 1]} : vector<16x384xf32> to vector<16x128xf32>
    %240 = vector.extract_strided_slice %237 {offsets = [0, 256], sizes = [16, 128], strides = [1, 1]} : vector<16x384xf32> to vector<16x128xf32>
    %241 = vector.extract_strided_slice %231 {offsets = [0, 384], sizes = [16, 128], strides = [1, 1]} : vector<16x512xf32> to vector<16x128xf32>
    %242 = math.tanh %241 : vector<16x128xf32>
    %243 = arith.mulf %239, %199 : vector<16x128xf32>
    %244 = arith.mulf %238, %242 : vector<16x128xf32>
    %245 = arith.addf %243, %244 : vector<16x128xf32>
    %246 = math.tanh %245 : vector<16x128xf32>
    %247 = arith.mulf %240, %246 : vector<16x128xf32>
    %c1_i32_54 = arith.constant 1 : i32
    %248 = arith.addi %c4_i32, %c1_i32_54 : i32
    %249 = vector.broadcast %248 : i32 to vector<16x128xi32>
    %250 = arith.cmpi eq, %17, %249 : vector<16x128xi32>
    %251 = arith.select %250, %247, %205 : vector<16x128xi1>, vector<16x128xf32>
    %c5_i32 = arith.constant 5 : i32
    %c16_i32_55 = arith.constant 16 : i32
    %252 = arith.muli %c5_i32, %c16_i32_55 : i32
    %253 = tpu.assume_multiple %252, 8 : i32
    %254 = arith.index_cast %253 : i32 to index
    %c0_56 = arith.constant 0 : index
    %255 = vector.load %arg12[%254, %c0_56] : memref<128x512xf32, #tpu.memory_space<vmem>>, vector<16x512xf32>
    %cst_57 = arith.constant dense<0.000000e+00> : vector<16x512xf32>
    %256 = tpu.matmul %227, %18, %cst_57 {dimension_numbers = #tpu.dot_dimension_numbers<[1], [0], [0], [1], [0, 0, 1, 1], [], []>} : vector<16x128xf32>, vector<128x512xf32>, vector<16x512xf32> -> vector<16x512xf32>
    %257 = arith.addf %255, %256 : vector<16x512xf32>
    %258 = vector.extract_strided_slice %257 {offsets = [0, 0], sizes = [16, 384], strides = [1, 1]} : vector<16x512xf32> to vector<16x384xf32>
    %259 = arith.negf %258 : vector<16x384xf32>
    %260 = math.exp %259 : vector<16x384xf32>
    %cst_58 = arith.constant 1.000000e+00 : f32
    %261 = vector.broadcast %cst_58 : f32 to vector<16x384xf32>
    %262 = arith.addf %261, %260 : vector<16x384xf32>
    %263 = arith.divf %261, %262 : vector<16x384xf32>
    %264 = vector.extract_strided_slice %263 {offsets = [0, 0], sizes = [16, 128], strides = [1, 1]} : vector<16x384xf32> to vector<16x128xf32>
    %265 = vector.extract_strided_slice %263 {offsets = [0, 128], sizes = [16, 128], strides = [1, 1]} : vector<16x384xf32> to vector<16x128xf32>
    %266 = vector.extract_strided_slice %263 {offsets = [0, 256], sizes = [16, 128], strides = [1, 1]} : vector<16x384xf32> to vector<16x128xf32>
    %267 = vector.extract_strided_slice %257 {offsets = [0, 384], sizes = [16, 128], strides = [1, 1]} : vector<16x512xf32> to vector<16x128xf32>
    %268 = math.tanh %267 : vector<16x128xf32>
    %269 = arith.mulf %265, %225 : vector<16x128xf32>
    %270 = arith.mulf %264, %268 : vector<16x128xf32>
    %271 = arith.addf %269, %270 : vector<16x128xf32>
    %272 = math.tanh %271 : vector<16x128xf32>
    %273 = arith.mulf %266, %272 : vector<16x128xf32>
    %274 = tpu.concatenate %273, %247 in 1 : vector<16x128xf32>, vector<16x128xf32> -> vector<16x256xf32>
    %cst_59 = arith.constant dense<0.000000e+00> : vector<16x512xf32>
    %275 = tpu.matmul %274, %19, %cst_59 {dimension_numbers = #tpu.dot_dimension_numbers<[1], [0], [0], [1], [0, 0, 1, 1], [], []>} : vector<16x256xf32>, vector<256x512xf32>, vector<16x512xf32> -> vector<16x512xf32>
    %276 = vector.broadcast %20 : vector<1x512xf32> to vector<16x512xf32>
    %277 = arith.addf %275, %276 : vector<16x512xf32>
    %278 = vector.extract_strided_slice %277 {offsets = [0, 0], sizes = [16, 384], strides = [1, 1]} : vector<16x512xf32> to vector<16x384xf32>
    %279 = arith.negf %278 : vector<16x384xf32>
    %280 = math.exp %279 : vector<16x384xf32>
    %cst_60 = arith.constant 1.000000e+00 : f32
    %281 = vector.broadcast %cst_60 : f32 to vector<16x384xf32>
    %282 = arith.addf %281, %280 : vector<16x384xf32>
    %283 = arith.divf %281, %282 : vector<16x384xf32>
    %284 = vector.extract_strided_slice %283 {offsets = [0, 0], sizes = [16, 128], strides = [1, 1]} : vector<16x384xf32> to vector<16x128xf32>
    %285 = vector.extract_strided_slice %283 {offsets = [0, 128], sizes = [16, 128], strides = [1, 1]} : vector<16x384xf32> to vector<16x128xf32>
    %286 = vector.extract_strided_slice %283 {offsets = [0, 256], sizes = [16, 128], strides = [1, 1]} : vector<16x384xf32> to vector<16x128xf32>
    %287 = vector.extract_strided_slice %277 {offsets = [0, 384], sizes = [16, 128], strides = [1, 1]} : vector<16x512xf32> to vector<16x128xf32>
    %288 = math.tanh %287 : vector<16x128xf32>
    %289 = arith.mulf %285, %245 : vector<16x128xf32>
    %290 = arith.mulf %284, %288 : vector<16x128xf32>
    %291 = arith.addf %289, %290 : vector<16x128xf32>
    %292 = math.tanh %291 : vector<16x128xf32>
    %293 = arith.mulf %286, %292 : vector<16x128xf32>
    %c1_i32_61 = arith.constant 1 : i32
    %294 = arith.addi %c5_i32, %c1_i32_61 : i32
    %295 = vector.broadcast %294 : i32 to vector<16x128xi32>
    %296 = arith.cmpi eq, %17, %295 : vector<16x128xi32>
    %297 = arith.select %296, %293, %251 : vector<16x128xi1>, vector<16x128xf32>
    %c6_i32 = arith.constant 6 : i32
    %c16_i32_62 = arith.constant 16 : i32
    %298 = arith.muli %c6_i32, %c16_i32_62 : i32
    %299 = tpu.assume_multiple %298, 8 : i32
    %300 = arith.index_cast %299 : i32 to index
    %c0_63 = arith.constant 0 : index
    %301 = vector.load %arg12[%300, %c0_63] : memref<128x512xf32, #tpu.memory_space<vmem>>, vector<16x512xf32>
    %cst_64 = arith.constant dense<0.000000e+00> : vector<16x512xf32>
    %302 = tpu.matmul %273, %18, %cst_64 {dimension_numbers = #tpu.dot_dimension_numbers<[1], [0], [0], [1], [0, 0, 1, 1], [], []>} : vector<16x128xf32>, vector<128x512xf32>, vector<16x512xf32> -> vector<16x512xf32>
    %303 = arith.addf %301, %302 : vector<16x512xf32>
    %304 = vector.extract_strided_slice %303 {offsets = [0, 0], sizes = [16, 384], strides = [1, 1]} : vector<16x512xf32> to vector<16x384xf32>
    %305 = arith.negf %304 : vector<16x384xf32>
    %306 = math.exp %305 : vector<16x384xf32>
    %cst_65 = arith.constant 1.000000e+00 : f32
    %307 = vector.broadcast %cst_65 : f32 to vector<16x384xf32>
    %308 = arith.addf %307, %306 : vector<16x384xf32>
    %309 = arith.divf %307, %308 : vector<16x384xf32>
    %310 = vector.extract_strided_slice %309 {offsets = [0, 0], sizes = [16, 128], strides = [1, 1]} : vector<16x384xf32> to vector<16x128xf32>
    %311 = vector.extract_strided_slice %309 {offsets = [0, 128], sizes = [16, 128], strides = [1, 1]} : vector<16x384xf32> to vector<16x128xf32>
    %312 = vector.extract_strided_slice %309 {offsets = [0, 256], sizes = [16, 128], strides = [1, 1]} : vector<16x384xf32> to vector<16x128xf32>
    %313 = vector.extract_strided_slice %303 {offsets = [0, 384], sizes = [16, 128], strides = [1, 1]} : vector<16x512xf32> to vector<16x128xf32>
    %314 = math.tanh %313 : vector<16x128xf32>
    %315 = arith.mulf %311, %271 : vector<16x128xf32>
    %316 = arith.mulf %310, %314 : vector<16x128xf32>
    %317 = arith.addf %315, %316 : vector<16x128xf32>
    %318 = math.tanh %317 : vector<16x128xf32>
    %319 = arith.mulf %312, %318 : vector<16x128xf32>
    %320 = tpu.concatenate %319, %293 in 1 : vector<16x128xf32>, vector<16x128xf32> -> vector<16x256xf32>
    %cst_66 = arith.constant dense<0.000000e+00> : vector<16x512xf32>
    %321 = tpu.matmul %320, %19, %cst_66 {dimension_numbers = #tpu.dot_dimension_numbers<[1], [0], [0], [1], [0, 0, 1, 1], [], []>} : vector<16x256xf32>, vector<256x512xf32>, vector<16x512xf32> -> vector<16x512xf32>
    %322 = vector.broadcast %20 : vector<1x512xf32> to vector<16x512xf32>
    %323 = arith.addf %321, %322 : vector<16x512xf32>
    %324 = vector.extract_strided_slice %323 {offsets = [0, 0], sizes = [16, 384], strides = [1, 1]} : vector<16x512xf32> to vector<16x384xf32>
    %325 = arith.negf %324 : vector<16x384xf32>
    %326 = math.exp %325 : vector<16x384xf32>
    %cst_67 = arith.constant 1.000000e+00 : f32
    %327 = vector.broadcast %cst_67 : f32 to vector<16x384xf32>
    %328 = arith.addf %327, %326 : vector<16x384xf32>
    %329 = arith.divf %327, %328 : vector<16x384xf32>
    %330 = vector.extract_strided_slice %329 {offsets = [0, 0], sizes = [16, 128], strides = [1, 1]} : vector<16x384xf32> to vector<16x128xf32>
    %331 = vector.extract_strided_slice %329 {offsets = [0, 128], sizes = [16, 128], strides = [1, 1]} : vector<16x384xf32> to vector<16x128xf32>
    %332 = vector.extract_strided_slice %329 {offsets = [0, 256], sizes = [16, 128], strides = [1, 1]} : vector<16x384xf32> to vector<16x128xf32>
    %333 = vector.extract_strided_slice %323 {offsets = [0, 384], sizes = [16, 128], strides = [1, 1]} : vector<16x512xf32> to vector<16x128xf32>
    %334 = math.tanh %333 : vector<16x128xf32>
    %335 = arith.mulf %331, %291 : vector<16x128xf32>
    %336 = arith.mulf %330, %334 : vector<16x128xf32>
    %337 = arith.addf %335, %336 : vector<16x128xf32>
    %338 = math.tanh %337 : vector<16x128xf32>
    %339 = arith.mulf %332, %338 : vector<16x128xf32>
    %c1_i32_68 = arith.constant 1 : i32
    %340 = arith.addi %c6_i32, %c1_i32_68 : i32
    %341 = vector.broadcast %340 : i32 to vector<16x128xi32>
    %342 = arith.cmpi eq, %17, %341 : vector<16x128xi32>
    %343 = arith.select %342, %339, %297 : vector<16x128xi1>, vector<16x128xf32>
    %c7_i32 = arith.constant 7 : i32
    %c16_i32_69 = arith.constant 16 : i32
    %344 = arith.muli %c7_i32, %c16_i32_69 : i32
    %345 = tpu.assume_multiple %344, 8 : i32
    %346 = arith.index_cast %345 : i32 to index
    %c0_70 = arith.constant 0 : index
    %347 = vector.load %arg12[%346, %c0_70] : memref<128x512xf32, #tpu.memory_space<vmem>>, vector<16x512xf32>
    %cst_71 = arith.constant dense<0.000000e+00> : vector<16x512xf32>
    %348 = tpu.matmul %319, %18, %cst_71 {dimension_numbers = #tpu.dot_dimension_numbers<[1], [0], [0], [1], [0, 0, 1, 1], [], []>} : vector<16x128xf32>, vector<128x512xf32>, vector<16x512xf32> -> vector<16x512xf32>
    %349 = arith.addf %347, %348 : vector<16x512xf32>
    %350 = vector.extract_strided_slice %349 {offsets = [0, 0], sizes = [16, 384], strides = [1, 1]} : vector<16x512xf32> to vector<16x384xf32>
    %351 = arith.negf %350 : vector<16x384xf32>
    %352 = math.exp %351 : vector<16x384xf32>
    %cst_72 = arith.constant 1.000000e+00 : f32
    %353 = vector.broadcast %cst_72 : f32 to vector<16x384xf32>
    %354 = arith.addf %353, %352 : vector<16x384xf32>
    %355 = arith.divf %353, %354 : vector<16x384xf32>
    %356 = vector.extract_strided_slice %355 {offsets = [0, 0], sizes = [16, 128], strides = [1, 1]} : vector<16x384xf32> to vector<16x128xf32>
    %357 = vector.extract_strided_slice %355 {offsets = [0, 128], sizes = [16, 128], strides = [1, 1]} : vector<16x384xf32> to vector<16x128xf32>
    %358 = vector.extract_strided_slice %355 {offsets = [0, 256], sizes = [16, 128], strides = [1, 1]} : vector<16x384xf32> to vector<16x128xf32>
    %359 = vector.extract_strided_slice %349 {offsets = [0, 384], sizes = [16, 128], strides = [1, 1]} : vector<16x512xf32> to vector<16x128xf32>
    %360 = math.tanh %359 : vector<16x128xf32>
    %361 = arith.mulf %357, %317 : vector<16x128xf32>
    %362 = arith.mulf %356, %360 : vector<16x128xf32>
    %363 = arith.addf %361, %362 : vector<16x128xf32>
    %364 = math.tanh %363 : vector<16x128xf32>
    %365 = arith.mulf %358, %364 : vector<16x128xf32>
    %366 = tpu.concatenate %365, %339 in 1 : vector<16x128xf32>, vector<16x128xf32> -> vector<16x256xf32>
    %cst_73 = arith.constant dense<0.000000e+00> : vector<16x512xf32>
    %367 = tpu.matmul %366, %19, %cst_73 {dimension_numbers = #tpu.dot_dimension_numbers<[1], [0], [0], [1], [0, 0, 1, 1], [], []>} : vector<16x256xf32>, vector<256x512xf32>, vector<16x512xf32> -> vector<16x512xf32>
    %368 = vector.broadcast %20 : vector<1x512xf32> to vector<16x512xf32>
    %369 = arith.addf %367, %368 : vector<16x512xf32>
    %370 = vector.extract_strided_slice %369 {offsets = [0, 0], sizes = [16, 384], strides = [1, 1]} : vector<16x512xf32> to vector<16x384xf32>
    %371 = arith.negf %370 : vector<16x384xf32>
    %372 = math.exp %371 : vector<16x384xf32>
    %cst_74 = arith.constant 1.000000e+00 : f32
    %373 = vector.broadcast %cst_74 : f32 to vector<16x384xf32>
    %374 = arith.addf %373, %372 : vector<16x384xf32>
    %375 = arith.divf %373, %374 : vector<16x384xf32>
    %376 = vector.extract_strided_slice %375 {offsets = [0, 0], sizes = [16, 128], strides = [1, 1]} : vector<16x384xf32> to vector<16x128xf32>
    %377 = vector.extract_strided_slice %375 {offsets = [0, 128], sizes = [16, 128], strides = [1, 1]} : vector<16x384xf32> to vector<16x128xf32>
    %378 = vector.extract_strided_slice %375 {offsets = [0, 256], sizes = [16, 128], strides = [1, 1]} : vector<16x384xf32> to vector<16x128xf32>
    %379 = vector.extract_strided_slice %369 {offsets = [0, 384], sizes = [16, 128], strides = [1, 1]} : vector<16x512xf32> to vector<16x128xf32>
    %380 = math.tanh %379 : vector<16x128xf32>
    %381 = arith.mulf %377, %337 : vector<16x128xf32>
    %382 = arith.mulf %376, %380 : vector<16x128xf32>
    %383 = arith.addf %381, %382 : vector<16x128xf32>
    %384 = math.tanh %383 : vector<16x128xf32>
    %385 = arith.mulf %378, %384 : vector<16x128xf32>
    %c1_i32_75 = arith.constant 1 : i32
    %386 = arith.addi %c7_i32, %c1_i32_75 : i32
    %387 = vector.broadcast %386 : i32 to vector<16x128xi32>
    %388 = arith.cmpi eq, %17, %387 : vector<16x128xi32>
    %389 = arith.select %388, %385, %343 : vector<16x128xi1>, vector<16x128xf32>
    %c8_i32 = arith.constant 8 : i32
    %c0_76 = arith.constant 0 : index
    %c0_77 = arith.constant 0 : index
    %390 = vector.load %arg9[%c0_76, %c0_77] : memref<128x128xf32, #tpu.memory_space<vmem>>, vector<128x128xf32>
    %cst_78 = arith.constant dense<0.000000e+00> : vector<16x128xf32>
    %391 = tpu.matmul %389, %390, %cst_78 {dimension_numbers = #tpu.dot_dimension_numbers<[1], [0], [0], [1], [0, 0, 1, 1], [], []>} : vector<16x128xf32>, vector<128x128xf32>, vector<16x128xf32> -> vector<16x128xf32>
    %c0_79 = arith.constant 0 : index
    %c0_80 = arith.constant 0 : index
    %392 = vector.load %arg10[%c0_79, %c0_80] : memref<1x128xf32, #tpu.memory_space<vmem>>, vector<1x128xf32>
    %393 = vector.broadcast %392 : vector<1x128xf32> to vector<16x128xf32>
    %394 = arith.addf %391, %393 : vector<16x128xf32>
    %c0_81 = arith.constant 0 : index
    %c0_82 = arith.constant 0 : index
    %395 = vector.load %arg11[%c0_81, %c0_82] : memref<16x128xf32, #tpu.memory_space<vmem>>, vector<16x128xf32>
    tpu.vector_store %arg11[%c0_81, %c0_82], %394 {strides = array<i32>} : memref<16x128xf32, #tpu.memory_space<vmem>>, vector<16x128xf32>,
    return
  }
}

</mosaic_0001>

<llo_original>
// kernel: seqback_lstm_forward.1
$region0: #{seqback_lstm_forward.1}
  #allocation0 [shape = 'u32[]', space=smem, size = 0x4, offset = 0x4, fixed_abs, tag = 'smem constant byte address 0x4 - core index']
  #allocation1 [shape = 'u32[144,128]{1,0:T(1,128)}', space=vmem, size = 0x12000, scoped, tag = 'internal scratch']
  #allocation2 [shape = 'f32[128,512]{1,0:T(8,128)}', space=vmem, size = 0x40000, scoped, tag = 'scratch operand']
  %s0 = inlined_call_operand.vmem [shape: s32[128,1], index: 0, kind: input, shape index: {}]
  %s1 = inlined_call_operand.vmem [shape: s32[16,1], index: 1, kind: input, shape index: {}]
  %s2 = inlined_call_operand.vmem [shape: f32[16,128], index: 2, kind: input, shape index: {}]
  %s3 = inlined_call_operand.vmem [shape: f32[64,32], index: 3, kind: input, shape index: {}]
  %s4 = inlined_call_operand.vmem [shape: f32[32,512], index: 4, kind: input, shape index: {}]
  %s5 = inlined_call_operand.hbm [shape: f32[128,512], index: 5, kind: input, shape index: {}]
  %s6 = inlined_call_operand.vmem [shape: f32[1,512], index: 6, kind: input, shape index: {}]
  %s7 = inlined_call_operand.hbm [shape: f32[256,512], index: 7, kind: input, shape index: {}]
  %s8 = inlined_call_operand.vmem [shape: f32[1,512], index: 8, kind: input, shape index: {}]
  %s9 = inlined_call_operand.vmem [shape: f32[128,128], index: 9, kind: input, shape index: {}]
  %s10 = inlined_call_operand.vmem [shape: f32[1,128], index: 10, kind: input, shape index: {}]
  %s11 = inlined_call_operand.vmem [shape: f32[16,128], index: 11, kind: output, shape index: {}]
  %s12 = sld [smem:[#allocation0]]
  $region62: #{seqback_lstm_forward.1} parent=0
    _
  %s14 = ssub.s32 1, %s12
  %s15 = scalar_select 0, %s14, %s12
  $region1: #{seqback_lstm_forward.1} parent=0
    #allocation3 [shape = 'u8[262144]{0}', space=vmem, size = 0x40000, scoped, tag = 'input window, operand 5, single buffered']
    #allocation4 [shape = 's32[1]{0}', space=sflag, size = 0x4, scoped, tag = 'scoped memory for seqback_lstm_forward.1']
    #allocation5 [shape = 'u8[524288]{0}', space=vmem, size = 0x80000, scoped, tag = 'input window, operand 7, single buffered']
    #allocation6 [shape = 's32[1]{0}', space=sflag, size = 0x4, scoped, tag = 'scoped memory for seqback_lstm_forward.1']
    %16 = vsyncpa [#allocation4], 0
    %17 = vsyncpa [#allocation6], 0
    // Predicated region
    $region2: #{seqback_lstm_forward.1} parent=1 // pred_check
      _
    $region3: #{seqback_lstm_forward.1} parent=1 // pred_check_branch
      %19 = sbr.rel (0) target = $region5
    $region4: #{seqback_lstm_forward.1} parent=1 // pred_region
      _
    $region5: #{seqback_lstm_forward.1} parent=1 // pred_fallthru
      _
    // Predicated region
    $region6: #{seqback_lstm_forward.1} parent=1 // pred_check
      _
    $region7: #{seqback_lstm_forward.1} parent=1 // pred_check_branch
      %21 = sbr.rel (0) target = $region9
    $region8: #{seqback_lstm_forward.1} parent=1 // pred_region
      _
    $region9: #{seqback_lstm_forward.1} parent=1 // pred_fallthru
      _
    // Predicated region
    $region10: #{seqback_lstm_forward.1} parent=1 // pred_check
      _
    $region11: #{seqback_lstm_forward.1} parent=1 // pred_check_branch
      %23 = sbr.rel (0) target = $region13
    $region12: #{seqback_lstm_forward.1} parent=1 // pred_region
      _
    $region13: #{seqback_lstm_forward.1} parent=1 // pred_fallthru
      _
    // Predicated region
    $region14: #{seqback_lstm_forward.1} parent=1 // pred_check
      _
    $region15: #{seqback_lstm_forward.1} parent=1 // pred_check_branch
      %25 = sbr.rel (0) target = $region17
    $region16: #{seqback_lstm_forward.1} parent=1 // pred_region
      _
    $region17: #{seqback_lstm_forward.1} parent=1 // pred_fallthru
      _
    // Predicated region
    $region18: #{seqback_lstm_forward.1} parent=1 // pred_check
      _
    $region19: #{seqback_lstm_forward.1} parent=1 // pred_check_branch
      %27 = sbr.rel (0) target = $region21
    $region20: #{seqback_lstm_forward.1} parent=1 // pred_region
      _
    $region21: #{seqback_lstm_forward.1} parent=1 // pred_fallthru
      _
    // Predicated region
    $region22: #{seqback_lstm_forward.1} parent=1 // pred_check
      _
    $region23: #{seqback_lstm_forward.1} parent=1 // pred_check_branch
      %29 = sbr.rel (0) target = $region25
    $region24: #{seqback_lstm_forward.1} parent=1 // pred_region
      %s31 = ssub.s32 8192, 8192
      %32 = vsyncadd [#allocation4], %s31
      %s33 = sshll.u32 [#allocation3], 4
      %s34 = int_to_ptr.vmem [resolvable:$true] %s33
      %39 = dma.hbm_to_vmem [thread:$0]  %s5, 8192, %s34, [#allocation4], 512, 512, 32
    $region25: #{seqback_lstm_forward.1} parent=1 // pred_fallthru
      _
    // Predicated region
    $region26: #{seqback_lstm_forward.1} parent=1 // pred_check
      _
    $region27: #{seqback_lstm_forward.1} parent=1 // pred_check_branch
      %41 = sbr.rel (0) target = $region29
    $region28: #{seqback_lstm_forward.1} parent=1 // pred_region
      _
    $region29: #{seqback_lstm_forward.1} parent=1 // pred_fallthru
      _
    // Predicated region
    $region30: #{seqback_lstm_forward.1} parent=1 // pred_check
      _
    $region31: #{seqback_lstm_forward.1} parent=1 // pred_check_branch
      %43 = sbr.rel (0) target = $region33
    $region32: #{seqback_lstm_forward.1} parent=1 // pred_region
      %s45 = ssub.s32 16384, 16384
      %46 = vsyncadd [#allocation6], %s45
      %s47 = sshll.u32 [#allocation5], 4
      %s48 = int_to_ptr.vmem [resolvable:$true] %s47
      %53 = dma.hbm_to_vmem [thread:$0]  %s7, 16384, %s48, [#allocation6], 512, 512, 32
    $region33: #{seqback_lstm_forward.1} parent=1 // pred_fallthru
      _
    // Predicated region
    $region34: #{seqback_lstm_forward.1} parent=1 // pred_check
      _
    $region35: #{seqback_lstm_forward.1} parent=1 // pred_check_branch
      %55 = sbr.rel (0) target = $region37
    $region36: #{seqback_lstm_forward.1} parent=1 // pred_region
      _
    $region37: #{seqback_lstm_forward.1} parent=1 // pred_fallthru
      _
    // Predicated region
    $region38: #{seqback_lstm_forward.1} parent=1 // pred_check
      _
    $region39: #{seqback_lstm_forward.1} parent=1 // pred_check_branch
      %57 = sbr.rel (0) target = $region41
    $region40: #{seqback_lstm_forward.1} parent=1 // pred_region
      _
    $region41: #{seqback_lstm_forward.1} parent=1 // pred_fallthru
      _
    // Predicated region
    $region42: #{seqback_lstm_forward.1} parent=1 // pred_check
      _
    $region43: #{seqback_lstm_forward.1} parent=1 // pred_check_branch
      %59 = sbr.rel (0) target = $region45
    $region44: #{seqback_lstm_forward.1} parent=1 // pred_region
      _
    $region45: #{seqback_lstm_forward.1} parent=1 // pred_fallthru
      _
    // Predicated region
    $region46: #{seqback_lstm_forward.1} parent=1 // pred_check
      _
    $region47: #{seqback_lstm_forward.1} parent=1 // pred_check_branch
      %61 = sbr.rel (0) target = $region49
    $region48: #{seqback_lstm_forward.1} parent=1 // pred_region
      %62 = dma.done [#allocation4], 8192
    $region49: #{seqback_lstm_forward.1} parent=1 // pred_fallthru
      _
    // Predicated region
    $region50: #{seqback_lstm_forward.1} parent=1 // pred_check
      _
    $region51: #{seqback_lstm_forward.1} parent=1 // pred_check_branch
      %64 = sbr.rel (0) target = $region53
    $region52: #{seqback_lstm_forward.1} parent=1 // pred_region
      %65 = dma.done [#allocation6], 16384
    $region53: #{seqback_lstm_forward.1} parent=1 // pred_fallthru
      _
    %v66 = vlaneseq
    %v67 = vand.u32 %v66, 127
    %v68 = vld [vmem:[%s0] sm:$0xff]
    %v69 = vld [vmem:[%s0 + $0x8] sm:$0xff]
    %v70 = vld [vmem:[%s0 + $0x10] sm:$0xff]
    %v71 = vld [vmem:[%s0 + $0x18] sm:$0xff]
    %v72 = vld [vmem:[%s0 + $0x20] sm:$0xff]
    %v73 = vld [vmem:[%s0 + $0x28] sm:$0xff]
    %v74 = vld [vmem:[%s0 + $0x30] sm:$0xff]
    %v75 = vld [vmem:[%s0 + $0x38] sm:$0xff]
    %v76 = vld [vmem:[%s0 + $0x40] sm:$0xff]
    %v77 = vld [vmem:[%s0 + $0x48] sm:$0xff]
    %v78 = vld [vmem:[%s0 + $0x50] sm:$0xff]
    %v79 = vld [vmem:[%s0 + $0x58] sm:$0xff]
    %v80 = vld [vmem:[%s0 + $0x60] sm:$0xff]
    %v81 = vld [vmem:[%s0 + $0x68] sm:$0xff]
    %v82 = vld [vmem:[%s0 + $0x70] sm:$0xff]
    %v83 = vld [vmem:[%s0 + $0x78] sm:$0xff]
    %84 = vset.pattern.permute.xlu0 0
    %85 = vperm.xlu0 %84, %v68
    %v86 = vpop.permute.xlu0 %85
    %87 = vset.pattern.permute.xlu0 0
    %88 = vperm.xlu0 %87, %v69
    %v89 = vpop.permute.xlu0 %88
    %90 = vset.pattern.permute.xlu0 0
    %91 = vperm.xlu0 %90, %v70
    %v92 = vpop.permute.xlu0 %91
    %93 = vset.pattern.permute.xlu0 0
    %94 = vperm.xlu0 %93, %v71
    %v95 = vpop.permute.xlu0 %94
    %96 = vset.pattern.permute.xlu0 0
    %97 = vperm.xlu0 %96, %v72
    %v98 = vpop.permute.xlu0 %97
    %99 = vset.pattern.permute.xlu0 0
    %100 = vperm.xlu0 %99, %v73
    %v101 = vpop.permute.xlu0 %100
    %102 = vset.pattern.permute.xlu0 0
    %103 = vperm.xlu0 %102, %v74
    %v104 = vpop.permute.xlu0 %103
    %105 = vset.pattern.permute.xlu0 0
    %106 = vperm.xlu0 %105, %v75
    %v107 = vpop.permute.xlu0 %106
    %108 = vset.pattern.permute.xlu0 0
    %109 = vperm.xlu0 %108, %v76
    %v110 = vpop.permute.xlu0 %109
    %111 = vset.pattern.permute.xlu0 0
    %112 = vperm.xlu0 %111, %v77
    %v113 = vpop.permute.xlu0 %112
    %114 = vset.pattern.permute.xlu0 0
    %115 = vperm.xlu0 %114, %v78
    %v116 = vpop.permute.xlu0 %115
    %117 = vset.pattern.permute.xlu0 0
    %118 = vperm.xlu0 %117, %v79
    %v119 = vpop.permute.xlu0 %118
    %120 = vset.pattern.permute.xlu0 0
    %121 = vperm.xlu0 %120, %v80
    %v122 = vpop.permute.xlu0 %121
    %123 = vset.pattern.permute.xlu0 0
    %124 = vperm.xlu0 %123, %v81
    %v125 = vpop.permute.xlu0 %124
    %126 = vset.pattern.permute.xlu0 0
    %127 = vperm.xlu0 %126, %v82
    %v128 = vpop.permute.xlu0 %127
    %129 = vset.pattern.permute.xlu0 0
    %130 = vperm.xlu0 %129, %v83
    %v131 = vpop.permute.xlu0 %130
    %vm132 = vcmp.eq.s32.totalorder %v86, %v67
    %vm133 = vcmp.eq.s32.totalorder %v89, %v67
    %vm134 = vcmp.eq.s32.totalorder %v92, %v67
    %vm135 = vcmp.eq.s32.totalorder %v95, %v67
    %vm136 = vcmp.eq.s32.totalorder %v98, %v67
    %vm137 = vcmp.eq.s32.totalorder %v101, %v67
    %vm138 = vcmp.eq.s32.totalorder %v104, %v67
    %vm139 = vcmp.eq.s32.totalorder %v107, %v67
    %vm140 = vcmp.eq.s32.totalorder %v110, %v67
    %vm141 = vcmp.eq.s32.totalorder %v113, %v67
    %vm142 = vcmp.eq.s32.totalorder %v116, %v67
    %vm143 = vcmp.eq.s32.totalorder %v119, %v67
    %vm144 = vcmp.eq.s32.totalorder %v122, %v67
    %vm145 = vcmp.eq.s32.totalorder %v125, %v67
    %vm146 = vcmp.eq.s32.totalorder %v128, %v67
    %vm147 = vcmp.eq.s32.totalorder %v131, %v67
    %v148 = vsel %vm132, 1, 0
    %v149 = vsel %vm133, 1, 0
    %v150 = vsel %vm134, 1, 0
    %v151 = vsel %vm135, 1, 0
    %v152 = vsel %vm136, 1, 0
    %v153 = vsel %vm137, 1, 0
    %v154 = vsel %vm138, 1, 0
    %v155 = vsel %vm139, 1, 0
    %v156 = vsel %vm140, 1, 0
    %v157 = vsel %vm141, 1, 0
    %v158 = vsel %vm142, 1, 0
    %v159 = vsel %vm143, 1, 0
    %v160 = vsel %vm144, 1, 0
    %v161 = vsel %vm145, 1, 0
    %v162 = vsel %vm146, 1, 0
    %v163 = vsel %vm147, 1, 0
    %v164 = vcvt.s32.f32 %v148
    %v165 = vcvt.s32.f32 %v149
    %v166 = vcvt.s32.f32 %v150
    %v167 = vcvt.s32.f32 %v151
    %v168 = vcvt.s32.f32 %v152
    %v169 = vcvt.s32.f32 %v153
    %v170 = vcvt.s32.f32 %v154
    %v171 = vcvt.s32.f32 %v155
    %v172 = vcvt.s32.f32 %v156
    %v173 = vcvt.s32.f32 %v157
    %v174 = vcvt.s32.f32 %v158
    %v175 = vcvt.s32.f32 %v159
    %v176 = vcvt.s32.f32 %v160
    %v177 = vcvt.s32.f32 %v161
    %v178 = vcvt.s32.f32 %v162
    %v179 = vcvt.s32.f32 %v163
    %v180 = vld [vmem:[%s3] sm:$0xff]
    %v181 = vld [vmem:[%s3 + $0x8] sm:$0xff]
    %v182 = vld [vmem:[%s3 + $0x10] sm:$0xff]
    %v183 = vld [vmem:[%s3 + $0x18] sm:$0xff]
    %v184 = vld [vmem:[%s3 + $0x20] sm:$0xff]
    %v185 = vld [vmem:[%s3 + $0x28] sm:$0xff]
    %v186 = vld [vmem:[%s3 + $0x30] sm:$0xff]
    %v187 = vld [vmem:[%s3 + $0x38] sm:$0xff]
    %vm188 = vcmask 523264
    %v190 = vsel %vm188, %v164, 0
    %v193 = vsel %vm188, %v165, 0
    %v196 = vsel %vm188, %v166, 0
    %v199 = vsel %vm188, %v167, 0
    %v202 = vsel %vm188, %v168, 0
    %v205 = vsel %vm188, %v169, 0
    %v208 = vsel %vm188, %v170, 0
    %v211 = vsel %vm188, %v171, 0
    %v214 = vsel %vm188, %v172, 0
    %v217 = vsel %vm188, %v173, 0
    %v220 = vsel %vm188, %v174, 0
    %v223 = vsel %vm188, %v175, 0
    %v226 = vsel %vm188, %v176, 0
    %v229 = vsel %vm188, %v177, 0
    %v232 = vsel %vm188, %v178, 0
    %v235 = vsel %vm188, %v179, 0
    %237 = vmatprep.subr.mxu0 0.0
    %238 = vmatpush1.msra.mxu0 %v180
    %239 = vmatprep.subr.mxu0 0.0
    %240 = vmatpush1.msra.mxu0 %v181
    %241 = vmatprep.subr.mxu0 0.0
    %242 = vmatpush1.msra.mxu0 %v182
    %243 = vmatprep.subr.mxu0 0.0
    %244 = vmatpush1.msra.mxu0 %v183
    %245 = vmatprep.subr.mxu0 0.0
    %246 = vmatpush1.msra.mxu0 %v184
    %247 = vmatprep.subr.mxu0 0.0
    %248 = vmatpush1.msra.mxu0 %v185
    %249 = vmatprep.subr.mxu0 0.0
    %250 = vmatpush1.msra.mxu0 %v186
    %251 = vmatprep.subr.mxu0 0.0
    %252 = vmatpush1.msra.mxu0 %v187
    %253 = vmatprep.subr.mxu0 0.0
    %254 = vmatpush1.msra.mxu0 0.0
    %255 = vmatprep.subr.mxu0 0.0
    %256 = vmatpush1.msra.mxu0 0.0
    %257 = vmatprep.subr.mxu0 0.0
    %258 = vmatpush1.msra.mxu0 0.0
    %259 = vmatprep.subr.mxu0 0.0
    %260 = vmatpush1.msra.mxu0 0.0
    %261 = vmatprep.subr.mxu0 0.0
    %262 = vmatpush1.msra.mxu0 0.0
    %263 = vmatprep.subr.mxu0 0.0
    %264 = vmatpush1.msra.mxu0 0.0
    %265 = vmatprep.subr.mxu0 0.0
    %266 = vmatpush1.msra.mxu0 0.0
    %267 = vmatprep.subr.mxu0 0.0
    %268 = vmatpush1.msra.mxu0 0.0
    %269 = vmatprep.subr.mxu0 0.0
    %270 = vmatpush1.msra.mxu0 0.0
    %271 = vmatprep.subr.mxu0 0.0
    %272 = vmatpush1.msra.mxu0 0.0
    %273 = vmatprep.subr.mxu0 0.0
    %274 = vmatpush1.msra.mxu0 0.0
    %275 = vmatprep.subr.mxu0 0.0
    %276 = vmatpush1.msra.mxu0 0.0
    %277 = vmatprep.subr.mxu0 0.0
    %278 = vmatpush1.msra.mxu0 0.0
    %279 = vmatprep.subr.mxu0 0.0
    %280 = vmatpush1.msra.mxu0 0.0
    %281 = vmatprep.subr.mxu0 0.0
    %282 = vmatpush1.msra.mxu0 0.0
    %283 = vmatprep.subr.mxu0 0.0
    %284 = vmatpush1.msra.mxu0 0.0
    %285 = vmatprep.subr.mxu0 0.0
    %286 = vmatpush1.msra.mxu0 0.0
    %287 = vmatprep.subr.mxu0 0.0
    %288 = vmatpush1.msra.mxu0 0.0
    %289 = vmatprep.subr.mxu0 0.0
    %290 = vmatpush1.msra.mxu0 0.0
    %291 = vmatprep.subr.mxu0 0.0
    %292 = vmatpush1.msra.mxu0 0.0
    %293 = vmatprep.subr.mxu0 0.0
    %294 = vmatpush1.msra.mxu0 0.0
    %295 = vmatprep.subr.mxu0 0.0
    %296 = vmatpush1.msra.mxu0 0.0
    %297 = vmatprep.subr.mxu0 0.0
    %298 = vmatpush1.msra.mxu0 0.0
    %299 = vmatprep.subr.mxu0 0.0
    %300 = vmatpush1.msra.mxu0 0.0
    %301 = vmatprep.mubr.f32.mxu0 0.0
    %302 = vmatmul.mubr.f32.gmra.mrb[0].mxu0 %v190
    %v303 = vpop.f32.mrb[0].mxu0
    %v304 = vadd.f32 0.0, %v303
    %v305 = vpop.f32.mrb[0].mxu0
    %306 = vmatprep.mubr.f32.mxu0 0.0
    %307 = vmatmul.mubr.f32.gmra.mrb[0].mxu0 %v193
    %v308 = vpop.f32.mrb[0].mxu0
    %v309 = vadd.f32 0.0, %v308
    %v310 = vpop.f32.mrb[0].mxu0
    %311 = vmatprep.mubr.f32.mxu0 0.0
    %312 = vmatmul.mubr.f32.gmra.mrb[0].mxu0 %v196
    %v313 = vpop.f32.mrb[0].mxu0
    %v314 = vadd.f32 0.0, %v313
    %v315 = vpop.f32.mrb[0].mxu0
    %316 = vmatprep.mubr.f32.mxu0 0.0
    %317 = vmatmul.mubr.f32.gmra.mrb[0].mxu0 %v199
    %v318 = vpop.f32.mrb[0].mxu0
    %v319 = vadd.f32 0.0, %v318
    %v320 = vpop.f32.mrb[0].mxu0
    %321 = vmatprep.mubr.f32.mxu0 0.0
    %322 = vmatmul.mubr.f32.gmra.mrb[0].mxu0 %v202
    %v323 = vpop.f32.mrb[0].mxu0
    %v324 = vadd.f32 0.0, %v323
    %v325 = vpop.f32.mrb[0].mxu0
    %326 = vmatprep.mubr.f32.mxu0 0.0
    %327 = vmatmul.mubr.f32.gmra.mrb[0].mxu0 %v205
    %v328 = vpop.f32.mrb[0].mxu0
    %v329 = vadd.f32 0.0, %v328
    %v330 = vpop.f32.mrb[0].mxu0
    %331 = vmatprep.mubr.f32.mxu0 0.0
    %332 = vmatmul.mubr.f32.gmra.mrb[0].mxu0 %v208
    %v333 = vpop.f32.mrb[0].mxu0
    %v334 = vadd.f32 0.0, %v333
    %v335 = vpop.f32.mrb[0].mxu0
    %336 = vmatprep.mubr.f32.mxu0 0.0
    %337 = vmatmul.mubr.f32.gmra.mrb[0].mxu0 %v211
    %v338 = vpop.f32.mrb[0].mxu0
    %v339 = vadd.f32 0.0, %v338
    %v340 = vpop.f32.mrb[0].mxu0
    %341 = vmatprep.mubr.f32.mxu0 0.0
    %342 = vmatmul.mubr.f32.gmra.mrb[0].mxu0 %v214
    %v343 = vpop.f32.mrb[0].mxu0
    %v344 = vadd.f32 0.0, %v343
    %v345 = vpop.f32.mrb[0].mxu0
    %346 = vmatprep.mubr.f32.mxu0 0.0
    %347 = vmatmul.mubr.f32.gmra.mrb[0].mxu0 %v217
    %v348 = vpop.f32.mrb[0].mxu0
    %v349 = vadd.f32 0.0, %v348
    %v350 = vpop.f32.mrb[0].mxu0
    %351 = vmatprep.mubr.f32.mxu0 0.0
    %352 = vmatmul.mubr.f32.gmra.mrb[0].mxu0 %v220
    %v353 = vpop.f32.mrb[0].mxu0
    %v354 = vadd.f32 0.0, %v353
    %v355 = vpop.f32.mrb[0].mxu0
    %356 = vmatprep.mubr.f32.mxu0 0.0
    %357 = vmatmul.mubr.f32.gmra.mrb[0].mxu0 %v223
    %v358 = vpop.f32.mrb[0].mxu0
    %v359 = vadd.f32 0.0, %v358
    %v360 = vpop.f32.mrb[0].mxu0
    %361 = vmatprep.mubr.f32.mxu0 0.0
    %362 = vmatmul.mubr.f32.gmra.mrb[0].mxu0 %v226
    %v363 = vpop.f32.mrb[0].mxu0
    %v364 = vadd.f32 0.0, %v363
    %v365 = vpop.f32.mrb[0].mxu0
    %366 = vmatprep.mubr.f32.mxu0 0.0
    %367 = vmatmul.mubr.f32.gmra.mrb[0].mxu0 %v229
    %v368 = vpop.f32.mrb[0].mxu0
    %v369 = vadd.f32 0.0, %v368
    %v370 = vpop.f32.mrb[0].mxu0
    %371 = vmatprep.mubr.f32.mxu0 0.0
    %372 = vmatmul.mubr.f32.gmra.mrb[0].mxu0 %v232
    %v373 = vpop.f32.mrb[0].mxu0
    %v374 = vadd.f32 0.0, %v373
    %v375 = vpop.f32.mrb[0].mxu0
    %376 = vmatprep.mubr.f32.mxu0 0.0
    %377 = vmatmul.mubr.f32.gmra.mrb[0].mxu0 %v235
    %v378 = vpop.f32.mrb[0].mxu0
    %v379 = vadd.f32 0.0, %v378
    %v380 = vpop.f32.mrb[0].mxu0
    %381 = vdwg.mxu0
    %v382 = vld [vmem:[%s4] sm:$0xff]
    %v383 = vld [vmem:[%s4 + $0x8] sm:$0xff]
    %v384 = vld [vmem:[%s4 + $0x10] sm:$0xff]
    %v385 = vld [vmem:[%s4 + $0x18] sm:$0xff]
    %v386 = vld [vmem:[%s4 + $0x20] sm:$0xff]
    %v387 = vld [vmem:[%s4 + $0x28] sm:$0xff]
    %v388 = vld [vmem:[%s4 + $0x30] sm:$0xff]
    %v389 = vld [vmem:[%s4 + $0x38] sm:$0xff]
    %v390 = vld [vmem:[%s4 + $0x40] sm:$0xff]
    %v391 = vld [vmem:[%s4 + $0x48] sm:$0xff]
    %v392 = vld [vmem:[%s4 + $0x50] sm:$0xff]
    %v393 = vld [vmem:[%s4 + $0x58] sm:$0xff]
    %v394 = vld [vmem:[%s4 + $0x60] sm:$0xff]
    %v395 = vld [vmem:[%s4 + $0x68] sm:$0xff]
    %v396 = vld [vmem:[%s4 + $0x70] sm:$0xff]
    %v397 = vld [vmem:[%s4 + $0x78] sm:$0xff]
    %v398 = vld [vmem:[%s6] sm:$0xf]
    %v400 = vlaneseq
    %v401 = vshrl.u32 %v400, 7
    %v402 = vsub.s32 0, %v401
    %v403 = vrot.slane %v398, %v402
    %v404 = vlaneseq
    %v405 = vshrl.u32 %v404, 7
    %v406 = vsub.s32 1, %v405
    %v407 = vrot.slane %v398, %v406
    %v408 = vlaneseq
    %v409 = vshrl.u32 %v408, 7
    %v410 = vsub.s32 2, %v409
    %v411 = vrot.slane %v398, %v410
    %v412 = vlaneseq
    %v413 = vshrl.u32 %v412, 7
    %v414 = vsub.s32 3, %v413
    %v415 = vrot.slane %v398, %v414
    %vm420 = vcmask 261120
    %v422 = vsel %vm420, %v304, 0
    %v425 = vsel %vm420, %v309, 0
    %v428 = vsel %vm420, %v314, 0
    %v431 = vsel %vm420, %v319, 0
    %v434 = vsel %vm420, %v324, 0
    %v437 = vsel %vm420, %v329, 0
    %v440 = vsel %vm420, %v334, 0
    %v443 = vsel %vm420, %v339, 0
    %v446 = vsel %vm420, %v344, 0
    %v449 = vsel %vm420, %v349, 0
    %v452 = vsel %vm420, %v354, 0
    %v455 = vsel %vm420, %v359, 0
    %v458 = vsel %vm420, %v364, 0
    %v461 = vsel %vm420, %v369, 0
    %v464 = vsel %vm420, %v374, 0
    %v467 = vsel %vm420, %v379, 0
    %469 = vmatprep.subr.mxu0 %v383
    %470 = vmatpush1.msra.mxu0 %v382
    %471 = vmatprep.subr.mxu0 %v387
    %472 = vmatpush1.msra.mxu0 %v386
    %473 = vmatprep.subr.mxu0 %v391
    %474 = vmatpush1.msra.mxu0 %v390
    %475 = vmatprep.subr.mxu0 %v395
    %476 = vmatpush1.msra.mxu0 %v394
    %477 = vmatprep.subr.mxu0 0.0
    %478 = vmatpush1.msra.mxu0 0.0
    %479 = vmatprep.subr.mxu0 0.0
    %480 = vmatpush1.msra.mxu0 0.0
    %481 = vmatprep.subr.mxu0 0.0
    %482 = vmatpush1.msra.mxu0 0.0
    %483 = vmatprep.subr.mxu0 0.0
    %484 = vmatpush1.msra.mxu0 0.0
    %485 = vmatprep.subr.mxu0 0.0
    %486 = vmatpush1.msra.mxu0 0.0
    %487 = vmatprep.subr.mxu0 0.0
    %488 = vmatpush1.msra.mxu0 0.0
    %489 = vmatprep.subr.mxu0 0.0
    %490 = vmatpush1.msra.mxu0 0.0
    %491 = vmatprep.subr.mxu0 0.0
    %492 = vmatpush1.msra.mxu0 0.0
    %493 = vmatprep.subr.mxu0 0.0
    %494 = vmatpush1.msra.mxu0 0.0
    %495 = vmatprep.subr.mxu0 0.0
    %496 = vmatpush1.msra.mxu0 0.0
    %497 = vmatprep.subr.mxu0 0.0
    %498 = vmatpush1.msra.mxu0 0.0
    %499 = vmatprep.subr.mxu0 0.0
    %500 = vmatpush1.msra.mxu0 0.0
    %501 = vmatprep.subr.mxu0 0.0
    %502 = vmatpush1.msra.mxu0 0.0
    %503 = vmatprep.subr.mxu0 0.0
    %504 = vmatpush1.msra.mxu0 0.0
    %505 = vmatprep.subr.mxu0 0.0
    %506 = vmatpush1.msra.mxu0 0.0
    %507 = vmatprep.subr.mxu0 0.0
    %508 = vmatpush1.msra.mxu0 0.0
    %509 = vmatprep.subr.mxu0 0.0
    %510 = vmatpush1.msra.mxu0 0.0
    %511 = vmatprep.subr.mxu0 0.0
    %512 = vmatpush1.msra.mxu0 0.0
    %513 = vmatprep.subr.mxu0 0.0
    %514 = vmatpush1.msra.mxu0 0.0
    %515 = vmatprep.subr.mxu0 0.0
    %516 = vmatpush1.msra.mxu0 0.0
    %517 = vmatprep.subr.mxu0 0.0
    %518 = vmatpush1.msra.mxu0 0.0
    %519 = vmatprep.subr.mxu0 0.0
    %520 = vmatpush1.msra.mxu0 0.0
    %521 = vmatprep.subr.mxu0 0.0
    %522 = vmatpush1.msra.mxu0 0.0
    %523 = vmatprep.subr.mxu0 0.0
    %524 = vmatpush1.msra.mxu0 0.0
    %525 = vmatprep.subr.mxu0 0.0
    %526 = vmatpush1.msra.mxu0 0.0
    %527 = vmatprep.subr.mxu0 0.0
    %528 = vmatpush1.msra.mxu0 0.0
    %529 = vmatprep.subr.mxu0 0.0
    %530 = vmatpush1.msra.mxu0 0.0
    %531 = vmatprep.subr.mxu0 0.0
    %532 = vmatpush1.msra.mxu0 0.0
    %533 = vmatprep.mubr.f32.mxu0 0.0
    %534 = vmatmul.mubr.f32.gmra.mrb[0].mxu0 %v422
    %v535 = vpop.f32.mrb[0].mxu0
    %v536 = vadd.f32 %v403, %v535
    %v537 = vpop.f32.mrb[0].mxu0
    %v538 = vadd.f32 %v407, %v537
    %539 = vmatprep.mubr.f32.mxu0 0.0
    %540 = vmatmul.mubr.f32.gmra.mrb[0].mxu0 %v425
    %v541 = vpop.f32.mrb[0].mxu0
    %v542 = vadd.f32 %v403, %v541
    %v543 = vpop.f32.mrb[0].mxu0
    %v544 = vadd.f32 %v407, %v543
    %545 = vmatprep.mubr.f32.mxu0 0.0
    %546 = vmatmul.mubr.f32.gmra.mrb[0].mxu0 %v428
    %v547 = vpop.f32.mrb[0].mxu0
    %v548 = vadd.f32 %v403, %v547
    %v549 = vpop.f32.mrb[0].mxu0
    %v550 = vadd.f32 %v407, %v549
    %551 = vmatprep.mubr.f32.mxu0 0.0
    %552 = vmatmul.mubr.f32.gmra.mrb[0].mxu0 %v431
    %v553 = vpop.f32.mrb[0].mxu0
    %v554 = vadd.f32 %v403, %v553
    %v555 = vpop.f32.mrb[0].mxu0
    %v556 = vadd.f32 %v407, %v555
    %557 = vmatprep.mubr.f32.mxu0 0.0
    %558 = vmatmul.mubr.f32.gmra.mrb[0].mxu0 %v434
    %v559 = vpop.f32.mrb[0].mxu0
    %v560 = vadd.f32 %v403, %v559
    %v561 = vpop.f32.mrb[0].mxu0
    %v562 = vadd.f32 %v407, %v561
    %563 = vmatprep.mubr.f32.mxu0 0.0
    %564 = vmatmul.mubr.f32.gmra.mrb[0].mxu0 %v437
    %v565 = vpop.f32.mrb[0].mxu0
    %v566 = vadd.f32 %v403, %v565
    %v567 = vpop.f32.mrb[0].mxu0
    %v568 = vadd.f32 %v407, %v567
    %569 = vmatprep.mubr.f32.mxu0 0.0
    %570 = vmatmul.mubr.f32.gmra.mrb[0].mxu0 %v440
    %v571 = vpop.f32.mrb[0].mxu0
    %v572 = vadd.f32 %v403, %v571
    %v573 = vpop.f32.mrb[0].mxu0
    %v574 = vadd.f32 %v407, %v573
    %575 = vmatprep.mubr.f32.mxu0 0.0
    %576 = vmatmul.mubr.f32.gmra.mrb[0].mxu0 %v443
    %v577 = vpop.f32.mrb[0].mxu0
    %v578 = vadd.f32 %v403, %v577
    %v579 = vpop.f32.mrb[0].mxu0
    %v580 = vadd.f32 %v407, %v579
    %581 = vmatprep.mubr.f32.mxu0 0.0
    %582 = vmatmul.mubr.f32.gmra.mrb[0].mxu0 %v446
    %v583 = vpop.f32.mrb[0].mxu0
    %v584 = vadd.f32 %v403, %v583
    %v585 = vpop.f32.mrb[0].mxu0
    %v586 = vadd.f32 %v407, %v585
    %587 = vmatprep.mubr.f32.mxu0 0.0
    %588 = vmatmul.mubr.f32.gmra.mrb[0].mxu0 %v449
    %v589 = vpop.f32.mrb[0].mxu0
    %v590 = vadd.f32 %v403, %v589
    %v591 = vpop.f32.mrb[0].mxu0
    %v592 = vadd.f32 %v407, %v591
    %593 = vmatprep.mubr.f32.mxu0 0.0
    %594 = vmatmul.mubr.f32.gmra.mrb[0].mxu0 %v452
    %v595 = vpop.f32.mrb[0].mxu0
    %v596 = vadd.f32 %v403, %v595
    %v597 = vpop.f32.mrb[0].mxu0
    %v598 = vadd.f32 %v407, %v597
    %599 = vmatprep.mubr.f32.mxu0 0.0
    %600 = vmatmul.mubr.f32.gmra.mrb[0].mxu0 %v455
    %v601 = vpop.f32.mrb[0].mxu0
    %v602 = vadd.f32 %v403, %v601
    %v603 = vpop.f32.mrb[0].mxu0
    %v604 = vadd.f32 %v407, %v603
    %605 = vmatprep.mubr.f32.mxu0 0.0
    %606 = vmatmul.mubr.f32.gmra.mrb[0].mxu0 %v458
    %v607 = vpop.f32.mrb[0].mxu0
    %v608 = vadd.f32 %v403, %v607
    %v609 = vpop.f32.mrb[0].mxu0
    %v610 = vadd.f32 %v407, %v609
    %611 = vmatprep.mubr.f32.mxu0 0.0
    %612 = vmatmul.mubr.f32.gmra.mrb[0].mxu0 %v461
    %v613 = vpop.f32.mrb[0].mxu0
    %v614 = vadd.f32 %v403, %v613
    %v615 = vpop.f32.mrb[0].mxu0
    %v616 = vadd.f32 %v407, %v615
    %617 = vmatprep.mubr.f32.mxu0 0.0
    %618 = vmatmul.mubr.f32.gmra.mrb[0].mxu0 %v464
    %v619 = vpop.f32.mrb[0].mxu0
    %v620 = vadd.f32 %v403, %v619
    %v621 = vpop.f32.mrb[0].mxu0
    %v622 = vadd.f32 %v407, %v621
    %623 = vmatprep.mubr.f32.mxu0 0.0
    %624 = vmatmul.mubr.f32.gmra.mrb[0].mxu0 %v467
    %v625 = vpop.f32.mrb[0].mxu0
    %v626 = vadd.f32 %v403, %v625
    %v627 = vpop.f32.mrb[0].mxu0
    %v628 = vadd.f32 %v407, %v627
    %629 = vdwg.mxu0
    %630 = vmatprep.subr.mxu0 %v385
    %631 = vmatpush1.msra.mxu0 %v384
    %632 = vmatprep.subr.mxu0 %v389
    %633 = vmatpush1.msra.mxu0 %v388
    %634 = vmatprep.subr.mxu0 %v393
    %635 = vmatpush1.msra.mxu0 %v392
    %636 = vmatprep.subr.mxu0 %v397
    %637 = vmatpush1.msra.mxu0 %v396
    %638 = vmatprep.subr.mxu0 0.0
    %639 = vmatpush1.msra.mxu0 0.0
    %640 = vmatprep.subr.mxu0 0.0
    %641 = vmatpush1.msra.mxu0 0.0
    %642 = vmatprep.subr.mxu0 0.0
    %643 = vmatpush1.msra.mxu0 0.0
    %644 = vmatprep.subr.mxu0 0.0
    %645 = vmatpush1.msra.mxu0 0.0
    %646 = vmatprep.subr.mxu0 0.0
    %647 = vmatpush1.msra.mxu0 0.0
    %648 = vmatprep.subr.mxu0 0.0
    %649 = vmatpush1.msra.mxu0 0.0
    %650 = vmatprep.subr.mxu0 0.0
    %651 = vmatpush1.msra.mxu0 0.0
    %652 = vmatprep.subr.mxu0 0.0
    %653 = vmatpush1.msra.mxu0 0.0
    %654 = vmatprep.subr.mxu0 0.0
    %655 = vmatpush1.msra.mxu0 0.0
    %656 = vmatprep.subr.mxu0 0.0
    %657 = vmatpush1.msra.mxu0 0.0
    %658 = vmatprep.subr.mxu0 0.0
    %659 = vmatpush1.msra.mxu0 0.0
    %660 = vmatprep.subr.mxu0 0.0
    %661 = vmatpush1.msra.mxu0 0.0
    %662 = vmatprep.subr.mxu0 0.0
    %663 = vmatpush1.msra.mxu0 0.0
    %664 = vmatprep.subr.mxu0 0.0
    %665 = vmatpush1.msra.mxu0 0.0
    %666 = vmatprep.subr.mxu0 0.0
    %667 = vmatpush1.msra.mxu0 0.0
    %668 = vmatprep.subr.mxu0 0.0
    %669 = vmatpush1.msra.mxu0 0.0
    %670 = vmatprep.subr.mxu0 0.0
    %671 = vmatpush1.msra.mxu0 0.0
    %672 = vmatprep.subr.mxu0 0.0
    %673 = vmatpush1.msra.mxu0 0.0
    %674 = vmatprep.subr.mxu0 0.0
    %675 = vmatpush1.msra.mxu0 0.0
    %676 = vmatprep.subr.mxu0 0.0
    %677 = vmatpush1.msra.mxu0 0.0
    %678 = vmatprep.subr.mxu0 0.0
    %679 = vmatpush1.msra.mxu0 0.0
    %680 = vmatprep.subr.mxu0 0.0
    %681 = vmatpush1.msra.mxu0 0.0
    %682 = vmatprep.subr.mxu0 0.0
    %683 = vmatpush1.msra.mxu0 0.0
    %684 = vmatprep.subr.mxu0 0.0
    %685 = vmatpush1.msra.mxu0 0.0
    %686 = vmatprep.subr.mxu0 0.0
    %687 = vmatpush1.msra.mxu0 0.0
    %688 = vmatprep.subr.mxu0 0.0
    %689 = vmatpush1.msra.mxu0 0.0
    %690 = vmatprep.subr.mxu0 0.0
    %691 = vmatpush1.msra.mxu0 0.0
    %692 = vmatprep.subr.mxu0 0.0
    %693 = vmatpush1.msra.mxu0 0.0
    %694 = vmatprep.mubr.f32.mxu0 0.0
    %695 = vmatmul.mubr.f32.gmra.mrb[0].mxu0 %v422
    %v696 = vpop.f32.mrb[0].mxu0
    %v697 = vadd.f32 %v411, %v696
    %v698 = vpop.f32.mrb[0].mxu0
    %v699 = vadd.f32 %v415, %v698
    %700 = vmatprep.mubr.f32.mxu0 0.0
    %701 = vmatmul.mubr.f32.gmra.mrb[0].mxu0 %v425
    %v702 = vpop.f32.mrb[0].mxu0
    %v703 = vadd.f32 %v411, %v702
    %v704 = vpop.f32.mrb[0].mxu0
    %v705 = vadd.f32 %v415, %v704
    %706 = vmatprep.mubr.f32.mxu0 0.0
    %707 = vmatmul.mubr.f32.gmra.mrb[0].mxu0 %v428
    %v708 = vpop.f32.mrb[0].mxu0
    %v709 = vadd.f32 %v411, %v708
    %v710 = vpop.f32.mrb[0].mxu0
    %v711 = vadd.f32 %v415, %v710
    %712 = vmatprep.mubr.f32.mxu0 0.0
    %713 = vmatmul.mubr.f32.gmra.mrb[0].mxu0 %v431
    %v714 = vpop.f32.mrb[0].mxu0
    %v715 = vadd.f32 %v411, %v714
    %v716 = vpop.f32.mrb[0].mxu0
    %v717 = vadd.f32 %v415, %v716
    %718 = vmatprep.mubr.f32.mxu0 0.0
    %719 = vmatmul.mubr.f32.gmra.mrb[0].mxu0 %v434
    %v720 = vpop.f32.mrb[0].mxu0
    %v721 = vadd.f32 %v411, %v720
    %v722 = vpop.f32.mrb[0].mxu0
    %v723 = vadd.f32 %v415, %v722
    %724 = vmatprep.mubr.f32.mxu0 0.0
    %725 = vmatmul.mubr.f32.gmra.mrb[0].mxu0 %v437
    %v726 = vpop.f32.mrb[0].mxu0
    %v727 = vadd.f32 %v411, %v726
    %v728 = vpop.f32.mrb[0].mxu0
    %v729 = vadd.f32 %v415, %v728
    %730 = vmatprep.mubr.f32.mxu0 0.0
    %731 = vmatmul.mubr.f32.gmra.mrb[0].mxu0 %v440
    %v732 = vpop.f32.mrb[0].mxu0
    %v733 = vadd.f32 %v411, %v732
    %v734 = vpop.f32.mrb[0].mxu0
    %v735 = vadd.f32 %v415, %v734
    %736 = vmatprep.mubr.f32.mxu0 0.0
    %737 = vmatmul.mubr.f32.gmra.mrb[0].mxu0 %v443
    %v738 = vpop.f32.mrb[0].mxu0
    %v739 = vadd.f32 %v411, %v738
    %v740 = vpop.f32.mrb[0].mxu0
    %v741 = vadd.f32 %v415, %v740
    %742 = vmatprep.mubr.f32.mxu0 0.0
    %743 = vmatmul.mubr.f32.gmra.mrb[0].mxu0 %v446
    %v744 = vpop.f32.mrb[0].mxu0
    %v745 = vadd.f32 %v411, %v744
    %v746 = vpop.f32.mrb[0].mxu0
    %v747 = vadd.f32 %v415, %v746
    %748 = vmatprep.mubr.f32.mxu0 0.0
    %749 = vmatmul.mubr.f32.gmra.mrb[0].mxu0 %v449
    %v750 = vpop.f32.mrb[0].mxu0
    %v751 = vadd.f32 %v411, %v750
    %v752 = vpop.f32.mrb[0].mxu0
    %v753 = vadd.f32 %v415, %v752
    %754 = vmatprep.mubr.f32.mxu0 0.0
    %755 = vmatmul.mubr.f32.gmra.mrb[0].mxu0 %v452
    %v756 = vpop.f32.mrb[0].mxu0
    %v757 = vadd.f32 %v411, %v756
    %v758 = vpop.f32.mrb[0].mxu0
    %v759 = vadd.f32 %v415, %v758
    %760 = vmatprep.mubr.f32.mxu0 0.0
    %761 = vmatmul.mubr.f32.gmra.mrb[0].mxu0 %v455
    %v762 = vpop.f32.mrb[0].mxu0
    %v763 = vadd.f32 %v411, %v762
    %v764 = vpop.f32.mrb[0].mxu0
    %v765 = vadd.f32 %v415, %v764
    %766 = vmatprep.mubr.f32.mxu0 0.0
    %767 = vmatmul.mubr.f32.gmra.mrb[0].mxu0 %v458
    %v768 = vpop.f32.mrb[0].mxu0
    %v769 = vadd.f32 %v411, %v768
    %v770 = vpop.f32.mrb[0].mxu0
    %v771 = vadd.f32 %v415, %v770
    %772 = vmatprep.mubr.f32.mxu0 0.0
    %773 = vmatmul.mubr.f32.gmra.mrb[0].mxu0 %v461
    %v774 = vpop.f32.mrb[0].mxu0
    %v775 = vadd.f32 %v411, %v774
    %v776 = vpop.f32.mrb[0].mxu0
    %v777 = vadd.f32 %v415, %v776
    %778 = vmatprep.mubr.f32.mxu0 0.0
    %779 = vmatmul.mubr.f32.gmra.mrb[0].mxu0 %v464
    %v780 = vpop.f32.mrb[0].mxu0
    %v781 = vadd.f32 %v411, %v780
    %v782 = vpop.f32.mrb[0].mxu0
    %v783 = vadd.f32 %v415, %v782
    %784 = vmatprep.mubr.f32.mxu0 0.0
    %785 = vmatmul.mubr.f32.gmra.mrb[0].mxu0 %v467
    %v786 = vpop.f32.mrb[0].mxu0
    %v787 = vadd.f32 %v411, %v786
    %v788 = vpop.f32.mrb[0].mxu0
    %v789 = vadd.f32 %v415, %v788
    %790 = vdwg.mxu0
    %791 = vst [vmem:[#allocation2] sm:$0xff] %v536
    %792 = vst [vmem:[#allocation2 + $0x8] sm:$0xff] %v538
    %793 = vst [vmem:[#allocation2 + $0x10] sm:$0xff] %v697
    %794 = vst [vmem:[#allocation2 + $0x18] sm:$0xff] %v699
    %795 = vst [vmem:[#allocation2 + $0x20] sm:$0xff] %v542
    %796 = vst [vmem:[#allocation2 + $0x28] sm:$0xff] %v544
    %797 = vst [vmem:[#allocation2 + $0x30] sm:$0xff] %v703
    %798 = vst [vmem:[#allocation2 + $0x38] sm:$0xff] %v705
    %799 = vst [vmem:[#allocation2 + $0x40] sm:$0xff] %v548
    %800 = vst [vmem:[#allocation2 + $0x48] sm:$0xff] %v550
    %801 = vst [vmem:[#allocation2 + $0x50] sm:$0xff] %v709
    %802 = vst [vmem:[#allocation2 + $0x58] sm:$0xff] %v711
    %803 = vst [vmem:[#allocation2 + $0x60] sm:$0xff] %v554
    %804 = vst [vmem:[#allocation2 + $0x68] sm:$0xff] %v556
    %805 = vst [vmem:[#allocation2 + $0x70] sm:$0xff] %v715
    %806 = vst [vmem:[#allocation2 + $0x78] sm:$0xff] %v717
    %807 = vst [vmem:[#allocation2 + $0x80] sm:$0xff] %v560
    %808 = vst [vmem:[#allocation2 + $0x88] sm:$0xff] %v562
    %809 = vst [vmem:[#allocation2 + $0x90] sm:$0xff] %v721
    %810 = vst [vmem:[#allocation2 + $0x98] sm:$0xff] %v723
    %811 = vst [vmem:[#allocation2 + $0xa0] sm:$0xff] %v566
    %812 = vst [vmem:[#allocation2 + $0xa8] sm:$0xff] %v568
    %813 = vst [vmem:[#allocation2 + $0xb0] sm:$0xff] %v727
    %814 = vst [vmem:[#allocation2 + $0xb8] sm:$0xff] %v729
    %815 = vst [vmem:[#allocation2 + $0xc0] sm:$0xff] %v572
    %816 = vst [vmem:[#allocation2 + $0xc8] sm:$0xff] %v574
    %817 = vst [vmem:[#allocation2 + $0xd0] sm:$0xff] %v733
    %818 = vst [vmem:[#allocation2 + $0xd8] sm:$0xff] %v735
    %819 = vst [vmem:[#allocation2 + $0xe0] sm:$0xff] %v578
    %820 = vst [vmem:[#allocation2 + $0xe8] sm:$0xff] %v580
    %821 = vst [vmem:[#allocation2 + $0xf0] sm:$0xff] %v739
    %822 = vst [vmem:[#allocation2 + $0xf8] sm:$0xff] %v741
    %823 = vst [vmem:[#allocation2 + $0x100] sm:$0xff] %v584
    %824 = vst [vmem:[#allocation2 + $0x108] sm:$0xff] %v586
    %825 = vst [vmem:[#allocation2 + $0x110] sm:$0xff] %v745
    %826 = vst [vmem:[#allocation2 + $0x118] sm:$0xff] %v747
    %827 = vst [vmem:[#allocation2 + $0x120] sm:$0xff] %v590
    %828 = vst [vmem:[#allocation2 + $0x128] sm:$0xff] %v592
    %829 = vst [vmem:[#allocation2 + $0x130] sm:$0xff] %v751
    %830 = vst [vmem:[#allocation2 + $0x138] sm:$0xff] %v753
    %831 = vst [vmem:[#allocation2 + $0x140] sm:$0xff] %v596
    %832 = vst [vmem:[#allocation2 + $0x148] sm:$0xff] %v598
    %833 = vst [vmem:[#allocation2 + $0x150] sm:$0xff] %v757
    %834 = vst [vmem:[#allocation2 + $0x158] sm:$0xff] %v759
    %835 = vst [vmem:[#allocation2 + $0x160] sm:$0xff] %v602
    %836 = vst [vmem:[#allocation2 + $0x168] sm:$0xff] %v604
    %837 = vst [vmem:[#allocation2 + $0x170] sm:$0xff] %v763
    %838 = vst [vmem:[#allocation2 + $0x178] sm:$0xff] %v765
    %839 = vst [vmem:[#allocation2 + $0x180] sm:$0xff] %v608
    %840 = vst [vmem:[#allocation2 + $0x188] sm:$0xff] %v610
    %841 = vst [vmem:[#allocation2 + $0x190] sm:$0xff] %v769
    %842 = vst [vmem:[#allocation2 + $0x198] sm:$0xff] %v771
    %843 = vst [vmem:[#allocation2 + $0x1a0] sm:$0xff] %v614
    %844 = vst [vmem:[#allocation2 + $0x1a8] sm:$0xff] %v616
    %845 = vst [vmem:[#allocation2 + $0x1b0] sm:$0xff] %v775
    %846 = vst [vmem:[#allocation2 + $0x1b8] sm:$0xff] %v777
    %847 = vst [vmem:[#allocation2 + $0x1c0] sm:$0xff] %v620
    %848 = vst [vmem:[#allocation2 + $0x1c8] sm:$0xff] %v622
    %849 = vst [vmem:[#allocation2 + $0x1d0] sm:$0xff] %v781
    %850 = vst [vmem:[#allocation2 + $0x1d8] sm:$0xff] %v783
    %851 = vst [vmem:[#allocation2 + $0x1e0] sm:$0xff] %v626
    %852 = vst [vmem:[#allocation2 + $0x1e8] sm:$0xff] %v628
    %853 = vst [vmem:[#allocation2 + $0x1f0] sm:$0xff] %v787
    %854 = vst [vmem:[#allocation2 + $0x1f8] sm:$0xff] %v789
    %v855 = vld [vmem:[%s2] sm:$0xff]
    %v856 = vld [vmem:[%s2 + $0x8] sm:$0xff]
    %v857 = vld [vmem:[%s1] sm:$0xff]
    %v858 = vld [vmem:[%s1 + $0x8] sm:$0xff]
    %859 = vset.pattern.permute.xlu0 0
    %860 = vperm.xlu0 %859, %v857
    %v861 = vpop.permute.xlu0 %860
    %862 = vset.pattern.permute.xlu0 0
    %863 = vperm.xlu0 %862, %v858
    %v864 = vpop.permute.xlu0 %863
    %v865 = vld [vmem:[#allocation3] sm:$0xff]
    %v866 = vld [vmem:[#allocation3 + $0x8] sm:$0xff]
    %v867 = vld [vmem:[#allocation3 + $0x10] sm:$0xff]
    %v868 = vld [vmem:[#allocation3 + $0x18] sm:$0xff]
    %v869 = vld [vmem:[#allocation3 + $0x20] sm:$0xff]
    %v870 = vld [vmem:[#allocation3 + $0x28] sm:$0xff]
    %v871 = vld [vmem:[#allocation3 + $0x30] sm:$0xff]
    %v872 = vld [vmem:[#allocation3 + $0x38] sm:$0xff]
    %v873 = vld [vmem:[#allocation3 + $0x40] sm:$0xff]
    %v874 = vld [vmem:[#allocation3 + $0x48] sm:$0xff]
    %v875 = vld [vmem:[#allocation3 + $0x50] sm:$0xff]
    %v876 = vld [vmem:[#allocation3 + $0x58] sm:$0xff]
    %v877 = vld [vmem:[#allocation3 + $0x60] sm:$0xff]
    %v878 = vld [vmem:[#allocation3 + $0x68] sm:$0xff]
    %v879 = vld [vmem:[#allocation3 + $0x70] sm:$0xff]
    %v880 = vld [vmem:[#allocation3 + $0x78] sm:$0xff]
    %v881 = vld [vmem:[#allocation3 + $0x80] sm:$0xff]
    %v882 = vld [vmem:[#allocation3 + $0x88] sm:$0xff]
    %v883 = vld [vmem:[#allocation3 + $0x90] sm:$0xff]
    %v884 = vld [vmem:[#allocation3 + $0x98] sm:$0xff]
    %v885 = vld [vmem:[#allocation3 + $0xa0] sm:$0xff]
    %v886 = vld [vmem:[#allocation3 + $0xa8] sm:$0xff]
    %v887 = vld [vmem:[#allocation3 + $0xb0] sm:$0xff]
    %v888 = vld [vmem:[#allocation3 + $0xb8] sm:$0xff]
    %v889 = vld [vmem:[#allocation3 + $0xc0] sm:$0xff]
    %v890 = vld [vmem:[#allocation3 + $0xc8] sm:$0xff]
    %v891 = vld [vmem:[#allocation3 + $0xd0] sm:$0xff]
    %v892 = vld [vmem:[#allocation3 + $0xd8] sm:$0xff]
    %v893 = vld [vmem:[#allocation3 + $0xe0] sm:$0xff]
    %v894 = vld [vmem:[#allocation3 + $0xe8] sm:$0xff]
    %v895 = vld [vmem:[#allocation3 + $0xf0] sm:$0xff]
    %v896 = vld [vmem:[#allocation3 + $0xf8] sm:$0xff]
    %v897 = vld [vmem:[#allocation3 + $0x100] sm:$0xff]
    %v898 = vld [vmem:[#allocation3 + $0x108] sm:$0xff]
    %v899 = vld [vmem:[#allocation3 + $0x110] sm:$0xff]
    %v900 = vld [vmem:[#allocation3 + $0x118] sm:$0xff]
    %v901 = vld [vmem:[#allocation3 + $0x120] sm:$0xff]
    %v902 = vld [vmem:[#allocation3 + $0x128] sm:$0xff]
    %v903 = vld [vmem:[#allocation3 + $0x130] sm:$0xff]
    %v904 = vld [vmem:[#allocation3 + $0x138] sm:$0xff]
    %v905 = vld [vmem:[#allocation3 + $0x140] sm:$0xff]
    %v906 = vld [vmem:[#allocation3 + $0x148] sm:$0xff]
    %v907 = vld [vmem:[#allocation3 + $0x150] sm:$0xff]
    %v908 = vld [vmem:[#allocation3 + $0x158] sm:$0xff]
    %v909 = vld [vmem:[#allocation3 + $0x160] sm:$0xff]
    %v910 = vld [vmem:[#allocation3 + $0x168] sm:$0xff]
    %v911 = vld [vmem:[#allocation3 + $0x170] sm:$0xff]
    %v912 = vld [vmem:[#allocation3 + $0x178] sm:$0xff]
    %v913 = vld [vmem:[#allocation3 + $0x180] sm:$0xff]
    %v914 = vld [vmem:[#allocation3 + $0x188] sm:$0xff]
    %v915 = vld [vmem:[#allocation3 + $0x190] sm:$0xff]
    %v916 = vld [vmem:[#allocation3 + $0x198] sm:$0xff]
    %v917 = vld [vmem:[#allocation3 + $0x1a0] sm:$0xff]
    %v918 = vld [vmem:[#allocation3 + $0x1a8] sm:$0xff]
    %v919 = vld [vmem:[#allocation3 + $0x1b0] sm:$0xff]
    %v920 = vld [vmem:[#allocation3 + $0x1b8] sm:$0xff]
    %v921 = vld [vmem:[#allocation3 + $0x1c0] sm:$0xff]
    %v922 = vld [vmem:[#allocation3 + $0x1c8] sm:$0xff]
    %v923 = vld [vmem:[#allocation3 + $0x1d0] sm:$0xff]
    %v924 = vld [vmem:[#allocation3 + $0x1d8] sm:$0xff]
    %v925 = vld [vmem:[#allocation3 + $0x1e0] sm:$0xff]
    %v926 = vld [vmem:[#allocation3 + $0x1e8] sm:$0xff]
    %v927 = vld [vmem:[#allocation3 + $0x1f0] sm:$0xff]
    %v928 = vld [vmem:[#allocation3 + $0x1f8] sm:$0xff]
    %v929 = vld [vmem:[#allocation5] sm:$0xff]
    %v930 = vld [vmem:[#allocation5 + $0x8] sm:$0xff]
    %v931 = vld [vmem:[#allocation5 + $0x10] sm:$0xff]
    %v932 = vld [vmem:[#allocation5 + $0x18] sm:$0xff]
    %v933 = vld [vmem:[#allocation5 + $0x20] sm:$0xff]
    %v934 = vld [vmem:[#allocation5 + $0x28] sm:$0xff]
    %v935 = vld [vmem:[#allocation5 + $0x30] sm:$0xff]
    %v936 = vld [vmem:[#allocation5 + $0x38] sm:$0xff]
    %v937 = vld [vmem:[#allocation5 + $0x40] sm:$0xff]
    %v938 = vld [vmem:[#allocation5 + $0x48] sm:$0xff]
    %v939 = vld [vmem:[#allocation5 + $0x50] sm:$0xff]
    %v940 = vld [vmem:[#allocation5 + $0x58] sm:$0xff]
    %v941 = vld [vmem:[#allocation5 + $0x60] sm:$0xff]
    %v942 = vld [vmem:[#allocation5 + $0x68] sm:$0xff]
    %v943 = vld [vmem:[#allocation5 + $0x70] sm:$0xff]
    %v944 = vld [vmem:[#allocation5 + $0x78] sm:$0xff]
    %v945 = vld [vmem:[#allocation5 + $0x80] sm:$0xff]
    %v946 = vld [vmem:[#allocation5 + $0x88] sm:$0xff]
    %v947 = vld [vmem:[#allocation5 + $0x90] sm:$0xff]
    %v948 = vld [vmem:[#allocation5 + $0x98] sm:$0xff]
    %v949 = vld [vmem:[#allocation5 + $0xa0] sm:$0xff]
    %v950 = vld [vmem:[#allocation5 + $0xa8] sm:$0xff]
    %v951 = vld [vmem:[#allocation5 + $0xb0] sm:$0xff]
    %v952 = vld [vmem:[#allocation5 + $0xb8] sm:$0xff]
    %v953 = vld [vmem:[#allocation5 + $0xc0] sm:$0xff]
    %v954 = vld [vmem:[#allocation5 + $0xc8] sm:$0xff]
    %v955 = vld [vmem:[#allocation5 + $0xd0] sm:$0xff]
    %v956 = vld [vmem:[#allocation5 + $0xd8] sm:$0xff]
    %v957 = vld [vmem:[#allocation5 + $0xe0] sm:$0xff]
    %v958 = vld [vmem:[#allocation5 + $0xe8] sm:$0xff]
    %v959 = vld [vmem:[#allocation5 + $0xf0] sm:$0xff]
    %v960 = vld [vmem:[#allocation5 + $0xf8] sm:$0xff]
    %v961 = vld [vmem:[#allocation5 + $0x100] sm:$0xff]
    %v962 = vld [vmem:[#allocation5 + $0x108] sm:$0xff]
    %v963 = vld [vmem:[#allocation5 + $0x110] sm:$0xff]
    %v964 = vld [vmem:[#allocation5 + $0x118] sm:$0xff]
    %v965 = vld [vmem:[#allocation5 + $0x120] sm:$0xff]
    %v966 = vld [vmem:[#allocation5 + $0x128] sm:$0xff]
    %v967 = vld [vmem:[#allocation5 + $0x130] sm:$0xff]
    %v968 = vld [vmem:[#allocation5 + $0x138] sm:$0xff]
    %v969 = vld [vmem:[#allocation5 + $0x140] sm:$0xff]
    %v970 = vld [vmem:[#allocation5 + $0x148] sm:$0xff]
    %v971 = vld [vmem:[#allocation5 + $0x150] sm:$0xff]
    %v972 = vld [vmem:[#allocation5 + $0x158] sm:$0xff]
    %v973 = vld [vmem:[#allocation5 + $0x160] sm:$0xff]
    %v974 = vld [vmem:[#allocation5 + $0x168] sm:$0xff]
    %v975 = vld [vmem:[#allocation5 + $0x170] sm:$0xff]
    %v976 = vld [vmem:[#allocation5 + $0x178] sm:$0xff]
    %v977 = vld [vmem:[#allocation5 + $0x180] sm:$0xff]
    %v978 = vld [vmem:[#allocation5 + $0x188] sm:$0xff]
    %v979 = vld [vmem:[#allocation5 + $0x190] sm:$0xff]
    %v980 = vld [vmem:[#allocation5 + $0x198] sm:$0xff]
    %v981 = vld [vmem:[#allocation5 + $0x1a0] sm:$0xff]
    %v982 = vld [vmem:[#allocation5 + $0x1a8] sm:$0xff]
    %v983 = vld [vmem:[#allocation5 + $0x1b0] sm:$0xff]
    %v984 = vld [vmem:[#allocation5 + $0x1b8] sm:$0xff]
    %v985 = vld [vmem:[#allocation5 + $0x1c0] sm:$0xff]
    %v986 = vld [vmem:[#allocation5 + $0x1c8] sm:$0xff]
    %v987 = vld [vmem:[#allocation5 + $0x1d0] sm:$0xff]
    %v988 = vld [vmem:[#allocation5 + $0x1d8] sm:$0xff]
    %v989 = vld [vmem:[#allocation5 + $0x1e0] sm:$0xff]
    %v990 = vld [vmem:[#allocation5 + $0x1e8] sm:$0xff]
    %v991 = vld [vmem:[#allocation5 + $0x1f0] sm:$0xff]
    %v992 = vld [vmem:[#allocation5 + $0x1f8] sm:$0xff]
    %v993 = vld [vmem:[#allocation5 + $0x200] sm:$0xff]
    %v994 = vld [vmem:[#allocation5 + $0x208] sm:$0xff]
    %v995 = vld [vmem:[#allocation5 + $0x210] sm:$0xff]
    %v996 = vld [vmem:[#allocation5 + $0x218] sm:$0xff]
    %v997 = vld [vmem:[#allocation5 + $0x220] sm:$0xff]
    %v998 = vld [vmem:[#allocation5 + $0x228] sm:$0xff]
    %v999 = vld [vmem:[#allocation5 + $0x230] sm:$0xff]
    %v1000 = vld [vmem:[#allocation5 + $0x238] sm:$0xff]
    %v1001 = vld [vmem:[#allocation5 + $0x240] sm:$0xff]
    %v1002 = vld [vmem:[#allocation5 + $0x248] sm:$0xff]
    %v1003 = vld [vmem:[#allocation5 + $0x250] sm:$0xff]
    %v1004 = vld [vmem:[#allocation5 + $0x258] sm:$0xff]
    %v1005 = vld [vmem:[#allocation5 + $0x260] sm:$0xff]
    %v1006 = vld [vmem:[#allocation5 + $0x268] sm:$0xff]
    %v1007 = vld [vmem:[#allocation5 + $0x270] sm:$0xff]
    %v1008 = vld [vmem:[#allocation5 + $0x278] sm:$0xff]
    %v1009 = vld [vmem:[#allocation5 + $0x280] sm:$0xff]
    %v1010 = vld [vmem:[#allocation5 + $0x288] sm:$0xff]
    %v1011 = vld [vmem:[#allocation5 + $0x290] sm:$0xff]
    %v1012 = vld [vmem:[#allocation5 + $0x298] sm:$0xff]
    %v1013 = vld [vmem:[#allocation5 + $0x2a0] sm:$0xff]
    %v1014 = vld [vmem:[#allocation5 + $0x2a8] sm:$0xff]
    %v1015 = vld [vmem:[#allocation5 + $0x2b0] sm:$0xff]
    %v1016 = vld [vmem:[#allocation5 + $0x2b8] sm:$0xff]
    %v1017 = vld [vmem:[#allocation5 + $0x2c0] sm:$0xff]
    %v1018 = vld [vmem:[#allocation5 + $0x2c8] sm:$0xff]
    %v1019 = vld [vmem:[#allocation5 + $0x2d0] sm:$0xff]
    %v1020 = vld [vmem:[#allocation5 + $0x2d8] sm:$0xff]
    %v1021 = vld [vmem:[#allocation5 + $0x2e0] sm:$0xff]
    %v1022 = vld [vmem:[#allocation5 + $0x2e8] sm:$0xff]
    %v1023 = vld [vmem:[#allocation5 + $0x2f0] sm:$0xff]
    %v1024 = vld [vmem:[#allocation5 + $0x2f8] sm:$0xff]
    %v1025 = vld [vmem:[#allocation5 + $0x300] sm:$0xff]
    %v1026 = vld [vmem:[#allocation5 + $0x308] sm:$0xff]
    %v1027 = vld [vmem:[#allocation5 + $0x310] sm:$0xff]
    %v1028 = vld [vmem:[#allocation5 + $0x318] sm:$0xff]
    %v1029 = vld [vmem:[#allocation5 + $0x320] sm:$0xff]
    %v1030 = vld [vmem:[#allocation5 + $0x328] sm:$0xff]
    %v1031 = vld [vmem:[#allocation5 + $0x330] sm:$0xff]
    %v1032 = vld [vmem:[#allocation5 + $0x338] sm:$0xff]
    %v1033 = vld [vmem:[#allocation5 + $0x340] sm:$0xff]
    %v1034 = vld [vmem:[#allocation5 + $0x348] sm:$0xff]
    %v1035 = vld [vmem:[#allocation5 + $0x350] sm:$0xff]
    %v1036 = vld [vmem:[#allocation5 + $0x358] sm:$0xff]
    %v1037 = vld [vmem:[#allocation5 + $0x360] sm:$0xff]
    %v1038 = vld [vmem:[#allocation5 + $0x368] sm:$0xff]
    %v1039 = vld [vmem:[#allocation5 + $0x370] sm:$0xff]
    %v1040 = vld [vmem:[#allocation5 + $0x378] sm:$0xff]
    %v1041 = vld [vmem:[#allocation5 + $0x380] sm:$0xff]
    %v1042 = vld [vmem:[#allocation5 + $0x388] sm:$0xff]
    %v1043 = vld [vmem:[#allocation5 + $0x390] sm:$0xff]
    %v1044 = vld [vmem:[#allocation5 + $0x398] sm:$0xff]
    %v1045 = vld [vmem:[#allocation5 + $0x3a0] sm:$0xff]
    %v1046 = vld [vmem:[#allocation5 + $0x3a8] sm:$0xff]
    %v1047 = vld [vmem:[#allocation5 + $0x3b0] sm:$0xff]
    %v1048 = vld [vmem:[#allocation5 + $0x3b8] sm:$0xff]
    %v1049 = vld [vmem:[#allocation5 + $0x3c0] sm:$0xff]
    %v1050 = vld [vmem:[#allocation5 + $0x3c8] sm:$0xff]
    %v1051 = vld [vmem:[#allocation5 + $0x3d0] sm:$0xff]
    %v1052 = vld [vmem:[#allocation5 + $0x3d8] sm:$0xff]
    %v1053 = vld [vmem:[#allocation5 + $0x3e0] sm:$0xff]
    %v1054 = vld [vmem:[#allocation5 + $0x3e8] sm:$0xff]
    %v1055 = vld [vmem:[#allocation5 + $0x3f0] sm:$0xff]
    %v1056 = vld [vmem:[#allocation5 + $0x3f8] sm:$0xff]
    %v1057 = vld [vmem:[%s8] sm:$0xf]
    %s1058 = smul.u32 0, 4
    %s1059 = smul.addr %s1058, 8
    %s1060 = scalar_lea.vmem [#allocation2], %s1059
    %v1061 = vld [vmem:[%s1060] sm:$0xff]
    %v1062 = vld [vmem:[%s1060 + $0x8] sm:$0xff]
    %v1063 = vld [vmem:[%s1060 + $0x10] sm:$0xff]
    %v1064 = vld [vmem:[%s1060 + $0x18] sm:$0xff]
    %v1065 = vld [vmem:[%s1060 + $0x20] sm:$0xff]
    %v1066 = vld [vmem:[%s1060 + $0x28] sm:$0xff]
    %v1067 = vld [vmem:[%s1060 + $0x30] sm:$0xff]
    %v1068 = vld [vmem:[%s1060 + $0x38] sm:$0xff]
    %1069 = vmatprep.subr.mxu0 %v866
    %1070 = vmatpush1.msra.mxu0 %v865
    %1071 = vmatprep.subr.mxu0 %v870
    %1072 = vmatpush1.msra.mxu0 %v869
    %1073 = vmatprep.subr.mxu0 %v874
    %1074 = vmatpush1.msra.mxu0 %v873
    %1075 = vmatprep.subr.mxu0 %v878
    %1076 = vmatpush1.msra.mxu0 %v877
    %1077 = vmatprep.subr.mxu0 %v882
    %1078 = vmatpush1.msra.mxu0 %v881
    %1079 = vmatprep.subr.mxu0 %v886
    %1080 = vmatpush1.msra.mxu0 %v885
    %1081 = vmatprep.subr.mxu0 %v890
    %1082 = vmatpush1.msra.mxu0 %v889
    %1083 = vmatprep.subr.mxu0 %v894
    %1084 = vmatpush1.msra.mxu0 %v893
    %1085 = vmatprep.subr.mxu0 %v898
    %1086 = vmatpush1.msra.mxu0 %v897
    %1087 = vmatprep.subr.mxu0 %v902
    %1088 = vmatpush1.msra.mxu0 %v901
    %1089 = vmatprep.subr.mxu0 %v906
    %1090 = vmatpush1.msra.mxu0 %v905
    %1091 = vmatprep.subr.mxu0 %v910
    %1092 = vmatpush1.msra.mxu0 %v909
    %1093 = vmatprep.subr.mxu0 %v914
    %1094 = vmatpush1.msra.mxu0 %v913
    %1095 = vmatprep.subr.mxu0 %v918
    %1096 = vmatpush1.msra.mxu0 %v917
    %1097 = vmatprep.subr.mxu0 %v922
    %1098 = vmatpush1.msra.mxu0 %v921
    %1099 = vmatprep.subr.mxu0 %v926
    %1100 = vmatpush1.msra.mxu0 %v925
    %1101 = vmatprep.subr.mxu0 0.0
    %1102 = vmatpush1.msra.mxu0 0.0
    %1103 = vmatprep.subr.mxu0 0.0
    %1104 = vmatpush1.msra.mxu0 0.0
    %1105 = vmatprep.subr.mxu0 0.0
    %1106 = vmatpush1.msra.mxu0 0.0
    %1107 = vmatprep.subr.mxu0 0.0
    %1108 = vmatpush1.msra.mxu0 0.0
    %1109 = vmatprep.subr.mxu0 0.0
    %1110 = vmatpush1.msra.mxu0 0.0
    %1111 = vmatprep.subr.mxu0 0.0
    %1112 = vmatpush1.msra.mxu0 0.0
    %1113 = vmatprep.subr.mxu0 0.0
    %1114 = vmatpush1.msra.mxu0 0.0
    %1115 = vmatprep.subr.mxu0 0.0
    %1116 = vmatpush1.msra.mxu0 0.0
    %1117 = vmatprep.subr.mxu0 0.0
    %1118 = vmatpush1.msra.mxu0 0.0
    %1119 = vmatprep.subr.mxu0 0.0
    %1120 = vmatpush1.msra.mxu0 0.0
    %1121 = vmatprep.subr.mxu0 0.0
    %1122 = vmatpush1.msra.mxu0 0.0
    %1123 = vmatprep.subr.mxu0 0.0
    %1124 = vmatpush1.msra.mxu0 0.0
    %1125 = vmatprep.subr.mxu0 0.0
    %1126 = vmatpush1.msra.mxu0 0.0
    %1127 = vmatprep.subr.mxu0 0.0
    %1128 = vmatpush1.msra.mxu0 0.0
    %1129 = vmatprep.subr.mxu0 0.0
    %1130 = vmatpush1.msra.mxu0 0.0
    %1131 = vmatprep.subr.mxu0 0.0
    %1132 = vmatpush1.msra.mxu0 0.0
    %1133 = vmatprep.mubr.f32.mxu0 0.0
    %1134 = vmatmul.mubr.f32.gmra.mrb[0].mxu0 %v855
    %v1135 = vpop.f32.mrb[0].mxu0
    %v1136 = vadd.f32 0.0, %v1135
    %v1137 = vpop.f32.mrb[0].mxu0
    %v1138 = vadd.f32 0.0, %v1137
    %1139 = vmatprep.mubr.f32.mxu0 0.0
    %1140 = vmatmul.mubr.f32.gmra.mrb[0].mxu0 %v856
    %v1141 = vpop.f32.mrb[0].mxu0
    %v1142 = vadd.f32 0.0, %v1141
    %v1143 = vpop.f32.mrb[0].mxu0
    %v1144 = vadd.f32 0.0, %v1143
    %1145 = vdwg.mxu0
    %1146 = vmatprep.subr.mxu0 %v868
    %1147 = vmatpush1.msra.mxu0 %v867
    %1148 = vmatprep.subr.mxu0 %v872
    %1149 = vmatpush1.msra.mxu0 %v871
    %1150 = vmatprep.subr.mxu0 %v876
    %1151 = vmatpush1.msra.mxu0 %v875
    %1152 = vmatprep.subr.mxu0 %v880
    %1153 = vmatpush1.msra.mxu0 %v879
    %1154 = vmatprep.subr.mxu0 %v884
    %1155 = vmatpush1.msra.mxu0 %v883
    %1156 = vmatprep.subr.mxu0 %v888
    %1157 = vmatpush1.msra.mxu0 %v887
    %1158 = vmatprep.subr.mxu0 %v892
    %1159 = vmatpush1.msra.mxu0 %v891
    %1160 = vmatprep.subr.mxu0 %v896
    %1161 = vmatpush1.msra.mxu0 %v895
    %1162 = vmatprep.subr.mxu0 %v900
    %1163 = vmatpush1.msra.mxu0 %v899
    %1164 = vmatprep.subr.mxu0 %v904
    %1165 = vmatpush1.msra.mxu0 %v903
    %1166 = vmatprep.subr.mxu0 %v908
    %1167 = vmatpush1.msra.mxu0 %v907
    %1168 = vmatprep.subr.mxu0 %v912
    %1169 = vmatpush1.msra.mxu0 %v911
    %1170 = vmatprep.subr.mxu0 %v916
    %1171 = vmatpush1.msra.mxu0 %v915
    %1172 = vmatprep.subr.mxu0 %v920
    %1173 = vmatpush1.msra.mxu0 %v919
    %1174 = vmatprep.subr.mxu0 %v924
    %1175 = vmatpush1.msra.mxu0 %v923
    %1176 = vmatprep.subr.mxu0 %v928
    %1177 = vmatpush1.msra.mxu0 %v927
    %1178 = vmatprep.subr.mxu0 0.0
    %1179 = vmatpush1.msra.mxu0 0.0
    %1180 = vmatprep.subr.mxu0 0.0
    %1181 = vmatpush1.msra.mxu0 0.0
    %1182 = vmatprep.subr.mxu0 0.0
    %1183 = vmatpush1.msra.mxu0 0.0
    %1184 = vmatprep.subr.mxu0 0.0
    %1185 = vmatpush1.msra.mxu0 0.0
    %1186 = vmatprep.subr.mxu0 0.0
    %1187 = vmatpush1.msra.mxu0 0.0
    %1188 = vmatprep.subr.mxu0 0.0
    %1189 = vmatpush1.msra.mxu0 0.0
    %1190 = vmatprep.subr.mxu0 0.0
    %1191 = vmatpush1.msra.mxu0 0.0
    %1192 = vmatprep.subr.mxu0 0.0
    %1193 = vmatpush1.msra.mxu0 0.0
    %1194 = vmatprep.subr.mxu0 0.0
    %1195 = vmatpush1.msra.mxu0 0.0
    %1196 = vmatprep.subr.mxu0 0.0
    %1197 = vmatpush1.msra.mxu0 0.0
    %1198 = vmatprep.subr.mxu0 0.0
    %1199 = vmatpush1.msra.mxu0 0.0
    %1200 = vmatprep.subr.mxu0 0.0
    %1201 = vmatpush1.msra.mxu0 0.0
    %1202 = vmatprep.subr.mxu0 0.0
    %1203 = vmatpush1.msra.mxu0 0.0
    %1204 = vmatprep.subr.mxu0 0.0
    %1205 = vmatpush1.msra.mxu0 0.0
    %1206 = vmatprep.subr.mxu0 0.0
    %1207 = vmatpush1.msra.mxu0 0.0
    %1208 = vmatprep.subr.mxu0 0.0
    %1209 = vmatpush1.msra.mxu0 0.0
    %1210 = vmatprep.mubr.f32.mxu0 0.0
    %1211 = vmatmul.mubr.f32.gmra.mrb[0].mxu0 %v855
    %v1212 = vpop.f32.mrb[0].mxu0
    %v1213 = vadd.f32 0.0, %v1212
    %v1214 = vpop.f32.mrb[0].mxu0
    %v1215 = vadd.f32 0.0, %v1214
    %1216 = vmatprep.mubr.f32.mxu0 0.0
    %1217 = vmatmul.mubr.f32.gmra.mrb[0].mxu0 %v856
    %v1218 = vpop.f32.mrb[0].mxu0
    %v1219 = vadd.f32 0.0, %v1218
    %v1220 = vpop.f32.mrb[0].mxu0
    %v1221 = vadd.f32 0.0, %v1220
    %1222 = vdwg.mxu0
    %v1223 = vadd.f32 %v1061, %v1136
    %v1224 = vadd.f32 %v1062, %v1138
    %v1225 = vadd.f32 %v1063, %v1213
    %v1226 = vadd.f32 %v1064, %v1215
    %v1227 = vadd.f32 %v1065, %v1142
    %v1228 = vadd.f32 %v1066, %v1144
    %v1229 = vadd.f32 %v1067, %v1219
    %v1230 = vadd.f32 %v1068, %v1221
    %v1231 = vxor.u32 %v1223, 2147483648
    %v1232 = vxor.u32 %v1224, 2147483648
    %v1233 = vxor.u32 %v1225, 2147483648
    %v1234 = vxor.u32 %v1227, 2147483648
    %v1235 = vxor.u32 %v1228, 2147483648
    %v1236 = vxor.u32 %v1229, 2147483648
    %v1237 = vmul.f32 %v1231, 1.442695
    %v1238 = vpow.pop %v1237
    %v1239 = vmul.f32 %v1232, 1.442695
    %v1240 = vpow.pop %v1239
    %v1241 = vmul.f32 %v1233, 1.442695
    %v1242 = vpow.pop %v1241
    %v1243 = vmul.f32 %v1234, 1.442695
    %v1244 = vpow.pop %v1243
    %v1245 = vmul.f32 %v1235, 1.442695
    %v1246 = vpow.pop %v1245
    %v1247 = vmul.f32 %v1236, 1.442695
    %v1248 = vpow.pop %v1247
    %v1249 = vadd.f32 %v1238, 1.0
    %v1250 = vadd.f32 %v1240, 1.0
    %v1251 = vadd.f32 %v1242, 1.0
    %v1252 = vadd.f32 %v1244, 1.0
    %v1253 = vadd.f32 %v1246, 1.0
    %v1254 = vadd.f32 %v1248, 1.0
    %v1255 = vrcp.pop %v1249
    %v1256 = vmul.f32 1.0, %v1255
    %v1257 = vrcp.pop %v1250
    %v1258 = vmul.f32 1.0, %v1257
    %v1259 = vrcp.pop %v1251
    %v1260 = vmul.f32 1.0, %v1259
    %v1261 = vrcp.pop %v1252
    %v1262 = vmul.f32 1.0, %v1261
    %v1263 = vrcp.pop %v1253
    %v1264 = vmul.f32 1.0, %v1263
    %v1265 = vrcp.pop %v1254
    %v1266 = vmul.f32 1.0, %v1265
    %v1267 = vtanh.pop %v1226
    %v1268 = vtanh.pop %v1230
    %v1269 = vmul.f32 %v1258, %v855
    %v1270 = vmul.f32 %v1264, %v856
    %v1271 = vmul.f32 %v1256, %v1267
    %v1272 = vmul.f32 %v1262, %v1268
    %v1273 = vadd.f32 %v1269, %v1271
    %v1274 = vadd.f32 %v1270, %v1272
    %v1275 = vtanh.pop %v1273
    %v1276 = vtanh.pop %v1274
    %v1277 = vmul.f32 %v1260, %v1275
    %v1278 = vmul.f32 %v1266, %v1276
    %v1280 = vlaneseq
    %v1281 = vshrl.u32 %v1280, 7
    %v1282 = vsub.s32 0, %v1281
    %v1283 = vrot.slane %v1057, %v1282
    %v1284 = vlaneseq
    %v1285 = vshrl.u32 %v1284, 7
    %v1286 = vsub.s32 1, %v1285
    %v1287 = vrot.slane %v1057, %v1286
    %v1288 = vlaneseq
    %v1289 = vshrl.u32 %v1288, 7
    %v1290 = vsub.s32 2, %v1289
    %v1291 = vrot.slane %v1057, %v1290
    %v1292 = vlaneseq
    %v1293 = vshrl.u32 %v1292, 7
    %v1294 = vsub.s32 3, %v1293
    %v1295 = vrot.slane %v1057, %v1294
    %1300 = vmatprep.subr.mxu0 %v930
    %1301 = vmatpush1.msra.mxu0 %v929
    %1302 = vmatprep.subr.mxu0 %v934
    %1303 = vmatpush1.msra.mxu0 %v933
    %1304 = vmatprep.subr.mxu0 %v938
    %1305 = vmatpush1.msra.mxu0 %v937
    %1306 = vmatprep.subr.mxu0 %v942
    %1307 = vmatpush1.msra.mxu0 %v941
    %1308 = vmatprep.subr.mxu0 %v946
    %1309 = vmatpush1.msra.mxu0 %v945
    %1310 = vmatprep.subr.mxu0 %v950
    %1311 = vmatpush1.msra.mxu0 %v949
    %1312 = vmatprep.subr.mxu0 %v954
    %1313 = vmatpush1.msra.mxu0 %v953
    %1314 = vmatprep.subr.mxu0 %v958
    %1315 = vmatpush1.msra.mxu0 %v957
    %1316 = vmatprep.subr.mxu0 %v962
    %1317 = vmatpush1.msra.mxu0 %v961
    %1318 = vmatprep.subr.mxu0 %v966
    %1319 = vmatpush1.msra.mxu0 %v965
    %1320 = vmatprep.subr.mxu0 %v970
    %1321 = vmatpush1.msra.mxu0 %v969
    %1322 = vmatprep.subr.mxu0 %v974
    %1323 = vmatpush1.msra.mxu0 %v973
    %1324 = vmatprep.subr.mxu0 %v978
    %1325 = vmatpush1.msra.mxu0 %v977
    %1326 = vmatprep.subr.mxu0 %v982
    %1327 = vmatpush1.msra.mxu0 %v981
    %1328 = vmatprep.subr.mxu0 %v986
    %1329 = vmatpush1.msra.mxu0 %v985
    %1330 = vmatprep.subr.mxu0 %v990
    %1331 = vmatpush1.msra.mxu0 %v989
    %1332 = vmatprep.subr.mxu0 %v994
    %1333 = vmatpush1.msra.mxu0 %v993
    %1334 = vmatprep.subr.mxu0 %v998
    %1335 = vmatpush1.msra.mxu0 %v997
    %1336 = vmatprep.subr.mxu0 %v1002
    %1337 = vmatpush1.msra.mxu0 %v1001
    %1338 = vmatprep.subr.mxu0 %v1006
    %1339 = vmatpush1.msra.mxu0 %v1005
    %1340 = vmatprep.subr.mxu0 %v1010
    %1341 = vmatpush1.msra.mxu0 %v1009
    %1342 = vmatprep.subr.mxu0 %v1014
    %1343 = vmatpush1.msra.mxu0 %v1013
    %1344 = vmatprep.subr.mxu0 %v1018
    %1345 = vmatpush1.msra.mxu0 %v1017
    %1346 = vmatprep.subr.mxu0 %v1022
    %1347 = vmatpush1.msra.mxu0 %v1021
    %1348 = vmatprep.subr.mxu0 %v1026
    %1349 = vmatpush1.msra.mxu0 %v1025
    %1350 = vmatprep.subr.mxu0 %v1030
    %1351 = vmatpush1.msra.mxu0 %v1029
    %1352 = vmatprep.subr.mxu0 %v1034
    %1353 = vmatpush1.msra.mxu0 %v1033
    %1354 = vmatprep.subr.mxu0 %v1038
    %1355 = vmatpush1.msra.mxu0 %v1037
    %1356 = vmatprep.subr.mxu0 %v1042
    %1357 = vmatpush1.msra.mxu0 %v1041
    %1358 = vmatprep.subr.mxu0 %v1046
    %1359 = vmatpush1.msra.mxu0 %v1045
    %1360 = vmatprep.subr.mxu0 %v1050
    %1361 = vmatpush1.msra.mxu0 %v1049
    %1362 = vmatprep.subr.mxu0 %v1054
    %1363 = vmatpush1.msra.mxu0 %v1053
    %1364 = vmatprep.mubr.f32.mxu0 %v855
    %1365 = vmatmul.mubr.f32.gmra.mrb[0].mxu0 %v1277
    %v1366 = vpop.f32.mrb[0].mxu0
    %v1367 = vadd.f32 %v1283, %v1366
    %v1368 = vpop.f32.mrb[0].mxu0
    %v1369 = vadd.f32 %v1287, %v1368
    %1370 = vmatprep.mubr.f32.mxu0 %v856
    %1371 = vmatmul.mubr.f32.gmra.mrb[0].mxu0 %v1278
    %v1372 = vpop.f32.mrb[0].mxu0
    %v1373 = vadd.f32 %v1283, %v1372
    %v1374 = vpop.f32.mrb[0].mxu0
    %v1375 = vadd.f32 %v1287, %v1374
    %1376 = vdwg.mxu0
    %1377 = vmatprep.subr.mxu0 %v932
    %1378 = vmatpush1.msra.mxu0 %v931
    %1379 = vmatprep.subr.mxu0 %v936
    %1380 = vmatpush1.msra.mxu0 %v935
    %1381 = vmatprep.subr.mxu0 %v940
    %1382 = vmatpush1.msra.mxu0 %v939
    %1383 = vmatprep.subr.mxu0 %v944
    %1384 = vmatpush1.msra.mxu0 %v943
    %1385 = vmatprep.subr.mxu0 %v948
    %1386 = vmatpush1.msra.mxu0 %v947
    %1387 = vmatprep.subr.mxu0 %v952
    %1388 = vmatpush1.msra.mxu0 %v951
    %1389 = vmatprep.subr.mxu0 %v956
    %1390 = vmatpush1.msra.mxu0 %v955
    %1391 = vmatprep.subr.mxu0 %v960
    %1392 = vmatpush1.msra.mxu0 %v959
    %1393 = vmatprep.subr.mxu0 %v964
    %1394 = vmatpush1.msra.mxu0 %v963
    %1395 = vmatprep.subr.mxu0 %v968
    %1396 = vmatpush1.msra.mxu0 %v967
    %1397 = vmatprep.subr.mxu0 %v972
    %1398 = vmatpush1.msra.mxu0 %v971
    %1399 = vmatprep.subr.mxu0 %v976
    %1400 = vmatpush1.msra.mxu0 %v975
    %1401 = vmatprep.subr.mxu0 %v980
    %1402 = vmatpush1.msra.mxu0 %v979
    %1403 = vmatprep.subr.mxu0 %v984
    %1404 = vmatpush1.msra.mxu0 %v983
    %1405 = vmatprep.subr.mxu0 %v988
    %1406 = vmatpush1.msra.mxu0 %v987
    %1407 = vmatprep.subr.mxu0 %v992
    %1408 = vmatpush1.msra.mxu0 %v991
    %1409 = vmatprep.subr.mxu0 %v996
    %1410 = vmatpush1.msra.mxu0 %v995
    %1411 = vmatprep.subr.mxu0 %v1000
    %1412 = vmatpush1.msra.mxu0 %v999
    %1413 = vmatprep.subr.mxu0 %v1004
    %1414 = vmatpush1.msra.mxu0 %v1003
    %1415 = vmatprep.subr.mxu0 %v1008
    %1416 = vmatpush1.msra.mxu0 %v1007
    %1417 = vmatprep.subr.mxu0 %v1012
    %1418 = vmatpush1.msra.mxu0 %v1011
    %1419 = vmatprep.subr.mxu0 %v1016
    %1420 = vmatpush1.msra.mxu0 %v1015
    %1421 = vmatprep.subr.mxu0 %v1020
    %1422 = vmatpush1.msra.mxu0 %v1019
    %1423 = vmatprep.subr.mxu0 %v1024
    %1424 = vmatpush1.msra.mxu0 %v1023
    %1425 = vmatprep.subr.mxu0 %v1028
    %1426 = vmatpush1.msra.mxu0 %v1027
    %1427 = vmatprep.subr.mxu0 %v1032
    %1428 = vmatpush1.msra.mxu0 %v1031
    %1429 = vmatprep.subr.mxu0 %v1036
    %1430 = vmatpush1.msra.mxu0 %v1035
    %1431 = vmatprep.subr.mxu0 %v1040
    %1432 = vmatpush1.msra.mxu0 %v1039
    %1433 = vmatprep.subr.mxu0 %v1044
    %1434 = vmatpush1.msra.mxu0 %v1043
    %1435 = vmatprep.subr.mxu0 %v1048
    %1436 = vmatpush1.msra.mxu0 %v1047
    %1437 = vmatprep.subr.mxu0 %v1052
    %1438 = vmatpush1.msra.mxu0 %v1051
    %1439 = vmatprep.subr.mxu0 %v1056
    %1440 = vmatpush1.msra.mxu0 %v1055
    %1441 = vmatprep.mubr.f32.mxu0 %v855
    %1442 = vmatmul.mubr.f32.gmra.mrb[0].mxu0 %v1277
    %v1443 = vpop.f32.mrb[0].mxu0
    %v1444 = vadd.f32 %v1291, %v1443
    %v1445 = vpop.f32.mrb[0].mxu0
    %v1446 = vadd.f32 %v1295, %v1445
    %1447 = vmatprep.mubr.f32.mxu0 %v856
    %1448 = vmatmul.mubr.f32.gmra.mrb[0].mxu0 %v1278
    %v1449 = vpop.f32.mrb[0].mxu0
    %v1450 = vadd.f32 %v1291, %v1449
    %v1451 = vpop.f32.mrb[0].mxu0
    %v1452 = vadd.f32 %v1295, %v1451
    %1453 = vdwg.mxu0
    %v1454 = vxor.u32 %v1367, 2147483648
    %v1455 = vxor.u32 %v1369, 2147483648
    %v1456 = vxor.u32 %v1444, 2147483648
    %v1457 = vxor.u32 %v1373, 2147483648
    %v1458 = vxor.u32 %v1375, 2147483648
    %v1459 = vxor.u32 %v1450, 2147483648
    %v1460 = vmul.f32 %v1454, 1.442695
    %v1461 = vpow.pop %v1460
    %v1462 = vmul.f32 %v1455, 1.442695
    %v1463 = vpow.pop %v1462
    %v1464 = vmul.f32 %v1456, 1.442695
    %v1465 = vpow.pop %v1464
    %v1466 = vmul.f32 %v1457, 1.442695
    %v1467 = vpow.pop %v1466
    %v1468 = vmul.f32 %v1458, 1.442695
    %v1469 = vpow.pop %v1468
    %v1470 = vmul.f32 %v1459, 1.442695
    %v1471 = vpow.pop %v1470
    %v1472 = vadd.f32 %v1461, 1.0
    %v1473 = vadd.f32 %v1463, 1.0
    %v1474 = vadd.f32 %v1465, 1.0
    %v1475 = vadd.f32 %v1467, 1.0
    %v1476 = vadd.f32 %v1469, 1.0
    %v1477 = vadd.f32 %v1471, 1.0
    %v1478 = vrcp.pop %v1472
    %v1479 = vmul.f32 1.0, %v1478
    %v1480 = vrcp.pop %v1473
    %v1481 = vmul.f32 1.0, %v1480
    %v1482 = vrcp.pop %v1474
    %v1483 = vmul.f32 1.0, %v1482
    %v1484 = vrcp.pop %v1475
    %v1485 = vmul.f32 1.0, %v1484
    %v1486 = vrcp.pop %v1476
    %v1487 = vmul.f32 1.0, %v1486
    %v1488 = vrcp.pop %v1477
    %v1489 = vmul.f32 1.0, %v1488
    %v1490 = vtanh.pop %v1446
    %v1491 = vtanh.pop %v1452
    %v1492 = vmul.f32 %v1481, %v855
    %v1493 = vmul.f32 %v1487, %v856
    %v1494 = vmul.f32 %v1479, %v1490
    %v1495 = vmul.f32 %v1485, %v1491
    %v1496 = vadd.f32 %v1492, %v1494
    %v1497 = vadd.f32 %v1493, %v1495
    %v1498 = vtanh.pop %v1496
    %v1499 = vtanh.pop %v1497
    %v1500 = vmul.f32 %v1483, %v1498
    %v1501 = vmul.f32 %v1489, %v1499
    %vm1502 = vcmp.eq.s32.totalorder %v861, 1
    %vm1503 = vcmp.eq.s32.totalorder %v864, 1
    %v1504 = vsel %vm1502, %v1500, 0.0
    %v1505 = vsel %vm1503, %v1501, 0.0
    %s1506 = smul.u32 2, 4
    %s1507 = smul.addr %s1506, 8
    %s1508 = scalar_lea.vmem [#allocation2], %s1507
    %v1509 = vld [vmem:[%s1508] sm:$0xff]
    %v1510 = vld [vmem:[%s1508 + $0x8] sm:$0xff]
    %v1511 = vld [vmem:[%s1508 + $0x10] sm:$0xff]
    %v1512 = vld [vmem:[%s1508 + $0x18] sm:$0xff]
    %v1513 = vld [vmem:[%s1508 + $0x20] sm:$0xff]
    %v1514 = vld [vmem:[%s1508 + $0x28] sm:$0xff]
    %v1515 = vld [vmem:[%s1508 + $0x30] sm:$0xff]
    %v1516 = vld [vmem:[%s1508 + $0x38] sm:$0xff]
    %1517 = vmatprep.subr.mxu0 %v866
    %1518 = vmatpush1.msra.mxu0 %v865
    %1519 = vmatprep.subr.mxu0 %v870
    %1520 = vmatpush1.msra.mxu0 %v869
    %1521 = vmatprep.subr.mxu0 %v874
    %1522 = vmatpush1.msra.mxu0 %v873
    %1523 = vmatprep.subr.mxu0 %v878
    %1524 = vmatpush1.msra.mxu0 %v877
    %1525 = vmatprep.subr.mxu0 %v882
    %1526 = vmatpush1.msra.mxu0 %v881
    %1527 = vmatprep.subr.mxu0 %v886
    %1528 = vmatpush1.msra.mxu0 %v885
    %1529 = vmatprep.subr.mxu0 %v890
    %1530 = vmatpush1.msra.mxu0 %v889
    %1531 = vmatprep.subr.mxu0 %v894
    %1532 = vmatpush1.msra.mxu0 %v893
    %1533 = vmatprep.subr.mxu0 %v898
    %1534 = vmatpush1.msra.mxu0 %v897
    %1535 = vmatprep.subr.mxu0 %v902
    %1536 = vmatpush1.msra.mxu0 %v901
    %1537 = vmatprep.subr.mxu0 %v906
    %1538 = vmatpush1.msra.mxu0 %v905
    %1539 = vmatprep.subr.mxu0 %v910
    %1540 = vmatpush1.msra.mxu0 %v909
    %1541 = vmatprep.subr.mxu0 %v914
    %1542 = vmatpush1.msra.mxu0 %v913
    %1543 = vmatprep.subr.mxu0 %v918
    %1544 = vmatpush1.msra.mxu0 %v917
    %1545 = vmatprep.subr.mxu0 %v922
    %1546 = vmatpush1.msra.mxu0 %v921
    %1547 = vmatprep.subr.mxu0 %v926
    %1548 = vmatpush1.msra.mxu0 %v925
    %1549 = vmatprep.subr.mxu0 0.0
    %1550 = vmatpush1.msra.mxu0 0.0
    %1551 = vmatprep.subr.mxu0 0.0
    %1552 = vmatpush1.msra.mxu0 0.0
    %1553 = vmatprep.subr.mxu0 0.0
    %1554 = vmatpush1.msra.mxu0 0.0
    %1555 = vmatprep.subr.mxu0 0.0
    %1556 = vmatpush1.msra.mxu0 0.0
    %1557 = vmatprep.subr.mxu0 0.0
    %1558 = vmatpush1.msra.mxu0 0.0
    %1559 = vmatprep.subr.mxu0 0.0
    %1560 = vmatpush1.msra.mxu0 0.0
    %1561 = vmatprep.subr.mxu0 0.0
    %1562 = vmatpush1.msra.mxu0 0.0
    %1563 = vmatprep.subr.mxu0 0.0
    %1564 = vmatpush1.msra.mxu0 0.0
    %1565 = vmatprep.subr.mxu0 0.0
    %1566 = vmatpush1.msra.mxu0 0.0
    %1567 = vmatprep.subr.mxu0 0.0
    %1568 = vmatpush1.msra.mxu0 0.0
    %1569 = vmatprep.subr.mxu0 0.0
    %1570 = vmatpush1.msra.mxu0 0.0
    %1571 = vmatprep.subr.mxu0 0.0
    %1572 = vmatpush1.msra.mxu0 0.0
    %1573 = vmatprep.subr.mxu0 0.0
    %1574 = vmatpush1.msra.mxu0 0.0
    %1575 = vmatprep.subr.mxu0 0.0
    %1576 = vmatpush1.msra.mxu0 0.0
    %1577 = vmatprep.subr.mxu0 0.0
    %1578 = vmatpush1.msra.mxu0 0.0
    %1579 = vmatprep.subr.mxu0 0.0
    %1580 = vmatpush1.msra.mxu0 0.0
    %1581 = vmatprep.mubr.f32.mxu0 0.0
    %1582 = vmatmul.mubr.f32.gmra.mrb[0].mxu0 %v1277
    %v1583 = vpop.f32.mrb[0].mxu0
    %v1584 = vadd.f32 0.0, %v1583
    %v1585 = vpop.f32.mrb[0].mxu0
    %v1586 = vadd.f32 0.0, %v1585
    %1587 = vmatprep.mubr.f32.mxu0 0.0
    %1588 = vmatmul.mubr.f32.gmra.mrb[0].mxu0 %v1278
    %v1589 = vpop.f32.mrb[0].mxu0
    %v1590 = vadd.f32 0.0, %v1589
    %v1591 = vpop.f32.mrb[0].mxu0
    %v1592 = vadd.f32 0.0, %v1591
    %1593 = vdwg.mxu0
    %1594 = vmatprep.subr.mxu0 %v868
    %1595 = vmatpush1.msra.mxu0 %v867
    %1596 = vmatprep.subr.mxu0 %v872
    %1597 = vmatpush1.msra.mxu0 %v871
    %1598 = vmatprep.subr.mxu0 %v876
    %1599 = vmatpush1.msra.mxu0 %v875
    %1600 = vmatprep.subr.mxu0 %v880
    %1601 = vmatpush1.msra.mxu0 %v879
    %1602 = vmatprep.subr.mxu0 %v884
    %1603 = vmatpush1.msra.mxu0 %v883
    %1604 = vmatprep.subr.mxu0 %v888
    %1605 = vmatpush1.msra.mxu0 %v887
    %1606 = vmatprep.subr.mxu0 %v892
    %1607 = vmatpush1.msra.mxu0 %v891
    %1608 = vmatprep.subr.mxu0 %v896
    %1609 = vmatpush1.msra.mxu0 %v895
    %1610 = vmatprep.subr.mxu0 %v900
    %1611 = vmatpush1.msra.mxu0 %v899
    %1612 = vmatprep.subr.mxu0 %v904
    %1613 = vmatpush1.msra.mxu0 %v903
    %1614 = vmatprep.subr.mxu0 %v908
    %1615 = vmatpush1.msra.mxu0 %v907
    %1616 = vmatprep.subr.mxu0 %v912
    %1617 = vmatpush1.msra.mxu0 %v911
    %1618 = vmatprep.subr.mxu0 %v916
    %1619 = vmatpush1.msra.mxu0 %v915
    %1620 = vmatprep.subr.mxu0 %v920
    %1621 = vmatpush1.msra.mxu0 %v919
    %1622 = vmatprep.subr.mxu0 %v924
    %1623 = vmatpush1.msra.mxu0 %v923
    %1624 = vmatprep.subr.mxu0 %v928
    %1625 = vmatpush1.msra.mxu0 %v927
    %1626 = vmatprep.subr.mxu0 0.0
    %1627 = vmatpush1.msra.mxu0 0.0
    %1628 = vmatprep.subr.mxu0 0.0
    %1629 = vmatpush1.msra.mxu0 0.0
    %1630 = vmatprep.subr.mxu0 0.0
    %1631 = vmatpush1.msra.mxu0 0.0
    %1632 = vmatprep.subr.mxu0 0.0
    %1633 = vmatpush1.msra.mxu0 0.0
    %1634 = vmatprep.subr.mxu0 0.0
    %1635 = vmatpush1.msra.mxu0 0.0
    %1636 = vmatprep.subr.mxu0 0.0
    %1637 = vmatpush1.msra.mxu0 0.0
    %1638 = vmatprep.subr.mxu0 0.0
    %1639 = vmatpush1.msra.mxu0 0.0
    %1640 = vmatprep.subr.mxu0 0.0
    %1641 = vmatpush1.msra.mxu0 0.0
    %1642 = vmatprep.subr.mxu0 0.0
    %1643 = vmatpush1.msra.mxu0 0.0
    %1644 = vmatprep.subr.mxu0 0.0
    %1645 = vmatpush1.msra.mxu0 0.0
    %1646 = vmatprep.subr.mxu0 0.0
    %1647 = vmatpush1.msra.mxu0 0.0
    %1648 = vmatprep.subr.mxu0 0.0
    %1649 = vmatpush1.msra.mxu0 0.0
    %1650 = vmatprep.subr.mxu0 0.0
    %1651 = vmatpush1.msra.mxu0 0.0
    %1652 = vmatprep.subr.mxu0 0.0
    %1653 = vmatpush1.msra.mxu0 0.0
    %1654 = vmatprep.subr.mxu0 0.0
    %1655 = vmatpush1.msra.mxu0 0.0
    %1656 = vmatprep.subr.mxu0 0.0
    %1657 = vmatpush1.msra.mxu0 0.0
    %1658 = vmatprep.mubr.f32.mxu0 0.0
    %1659 = vmatmul.mubr.f32.gmra.mrb[0].mxu0 %v1277
    %v1660 = vpop.f32.mrb[0].mxu0
    %v1661 = vadd.f32 0.0, %v1660
    %v1662 = vpop.f32.mrb[0].mxu0
    %v1663 = vadd.f32 0.0, %v1662
    %1664 = vmatprep.mubr.f32.mxu0 0.0
    %1665 = vmatmul.mubr.f32.gmra.mrb[0].mxu0 %v1278
    %v1666 = vpop.f32.mrb[0].mxu0
    %v1667 = vadd.f32 0.0, %v1666
    %v1668 = vpop.f32.mrb[0].mxu0
    %v1669 = vadd.f32 0.0, %v1668
    %1670 = vdwg.mxu0
    %v1671 = vadd.f32 %v1509, %v1584
    %v1672 = vadd.f32 %v1510, %v1586
    %v1673 = vadd.f32 %v1511, %v1661
    %v1674 = vadd.f32 %v1512, %v1663
    %v1675 = vadd.f32 %v1513, %v1590
    %v1676 = vadd.f32 %v1514, %v1592
    %v1677 = vadd.f32 %v1515, %v1667
    %v1678 = vadd.f32 %v1516, %v1669
    %v1679 = vxor.u32 %v1671, 2147483648
    %v1680 = vxor.u32 %v1672, 2147483648
    %v1681 = vxor.u32 %v1673, 2147483648
    %v1682 = vxor.u32 %v1675, 2147483648
    %v1683 = vxor.u32 %v1676, 2147483648
    %v1684 = vxor.u32 %v1677, 2147483648
    %v1685 = vmul.f32 %v1679, 1.442695
    %v1686 = vpow.pop %v1685
    %v1687 = vmul.f32 %v1680, 1.442695
    %v1688 = vpow.pop %v1687
    %v1689 = vmul.f32 %v1681, 1.442695
    %v1690 = vpow.pop %v1689
    %v1691 = vmul.f32 %v1682, 1.442695
    %v1692 = vpow.pop %v1691
    %v1693 = vmul.f32 %v1683, 1.442695
    %v1694 = vpow.pop %v1693
    %v1695 = vmul.f32 %v1684, 1.442695
    %v1696 = vpow.pop %v1695
    %v1697 = vadd.f32 %v1686, 1.0
    %v1698 = vadd.f32 %v1688, 1.0
    %v1699 = vadd.f32 %v1690, 1.0
    %v1700 = vadd.f32 %v1692, 1.0
    %v1701 = vadd.f32 %v1694, 1.0
    %v1702 = vadd.f32 %v1696, 1.0
    %v1703 = vrcp.pop %v1697
    %v1704 = vmul.f32 1.0, %v1703
    %v1705 = vrcp.pop %v1698
    %v1706 = vmul.f32 1.0, %v1705
    %v1707 = vrcp.pop %v1699
    %v1708 = vmul.f32 1.0, %v1707
    %v1709 = vrcp.pop %v1700
    %v1710 = vmul.f32 1.0, %v1709
    %v1711 = vrcp.pop %v1701
    %v1712 = vmul.f32 1.0, %v1711
    %v1713 = vrcp.pop %v1702
    %v1714 = vmul.f32 1.0, %v1713
    %v1715 = vtanh.pop %v1674
    %v1716 = vtanh.pop %v1678
    %v1717 = vmul.f32 %v1706, %v1273
    %v1718 = vmul.f32 %v1712, %v1274
    %v1719 = vmul.f32 %v1704, %v1715
    %v1720 = vmul.f32 %v1710, %v1716
    %v1721 = vadd.f32 %v1717, %v1719
    %v1722 = vadd.f32 %v1718, %v1720
    %v1723 = vtanh.pop %v1721
    %v1724 = vtanh.pop %v1722
    %v1725 = vmul.f32 %v1708, %v1723
    %v1726 = vmul.f32 %v1714, %v1724
    %1727 = vmatprep.subr.mxu0 %v930
    %1728 = vmatpush1.msra.mxu0 %v929
    %1729 = vmatprep.subr.mxu0 %v934
    %1730 = vmatpush1.msra.mxu0 %v933
    %1731 = vmatprep.subr.mxu0 %v938
    %1732 = vmatpush1.msra.mxu0 %v937
    %1733 = vmatprep.subr.mxu0 %v942
    %1734 = vmatpush1.msra.mxu0 %v941
    %1735 = vmatprep.subr.mxu0 %v946
    %1736 = vmatpush1.msra.mxu0 %v945
    %1737 = vmatprep.subr.mxu0 %v950
    %1738 = vmatpush1.msra.mxu0 %v949
    %1739 = vmatprep.subr.mxu0 %v954
    %1740 = vmatpush1.msra.mxu0 %v953
    %1741 = vmatprep.subr.mxu0 %v958
    %1742 = vmatpush1.msra.mxu0 %v957
    %1743 = vmatprep.subr.mxu0 %v962
    %1744 = vmatpush1.msra.mxu0 %v961
    %1745 = vmatprep.subr.mxu0 %v966
    %1746 = vmatpush1.msra.mxu0 %v965
    %1747 = vmatprep.subr.mxu0 %v970
    %1748 = vmatpush1.msra.mxu0 %v969
    %1749 = vmatprep.subr.mxu0 %v974
    %1750 = vmatpush1.msra.mxu0 %v973
    %1751 = vmatprep.subr.mxu0 %v978
    %1752 = vmatpush1.msra.mxu0 %v977
    %1753 = vmatprep.subr.mxu0 %v982
    %1754 = vmatpush1.msra.mxu0 %v981
    %1755 = vmatprep.subr.mxu0 %v986
    %1756 = vmatpush1.msra.mxu0 %v985
    %1757 = vmatprep.subr.mxu0 %v990
    %1758 = vmatpush1.msra.mxu0 %v989
    %1759 = vmatprep.subr.mxu0 %v994
    %1760 = vmatpush1.msra.mxu0 %v993
    %1761 = vmatprep.subr.mxu0 %v998
    %1762 = vmatpush1.msra.mxu0 %v997
    %1763 = vmatprep.subr.mxu0 %v1002
    %1764 = vmatpush1.msra.mxu0 %v1001
    %1765 = vmatprep.subr.mxu0 %v1006
    %1766 = vmatpush1.msra.mxu0 %v1005
    %1767 = vmatprep.subr.mxu0 %v1010
    %1768 = vmatpush1.msra.mxu0 %v1009
    %1769 = vmatprep.subr.mxu0 %v1014
    %1770 = vmatpush1.msra.mxu0 %v1013
    %1771 = vmatprep.subr.mxu0 %v1018
    %1772 = vmatpush1.msra.mxu0 %v1017
    %1773 = vmatprep.subr.mxu0 %v1022
    %1774 = vmatpush1.msra.mxu0 %v1021
    %1775 = vmatprep.subr.mxu0 %v1026
    %1776 = vmatpush1.msra.mxu0 %v1025
    %1777 = vmatprep.subr.mxu0 %v1030
    %1778 = vmatpush1.msra.mxu0 %v1029
    %1779 = vmatprep.subr.mxu0 %v1034
    %1780 = vmatpush1.msra.mxu0 %v1033
    %1781 = vmatprep.subr.mxu0 %v1038
    %1782 = vmatpush1.msra.mxu0 %v1037
    %1783 = vmatprep.subr.mxu0 %v1042
    %1784 = vmatpush1.msra.mxu0 %v1041
    %1785 = vmatprep.subr.mxu0 %v1046
    %1786 = vmatpush1.msra.mxu0 %v1045
    %1787 = vmatprep.subr.mxu0 %v1050
    %1788 = vmatpush1.msra.mxu0 %v1049
    %1789 = vmatprep.subr.mxu0 %v1054
    %1790 = vmatpush1.msra.mxu0 %v1053
    %1791 = vmatprep.mubr.f32.mxu0 %v1500
    %1792 = vmatmul.mubr.f32.gmra.mrb[0].mxu0 %v1725
    %v1793 = vpop.f32.mrb[0].mxu0
    %v1794 = vadd.f32 %v1283, %v1793
    %v1795 = vpop.f32.mrb[0].mxu0
    %v1796 = vadd.f32 %v1287, %v1795
    %1797 = vmatprep.mubr.f32.mxu0 %v1501
    %1798 = vmatmul.mubr.f32.gmra.mrb[0].mxu0 %v1726
    %v1799 = vpop.f32.mrb[0].mxu0
    %v1800 = vadd.f32 %v1283, %v1799
    %v1801 = vpop.f32.mrb[0].mxu0
    %v1802 = vadd.f32 %v1287, %v1801
    %1803 = vdwg.mxu0
    %1804 = vmatprep.subr.mxu0 %v932
    %1805 = vmatpush1.msra.mxu0 %v931
    %1806 = vmatprep.subr.mxu0 %v936
    %1807 = vmatpush1.msra.mxu0 %v935
    %1808 = vmatprep.subr.mxu0 %v940
    %1809 = vmatpush1.msra.mxu0 %v939
    %1810 = vmatprep.subr.mxu0 %v944
    %1811 = vmatpush1.msra.mxu0 %v943
    %1812 = vmatprep.subr.mxu0 %v948
    %1813 = vmatpush1.msra.mxu0 %v947
    %1814 = vmatprep.subr.mxu0 %v952
    %1815 = vmatpush1.msra.mxu0 %v951
    %1816 = vmatprep.subr.mxu0 %v956
    %1817 = vmatpush1.msra.mxu0 %v955
    %1818 = vmatprep.subr.mxu0 %v960
    %1819 = vmatpush1.msra.mxu0 %v959
    %1820 = vmatprep.subr.mxu0 %v964
    %1821 = vmatpush1.msra.mxu0 %v963
    %1822 = vmatprep.subr.mxu0 %v968
    %1823 = vmatpush1.msra.mxu0 %v967
    %1824 = vmatprep.subr.mxu0 %v972
    %1825 = vmatpush1.msra.mxu0 %v971
    %1826 = vmatprep.subr.mxu0 %v976
    %1827 = vmatpush1.msra.mxu0 %v975
    %1828 = vmatprep.subr.mxu0 %v980
    %1829 = vmatpush1.msra.mxu0 %v979
    %1830 = vmatprep.subr.mxu0 %v984
    %1831 = vmatpush1.msra.mxu0 %v983
    %1832 = vmatprep.subr.mxu0 %v988
    %1833 = vmatpush1.msra.mxu0 %v987
    %1834 = vmatprep.subr.mxu0 %v992
    %1835 = vmatpush1.msra.mxu0 %v991
    %1836 = vmatprep.subr.mxu0 %v996
    %1837 = vmatpush1.msra.mxu0 %v995
    %1838 = vmatprep.subr.mxu0 %v1000
    %1839 = vmatpush1.msra.mxu0 %v999
    %1840 = vmatprep.subr.mxu0 %v1004
    %1841 = vmatpush1.msra.mxu0 %v1003
    %1842 = vmatprep.subr.mxu0 %v1008
    %1843 = vmatpush1.msra.mxu0 %v1007
    %1844 = vmatprep.subr.mxu0 %v1012
    %1845 = vmatpush1.msra.mxu0 %v1011
    %1846 = vmatprep.subr.mxu0 %v1016
    %1847 = vmatpush1.msra.mxu0 %v1015
    %1848 = vmatprep.subr.mxu0 %v1020
    %1849 = vmatpush1.msra.mxu0 %v1019
    %1850 = vmatprep.subr.mxu0 %v1024
    %1851 = vmatpush1.msra.mxu0 %v1023
    %1852 = vmatprep.subr.mxu0 %v1028
    %1853 = vmatpush1.msra.mxu0 %v1027
    %1854 = vmatprep.subr.mxu0 %v1032
    %1855 = vmatpush1.msra.mxu0 %v1031
    %1856 = vmatprep.subr.mxu0 %v1036
    %1857 = vmatpush1.msra.mxu0 %v1035
    %1858 = vmatprep.subr.mxu0 %v1040
    %1859 = vmatpush1.msra.mxu0 %v1039
    %1860 = vmatprep.subr.mxu0 %v1044
    %1861 = vmatpush1.msra.mxu0 %v1043
    %1862 = vmatprep.subr.mxu0 %v1048
    %1863 = vmatpush1.msra.mxu0 %v1047
    %1864 = vmatprep.subr.mxu0 %v1052
    %1865 = vmatpush1.msra.mxu0 %v1051
    %1866 = vmatprep.subr.mxu0 %v1056
    %1867 = vmatpush1.msra.mxu0 %v1055
    %1868 = vmatprep.mubr.f32.mxu0 %v1500
    %1869 = vmatmul.mubr.f32.gmra.mrb[0].mxu0 %v1725
    %v1870 = vpop.f32.mrb[0].mxu0
    %v1871 = vadd.f32 %v1291, %v1870
    %v1872 = vpop.f32.mrb[0].mxu0
    %v1873 = vadd.f32 %v1295, %v1872
    %1874 = vmatprep.mubr.f32.mxu0 %v1501
    %1875 = vmatmul.mubr.f32.gmra.mrb[0].mxu0 %v1726
    %v1876 = vpop.f32.mrb[0].mxu0
    %v1877 = vadd.f32 %v1291, %v1876
    %v1878 = vpop.f32.mrb[0].mxu0
    %v1879 = vadd.f32 %v1295, %v1878
    %1880 = vdwg.mxu0
    %v1881 = vxor.u32 %v1794, 2147483648
    %v1882 = vxor.u32 %v1796, 2147483648
    %v1883 = vxor.u32 %v1871, 2147483648
    %v1884 = vxor.u32 %v1800, 2147483648
    %v1885 = vxor.u32 %v1802, 2147483648
    %v1886 = vxor.u32 %v1877, 2147483648
    %v1887 = vmul.f32 %v1881, 1.442695
    %v1888 = vpow.pop %v1887
    %v1889 = vmul.f32 %v1882, 1.442695
    %v1890 = vpow.pop %v1889
    %v1891 = vmul.f32 %v1883, 1.442695
    %v1892 = vpow.pop %v1891
    %v1893 = vmul.f32 %v1884, 1.442695
    %v1894 = vpow.pop %v1893
    %v1895 = vmul.f32 %v1885, 1.442695
    %v1896 = vpow.pop %v1895
    %v1897 = vmul.f32 %v1886, 1.442695
    %v1898 = vpow.pop %v1897
    %v1899 = vadd.f32 %v1888, 1.0
    %v1900 = vadd.f32 %v1890, 1.0
    %v1901 = vadd.f32 %v1892, 1.0
    %v1902 = vadd.f32 %v1894, 1.0
    %v1903 = vadd.f32 %v1896, 1.0
    %v1904 = vadd.f32 %v1898, 1.0
    %v1905 = vrcp.pop %v1899
    %v1906 = vmul.f32 1.0, %v1905
    %v1907 = vrcp.pop %v1900
    %v1908 = vmul.f32 1.0, %v1907
    %v1909 = vrcp.pop %v1901
    %v1910 = vmul.f32 1.0, %v1909
    %v1911 = vrcp.pop %v1902
    %v1912 = vmul.f32 1.0, %v1911
    %v1913 = vrcp.pop %v1903
    %v1914 = vmul.f32 1.0, %v1913
    %v1915 = vrcp.pop %v1904
    %v1916 = vmul.f32 1.0, %v1915
    %v1917 = vtanh.pop %v1873
    %v1918 = vtanh.pop %v1879
    %v1919 = vmul.f32 %v1908, %v1496
    %v1920 = vmul.f32 %v1914, %v1497
    %v1921 = vmul.f32 %v1906, %v1917
    %v1922 = vmul.f32 %v1912, %v1918
    %v1923 = vadd.f32 %v1919, %v1921
    %v1924 = vadd.f32 %v1920, %v1922
    %v1925 = vtanh.pop %v1923
    %v1926 = vtanh.pop %v1924
    %v1927 = vmul.f32 %v1910, %v1925
    %v1928 = vmul.f32 %v1916, %v1926
    %vm1929 = vcmp.eq.s32.totalorder %v861, 2
    %vm1930 = vcmp.eq.s32.totalorder %v864, 2
    %v1931 = vsel %vm1929, %v1927, %v1504
    %v1932 = vsel %vm1930, %v1928, %v1505
    %s1933 = smul.u32 4, 4
    %s1934 = smul.addr %s1933, 8
    %s1935 = scalar_lea.vmem [#allocation2], %s1934
    %v1936 = vld [vmem:[%s1935] sm:$0xff]
    %v1937 = vld [vmem:[%s1935 + $0x8] sm:$0xff]
    %v1938 = vld [vmem:[%s1935 + $0x10] sm:$0xff]
    %v1939 = vld [vmem:[%s1935 + $0x18] sm:$0xff]
    %v1940 = vld [vmem:[%s1935 + $0x20] sm:$0xff]
    %v1941 = vld [vmem:[%s1935 + $0x28] sm:$0xff]
    %v1942 = vld [vmem:[%s1935 + $0x30] sm:$0xff]
    %v1943 = vld [vmem:[%s1935 + $0x38] sm:$0xff]
    %1944 = vmatprep.subr.mxu0 %v866
    %1945 = vmatpush1.msra.mxu0 %v865
    %1946 = vmatprep.subr.mxu0 %v870
    %1947 = vmatpush1.msra.mxu0 %v869
    %1948 = vmatprep.subr.mxu0 %v874
    %1949 = vmatpush1.msra.mxu0 %v873
    %1950 = vmatprep.subr.mxu0 %v878
    %1951 = vmatpush1.msra.mxu0 %v877
    %1952 = vmatprep.subr.mxu0 %v882
    %1953 = vmatpush1.msra.mxu0 %v881
    %1954 = vmatprep.subr.mxu0 %v886
    %1955 = vmatpush1.msra.mxu0 %v885
    %1956 = vmatprep.subr.mxu0 %v890
    %1957 = vmatpush1.msra.mxu0 %v889
    %1958 = vmatprep.subr.mxu0 %v894
    %1959 = vmatpush1.msra.mxu0 %v893
    %1960 = vmatprep.subr.mxu0 %v898
    %1961 = vmatpush1.msra.mxu0 %v897
    %1962 = vmatprep.subr.mxu0 %v902
    %1963 = vmatpush1.msra.mxu0 %v901
    %1964 = vmatprep.subr.mxu0 %v906
    %1965 = vmatpush1.msra.mxu0 %v905
    %1966 = vmatprep.subr.mxu0 %v910
    %1967 = vmatpush1.msra.mxu0 %v909
    %1968 = vmatprep.subr.mxu0 %v914
    %1969 = vmatpush1.msra.mxu0 %v913
    %1970 = vmatprep.subr.mxu0 %v918
    %1971 = vmatpush1.msra.mxu0 %v917
    %1972 = vmatprep.subr.mxu0 %v922
    %1973 = vmatpush1.msra.mxu0 %v921
    %1974 = vmatprep.subr.mxu0 %v926
    %1975 = vmatpush1.msra.mxu0 %v925
    %1976 = vmatprep.subr.mxu0 0.0
    %1977 = vmatpush1.msra.mxu0 0.0
    %1978 = vmatprep.subr.mxu0 0.0
    %1979 = vmatpush1.msra.mxu0 0.0
    %1980 = vmatprep.subr.mxu0 0.0
    %1981 = vmatpush1.msra.mxu0 0.0
    %1982 = vmatprep.subr.mxu0 0.0
    %1983 = vmatpush1.msra.mxu0 0.0
    %1984 = vmatprep.subr.mxu0 0.0
    %1985 = vmatpush1.msra.mxu0 0.0
    %1986 = vmatprep.subr.mxu0 0.0
    %1987 = vmatpush1.msra.mxu0 0.0
    %1988 = vmatprep.subr.mxu0 0.0
    %1989 = vmatpush1.msra.mxu0 0.0
    %1990 = vmatprep.subr.mxu0 0.0
    %1991 = vmatpush1.msra.mxu0 0.0
    %1992 = vmatprep.subr.mxu0 0.0
    %1993 = vmatpush1.msra.mxu0 0.0
    %1994 = vmatprep.subr.mxu0 0.0
    %1995 = vmatpush1.msra.mxu0 0.0
    %1996 = vmatprep.subr.mxu0 0.0
    %1997 = vmatpush1.msra.mxu0 0.0
    %1998 = vmatprep.subr.mxu0 0.0
    %1999 = vmatpush1.msra.mxu0 0.0
    %2000 = vmatprep.subr.mxu0 0.0
    %2001 = vmatpush1.msra.mxu0 0.0
    %2002 = vmatprep.subr.mxu0 0.0
    %2003 = vmatpush1.msra.mxu0 0.0
    %2004 = vmatprep.subr.mxu0 0.0
    %2005 = vmatpush1.msra.mxu0 0.0
    %2006 = vmatprep.subr.mxu0 0.0
    %2007 = vmatpush1.msra.mxu0 0.0
    %2008 = vmatprep.mubr.f32.mxu0 0.0
    %2009 = vmatmul.mubr.f32.gmra.mrb[0].mxu0 %v1725
    %v2010 = vpop.f32.mrb[0].mxu0
    %v2011 = vadd.f32 0.0, %v2010
    %v2012 = vpop.f32.mrb[0].mxu0
    %v2013 = vadd.f32 0.0, %v2012
    %2014 = vmatprep.mubr.f32.mxu0 0.0
    %2015 = vmatmul.mubr.f32.gmra.mrb[0].mxu0 %v1726
    %v2016 = vpop.f32.mrb[0].mxu0
    %v2017 = vadd.f32 0.0, %v2016
    %v2018 = vpop.f32.mrb[0].mxu0
    %v2019 = vadd.f32 0.0, %v2018
    %2020 = vdwg.mxu0
    %2021 = vmatprep.subr.mxu0 %v868
    %2022 = vmatpush1.msra.mxu0 %v867
    %2023 = vmatprep.subr.mxu0 %v872
    %2024 = vmatpush1.msra.mxu0 %v871
    %2025 = vmatprep.subr.mxu0 %v876
    %2026 = vmatpush1.msra.mxu0 %v875
    %2027 = vmatprep.subr.mxu0 %v880
    %2028 = vmatpush1.msra.mxu0 %v879
    %2029 = vmatprep.subr.mxu0 %v884
    %2030 = vmatpush1.msra.mxu0 %v883
    %2031 = vmatprep.subr.mxu0 %v888
    %2032 = vmatpush1.msra.mxu0 %v887
    %2033 = vmatprep.subr.mxu0 %v892
    %2034 = vmatpush1.msra.mxu0 %v891
    %2035 = vmatprep.subr.mxu0 %v896
    %2036 = vmatpush1.msra.mxu0 %v895
    %2037 = vmatprep.subr.mxu0 %v900
    %2038 = vmatpush1.msra.mxu0 %v899
    %2039 = vmatprep.subr.mxu0 %v904
    %2040 = vmatpush1.msra.mxu0 %v903
    %2041 = vmatprep.subr.mxu0 %v908
    %2042 = vmatpush1.msra.mxu0 %v907
    %2043 = vmatprep.subr.mxu0 %v912
    %2044 = vmatpush1.msra.mxu0 %v911
    %2045 = vmatprep.subr.mxu0 %v916
    %2046 = vmatpush1.msra.mxu0 %v915
    %2047 = vmatprep.subr.mxu0 %v920
    %2048 = vmatpush1.msra.mxu0 %v919
    %2049 = vmatprep.subr.mxu0 %v924
    %2050 = vmatpush1.msra.mxu0 %v923
    %2051 = vmatprep.subr.mxu0 %v928
    %2052 = vmatpush1.msra.mxu0 %v927
    %2053 = vmatprep.subr.mxu0 0.0
    %2054 = vmatpush1.msra.mxu0 0.0
    %2055 = vmatprep.subr.mxu0 0.0
    %2056 = vmatpush1.msra.mxu0 0.0
    %2057 = vmatprep.subr.mxu0 0.0
    %2058 = vmatpush1.msra.mxu0 0.0
    %2059 = vmatprep.subr.mxu0 0.0
    %2060 = vmatpush1.msra.mxu0 0.0
    %2061 = vmatprep.subr.mxu0 0.0
    %2062 = vmatpush1.msra.mxu0 0.0
    %2063 = vmatprep.subr.mxu0 0.0
    %2064 = vmatpush1.msra.mxu0 0.0
    %2065 = vmatprep.subr.mxu0 0.0
    %2066 = vmatpush1.msra.mxu0 0.0
    %2067 = vmatprep.subr.mxu0 0.0
    %2068 = vmatpush1.msra.mxu0 0.0
    %2069 = vmatprep.subr.mxu0 0.0
    %2070 = vmatpush1.msra.mxu0 0.0
    %2071 = vmatprep.subr.mxu0 0.0
    %2072 = vmatpush1.msra.mxu0 0.0
    %2073 = vmatprep.subr.mxu0 0.0
    %2074 = vmatpush1.msra.mxu0 0.0
    %2075 = vmatprep.subr.mxu0 0.0
    %2076 = vmatpush1.msra.mxu0 0.0
    %2077 = vmatprep.subr.mxu0 0.0
    %2078 = vmatpush1.msra.mxu0 0.0
    %2079 = vmatprep.subr.mxu0 0.0
    %2080 = vmatpush1.msra.mxu0 0.0
    %2081 = vmatprep.subr.mxu0 0.0
    %2082 = vmatpush1.msra.mxu0 0.0
    %2083 = vmatprep.subr.mxu0 0.0
    %2084 = vmatpush1.msra.mxu0 0.0
    %2085 = vmatprep.mubr.f32.mxu0 0.0
    %2086 = vmatmul.mubr.f32.gmra.mrb[0].mxu0 %v1725
    %v2087 = vpop.f32.mrb[0].mxu0
    %v2088 = vadd.f32 0.0, %v2087
    %v2089 = vpop.f32.mrb[0].mxu0
    %v2090 = vadd.f32 0.0, %v2089
    %2091 = vmatprep.mubr.f32.mxu0 0.0
    %2092 = vmatmul.mubr.f32.gmra.mrb[0].mxu0 %v1726
    %v2093 = vpop.f32.mrb[0].mxu0
    %v2094 = vadd.f32 0.0, %v2093
    %v2095 = vpop.f32.mrb[0].mxu0
    %v2096 = vadd.f32 0.0, %v2095
    %2097 = vdwg.mxu0
    %v2098 = vadd.f32 %v1936, %v2011
    %v2099 = vadd.f32 %v1937, %v2013
    %v2100 = vadd.f32 %v1938, %v2088
    %v2101 = vadd.f32 %v1939, %v2090
    %v2102 = vadd.f32 %v1940, %v2017
    %v2103 = vadd.f32 %v1941, %v2019
    %v2104 = vadd.f32 %v1942, %v2094
    %v2105 = vadd.f32 %v1943, %v2096
    %v2106 = vxor.u32 %v2098, 2147483648
    %v2107 = vxor.u32 %v2099, 2147483648
    %v2108 = vxor.u32 %v2100, 2147483648
    %v2109 = vxor.u32 %v2102, 2147483648
    %v2110 = vxor.u32 %v2103, 2147483648
    %v2111 = vxor.u32 %v2104, 2147483648
    %v2112 = vmul.f32 %v2106, 1.442695
    %v2113 = vpow.pop %v2112
    %v2114 = vmul.f32 %v2107, 1.442695
    %v2115 = vpow.pop %v2114
    %v2116 = vmul.f32 %v2108, 1.442695
    %v2117 = vpow.pop %v2116
    %v2118 = vmul.f32 %v2109, 1.442695
    %v2119 = vpow.pop %v2118
    %v2120 = vmul.f32 %v2110, 1.442695
    %v2121 = vpow.pop %v2120
    %v2122 = vmul.f32 %v2111, 1.442695
    %v2123 = vpow.pop %v2122
    %v2124 = vadd.f32 %v2113, 1.0
    %v2125 = vadd.f32 %v2115, 1.0
    %v2126 = vadd.f32 %v2117, 1.0
    %v2127 = vadd.f32 %v2119, 1.0
    %v2128 = vadd.f32 %v2121, 1.0
    %v2129 = vadd.f32 %v2123, 1.0
    %v2130 = vrcp.pop %v2124
    %v2131 = vmul.f32 1.0, %v2130
    %v2132 = vrcp.pop %v2125
    %v2133 = vmul.f32 1.0, %v2132
    %v2134 = vrcp.pop %v2126
    %v2135 = vmul.f32 1.0, %v2134
    %v2136 = vrcp.pop %v2127
    %v2137 = vmul.f32 1.0, %v2136
    %v2138 = vrcp.pop %v2128
    %v2139 = vmul.f32 1.0, %v2138
    %v2140 = vrcp.pop %v2129
    %v2141 = vmul.f32 1.0, %v2140
    %v2142 = vtanh.pop %v2101
    %v2143 = vtanh.pop %v2105
    %v2144 = vmul.f32 %v2133, %v1721
    %v2145 = vmul.f32 %v2139, %v1722
    %v2146 = vmul.f32 %v2131, %v2142
    %v2147 = vmul.f32 %v2137, %v2143
    %v2148 = vadd.f32 %v2144, %v2146
    %v2149 = vadd.f32 %v2145, %v2147
    %v2150 = vtanh.pop %v2148
    %v2151 = vtanh.pop %v2149
    %v2152 = vmul.f32 %v2135, %v2150
    %v2153 = vmul.f32 %v2141, %v2151
    %2154 = vmatprep.subr.mxu0 %v930
    %2155 = vmatpush1.msra.mxu0 %v929
    %2156 = vmatprep.subr.mxu0 %v934
    %2157 = vmatpush1.msra.mxu0 %v933
    %2158 = vmatprep.subr.mxu0 %v938
    %2159 = vmatpush1.msra.mxu0 %v937
    %2160 = vmatprep.subr.mxu0 %v942
    %2161 = vmatpush1.msra.mxu0 %v941
    %2162 = vmatprep.subr.mxu0 %v946
    %2163 = vmatpush1.msra.mxu0 %v945
    %2164 = vmatprep.subr.mxu0 %v950
    %2165 = vmatpush1.msra.mxu0 %v949
    %2166 = vmatprep.subr.mxu0 %v954
    %2167 = vmatpush1.msra.mxu0 %v953
    %2168 = vmatprep.subr.mxu0 %v958
    %2169 = vmatpush1.msra.mxu0 %v957
    %2170 = vmatprep.subr.mxu0 %v962
    %2171 = vmatpush1.msra.mxu0 %v961
    %2172 = vmatprep.subr.mxu0 %v966
    %2173 = vmatpush1.msra.mxu0 %v965
    %2174 = vmatprep.subr.mxu0 %v970
    %2175 = vmatpush1.msra.mxu0 %v969
    %2176 = vmatprep.subr.mxu0 %v974
    %2177 = vmatpush1.msra.mxu0 %v973
    %2178 = vmatprep.subr.mxu0 %v978
    %2179 = vmatpush1.msra.mxu0 %v977
    %2180 = vmatprep.subr.mxu0 %v982
    %2181 = vmatpush1.msra.mxu0 %v981
    %2182 = vmatprep.subr.mxu0 %v986
    %2183 = vmatpush1.msra.mxu0 %v985
    %2184 = vmatprep.subr.mxu0 %v990
    %2185 = vmatpush1.msra.mxu0 %v989
    %2186 = vmatprep.subr.mxu0 %v994
    %2187 = vmatpush1.msra.mxu0 %v993
    %2188 = vmatprep.subr.mxu0 %v998
    %2189 = vmatpush1.msra.mxu0 %v997
    %2190 = vmatprep.subr.mxu0 %v1002
    %2191 = vmatpush1.msra.mxu0 %v1001
    %2192 = vmatprep.subr.mxu0 %v1006
    %2193 = vmatpush1.msra.mxu0 %v1005
    %2194 = vmatprep.subr.mxu0 %v1010
    %2195 = vmatpush1.msra.mxu0 %v1009
    %2196 = vmatprep.subr.mxu0 %v1014
    %2197 = vmatpush1.msra.mxu0 %v1013
    %2198 = vmatprep.subr.mxu0 %v1018
    %2199 = vmatpush1.msra.mxu0 %v1017
    %2200 = vmatprep.subr.mxu0 %v1022
    %2201 = vmatpush1.msra.mxu0 %v1021
    %2202 = vmatprep.subr.mxu0 %v1026
    %2203 = vmatpush1.msra.mxu0 %v1025
    %2204 = vmatprep.subr.mxu0 %v1030
    %2205 = vmatpush1.msra.mxu0 %v1029
    %2206 = vmatprep.subr.mxu0 %v1034
    %2207 = vmatpush1.msra.mxu0 %v1033
    %2208 = vmatprep.subr.mxu0 %v1038
    %2209 = vmatpush1.msra.mxu0 %v1037
    %2210 = vmatprep.subr.mxu0 %v1042
    %2211 = vmatpush1.msra.mxu0 %v1041
    %2212 = vmatprep.subr.mxu0 %v1046
    %2213 = vmatpush1.msra.mxu0 %v1045
    %2214 = vmatprep.subr.mxu0 %v1050
    %2215 = vmatpush1.msra.mxu0 %v1049
    %2216 = vmatprep.subr.mxu0 %v1054
    %2217 = vmatpush1.msra.mxu0 %v1053
    %2218 = vmatprep.mubr.f32.mxu0 %v1927
    %2219 = vmatmul.mubr.f32.gmra.mrb[0].mxu0 %v2152
    %v2220 = vpop.f32.mrb[0].mxu0
    %v2221 = vadd.f32 %v1283, %v2220
    %v2222 = vpop.f32.mrb[0].mxu0
    %v2223 = vadd.f32 %v1287, %v2222
    %2224 = vmatprep.mubr.f32.mxu0 %v1928
    %2225 = vmatmul.mubr.f32.gmra.mrb[0].mxu0 %v2153
    %v2226 = vpop.f32.mrb[0].mxu0
    %v2227 = vadd.f32 %v1283, %v2226
    %v2228 = vpop.f32.mrb[0].mxu0
    %v2229 = vadd.f32 %v1287, %v2228
    %2230 = vdwg.mxu0
    %2231 = vmatprep.subr.mxu0 %v932
    %2232 = vmatpush1.msra.mxu0 %v931
    %2233 = vmatprep.subr.mxu0 %v936
    %2234 = vmatpush1.msra.mxu0 %v935
    %2235 = vmatprep.subr.mxu0 %v940
    %2236 = vmatpush1.msra.mxu0 %v939
    %2237 = vmatprep.subr.mxu0 %v944
    %2238 = vmatpush1.msra.mxu0 %v943
    %2239 = vmatprep.subr.mxu0 %v948
    %2240 = vmatpush1.msra.mxu0 %v947
    %2241 = vmatprep.subr.mxu0 %v952
    %2242 = vmatpush1.msra.mxu0 %v951
    %2243 = vmatprep.subr.mxu0 %v956
    %2244 = vmatpush1.msra.mxu0 %v955
    %2245 = vmatprep.subr.mxu0 %v960
    %2246 = vmatpush1.msra.mxu0 %v959
    %2247 = vmatprep.subr.mxu0 %v964
    %2248 = vmatpush1.msra.mxu0 %v963
    %2249 = vmatprep.subr.mxu0 %v968
    %2250 = vmatpush1.msra.mxu0 %v967
    %2251 = vmatprep.subr.mxu0 %v972
    %2252 = vmatpush1.msra.mxu0 %v971
    %2253 = vmatprep.subr.mxu0 %v976
    %2254 = vmatpush1.msra.mxu0 %v975
    %2255 = vmatprep.subr.mxu0 %v980
    %2256 = vmatpush1.msra.mxu0 %v979
    %2257 = vmatprep.subr.mxu0 %v984
    %2258 = vmatpush1.msra.mxu0 %v983
    %2259 = vmatprep.subr.mxu0 %v988
    %2260 = vmatpush1.msra.mxu0 %v987
    %2261 = vmatprep.subr.mxu0 %v992
    %2262 = vmatpush1.msra.mxu0 %v991
    %2263 = vmatprep.subr.mxu0 %v996
    %2264 = vmatpush1.msra.mxu0 %v995
    %2265 = vmatprep.subr.mxu0 %v1000
    %2266 = vmatpush1.msra.mxu0 %v999
    %2267 = vmatprep.subr.mxu0 %v1004
    %2268 = vmatpush1.msra.mxu0 %v1003
    %2269 = vmatprep.subr.mxu0 %v1008
    %2270 = vmatpush1.msra.mxu0 %v1007
    %2271 = vmatprep.subr.mxu0 %v1012
    %2272 = vmatpush1.msra.mxu0 %v1011
    %2273 = vmatprep.subr.mxu0 %v1016
    %2274 = vmatpush1.msra.mxu0 %v1015
    %2275 = vmatprep.subr.mxu0 %v1020
    %2276 = vmatpush1.msra.mxu0 %v1019
    %2277 = vmatprep.subr.mxu0 %v1024
    %2278 = vmatpush1.msra.mxu0 %v1023
    %2279 = vmatprep.subr.mxu0 %v1028
    %2280 = vmatpush1.msra.mxu0 %v1027
    %2281 = vmatprep.subr.mxu0 %v1032
    %2282 = vmatpush1.msra.mxu0 %v1031
    %2283 = vmatprep.subr.mxu0 %v1036
    %2284 = vmatpush1.msra.mxu0 %v1035
    %2285 = vmatprep.subr.mxu0 %v1040
    %2286 = vmatpush1.msra.mxu0 %v1039
    %2287 = vmatprep.subr.mxu0 %v1044
    %2288 = vmatpush1.msra.mxu0 %v1043
    %2289 = vmatprep.subr.mxu0 %v1048
    %2290 = vmatpush1.msra.mxu0 %v1047
    %2291 = vmatprep.subr.mxu0 %v1052
    %2292 = vmatpush1.msra.mxu0 %v1051
    %2293 = vmatprep.subr.mxu0 %v1056
    %2294 = vmatpush1.msra.mxu0 %v1055
    %2295 = vmatprep.mubr.f32.mxu0 %v1927
    %2296 = vmatmul.mubr.f32.gmra.mrb[0].mxu0 %v2152
    %v2297 = vpop.f32.mrb[0].mxu0
    %v2298 = vadd.f32 %v1291, %v2297
    %v2299 = vpop.f32.mrb[0].mxu0
    %v2300 = vadd.f32 %v1295, %v2299
    %2301 = vmatprep.mubr.f32.mxu0 %v1928
    %2302 = vmatmul.mubr.f32.gmra.mrb[0].mxu0 %v2153
    %v2303 = vpop.f32.mrb[0].mxu0
    %v2304 = vadd.f32 %v1291, %v2303
    %v2305 = vpop.f32.mrb[0].mxu0
    %v2306 = vadd.f32 %v1295, %v2305
    %2307 = vdwg.mxu0
    %v2308 = vxor.u32 %v2221, 2147483648
    %v2309 = vxor.u32 %v2223, 2147483648
    %v2310 = vxor.u32 %v2298, 2147483648
    %v2311 = vxor.u32 %v2227, 2147483648
    %v2312 = vxor.u32 %v2229, 2147483648
    %v2313 = vxor.u32 %v2304, 2147483648
    %v2314 = vmul.f32 %v2308, 1.442695
    %v2315 = vpow.pop %v2314
    %v2316 = vmul.f32 %v2309, 1.442695
    %v2317 = vpow.pop %v2316
    %v2318 = vmul.f32 %v2310, 1.442695
    %v2319 = vpow.pop %v2318
    %v2320 = vmul.f32 %v2311, 1.442695
    %v2321 = vpow.pop %v2320
    %v2322 = vmul.f32 %v2312, 1.442695
    %v2323 = vpow.pop %v2322
    %v2324 = vmul.f32 %v2313, 1.442695
    %v2325 = vpow.pop %v2324
    %v2326 = vadd.f32 %v2315, 1.0
    %v2327 = vadd.f32 %v2317, 1.0
    %v2328 = vadd.f32 %v2319, 1.0
    %v2329 = vadd.f32 %v2321, 1.0
    %v2330 = vadd.f32 %v2323, 1.0
    %v2331 = vadd.f32 %v2325, 1.0
    %v2332 = vrcp.pop %v2326
    %v2333 = vmul.f32 1.0, %v2332
    %v2334 = vrcp.pop %v2327
    %v2335 = vmul.f32 1.0, %v2334
    %v2336 = vrcp.pop %v2328
    %v2337 = vmul.f32 1.0, %v2336
    %v2338 = vrcp.pop %v2329
    %v2339 = vmul.f32 1.0, %v2338
    %v2340 = vrcp.pop %v2330
    %v2341 = vmul.f32 1.0, %v2340
    %v2342 = vrcp.pop %v2331
    %v2343 = vmul.f32 1.0, %v2342
    %v2344 = vtanh.pop %v2300
    %v2345 = vtanh.pop %v2306
    %v2346 = vmul.f32 %v2335, %v1923
    %v2347 = vmul.f32 %v2341, %v1924
    %v2348 = vmul.f32 %v2333, %v2344
    %v2349 = vmul.f32 %v2339, %v2345
    %v2350 = vadd.f32 %v2346, %v2348
    %v2351 = vadd.f32 %v2347, %v2349
    %v2352 = vtanh.pop %v2350
    %v2353 = vtanh.pop %v2351
    %v2354 = vmul.f32 %v2337, %v2352
    %v2355 = vmul.f32 %v2343, %v2353
    %vm2356 = vcmp.eq.s32.totalorder %v861, 3
    %vm2357 = vcmp.eq.s32.totalorder %v864, 3
    %v2358 = vsel %vm2356, %v2354, %v1931
    %v2359 = vsel %vm2357, %v2355, %v1932
    %s2360 = smul.u32 6, 4
    %s2361 = smul.addr %s2360, 8
    %s2362 = scalar_lea.vmem [#allocation2], %s2361
    %v2363 = vld [vmem:[%s2362] sm:$0xff]
    %v2364 = vld [vmem:[%s2362 + $0x8] sm:$0xff]
    %v2365 = vld [vmem:[%s2362 + $0x10] sm:$0xff]
    %v2366 = vld [vmem:[%s2362 + $0x18] sm:$0xff]
    %v2367 = vld [vmem:[%s2362 + $0x20] sm:$0xff]
    %v2368 = vld [vmem:[%s2362 + $0x28] sm:$0xff]
    %v2369 = vld [vmem:[%s2362 + $0x30] sm:$0xff]
    %v2370 = vld [vmem:[%s2362 + $0x38] sm:$0xff]
    %2371 = vmatprep.subr.mxu0 %v866
    %2372 = vmatpush1.msra.mxu0 %v865
    %2373 = vmatprep.subr.mxu0 %v870
    %2374 = vmatpush1.msra.mxu0 %v869
    %2375 = vmatprep.subr.mxu0 %v874
    %2376 = vmatpush1.msra.mxu0 %v873
    %2377 = vmatprep.subr.mxu0 %v878
    %2378 = vmatpush1.msra.mxu0 %v877
    %2379 = vmatprep.subr.mxu0 %v882
    %2380 = vmatpush1.msra.mxu0 %v881
    %2381 = vmatprep.subr.mxu0 %v886
    %2382 = vmatpush1.msra.mxu0 %v885
    %2383 = vmatprep.subr.mxu0 %v890
    %2384 = vmatpush1.msra.mxu0 %v889
    %2385 = vmatprep.subr.mxu0 %v894
    %2386 = vmatpush1.msra.mxu0 %v893
    %2387 = vmatprep.subr.mxu0 %v898
    %2388 = vmatpush1.msra.mxu0 %v897
    %2389 = vmatprep.subr.mxu0 %v902
    %2390 = vmatpush1.msra.mxu0 %v901
    %2391 = vmatprep.subr.mxu0 %v906
    %2392 = vmatpush1.msra.mxu0 %v905
    %2393 = vmatprep.subr.mxu0 %v910
    %2394 = vmatpush1.msra.mxu0 %v909
    %2395 = vmatprep.subr.mxu0 %v914
    %2396 = vmatpush1.msra.mxu0 %v913
    %2397 = vmatprep.subr.mxu0 %v918
    %2398 = vmatpush1.msra.mxu0 %v917
    %2399 = vmatprep.subr.mxu0 %v922
    %2400 = vmatpush1.msra.mxu0 %v921
    %2401 = vmatprep.subr.mxu0 %v926
    %2402 = vmatpush1.msra.mxu0 %v925
    %2403 = vmatprep.subr.mxu0 0.0
    %2404 = vmatpush1.msra.mxu0 0.0
    %2405 = vmatprep.subr.mxu0 0.0
    %2406 = vmatpush1.msra.mxu0 0.0
    %2407 = vmatprep.subr.mxu0 0.0
    %2408 = vmatpush1.msra.mxu0 0.0
    %2409 = vmatprep.subr.mxu0 0.0
    %2410 = vmatpush1.msra.mxu0 0.0
    %2411 = vmatprep.subr.mxu0 0.0
    %2412 = vmatpush1.msra.mxu0 0.0
    %2413 = vmatprep.subr.mxu0 0.0
    %2414 = vmatpush1.msra.mxu0 0.0
    %2415 = vmatprep.subr.mxu0 0.0
    %2416 = vmatpush1.msra.mxu0 0.0
    %2417 = vmatprep.subr.mxu0 0.0
    %2418 = vmatpush1.msra.mxu0 0.0
    %2419 = vmatprep.subr.mxu0 0.0
    %2420 = vmatpush1.msra.mxu0 0.0
    %2421 = vmatprep.subr.mxu0 0.0
    %2422 = vmatpush1.msra.mxu0 0.0
    %2423 = vmatprep.subr.mxu0 0.0
    %2424 = vmatpush1.msra.mxu0 0.0
    %2425 = vmatprep.subr.mxu0 0.0
    %2426 = vmatpush1.msra.mxu0 0.0
    %2427 = vmatprep.subr.mxu0 0.0
    %2428 = vmatpush1.msra.mxu0 0.0
    %2429 = vmatprep.subr.mxu0 0.0
    %2430 = vmatpush1.msra.mxu0 0.0
    %2431 = vmatprep.subr.mxu0 0.0
    %2432 = vmatpush1.msra.mxu0 0.0
    %2433 = vmatprep.subr.mxu0 0.0
    %2434 = vmatpush1.msra.mxu0 0.0
    %2435 = vmatprep.mubr.f32.mxu0 0.0
    %2436 = vmatmul.mubr.f32.gmra.mrb[0].mxu0 %v2152
    %v2437 = vpop.f32.mrb[0].mxu0
    %v2438 = vadd.f32 0.0, %v2437
    %v2439 = vpop.f32.mrb[0].mxu0
    %v2440 = vadd.f32 0.0, %v2439
    %2441 = vmatprep.mubr.f32.mxu0 0.0
    %2442 = vmatmul.mubr.f32.gmra.mrb[0].mxu0 %v2153
    %v2443 = vpop.f32.mrb[0].mxu0
    %v2444 = vadd.f32 0.0, %v2443
    %v2445 = vpop.f32.mrb[0].mxu0
    %v2446 = vadd.f32 0.0, %v2445
    %2447 = vdwg.mxu0
    %2448 = vmatprep.subr.mxu0 %v868
    %2449 = vmatpush1.msra.mxu0 %v867
    %2450 = vmatprep.subr.mxu0 %v872
    %2451 = vmatpush1.msra.mxu0 %v871
    %2452 = vmatprep.subr.mxu0 %v876
    %2453 = vmatpush1.msra.mxu0 %v875
    %2454 = vmatprep.subr.mxu0 %v880
    %2455 = vmatpush1.msra.mxu0 %v879
    %2456 = vmatprep.subr.mxu0 %v884
    %2457 = vmatpush1.msra.mxu0 %v883
    %2458 = vmatprep.subr.mxu0 %v888
    %2459 = vmatpush1.msra.mxu0 %v887
    %2460 = vmatprep.subr.mxu0 %v892
    %2461 = vmatpush1.msra.mxu0 %v891
    %2462 = vmatprep.subr.mxu0 %v896
    %2463 = vmatpush1.msra.mxu0 %v895
    %2464 = vmatprep.subr.mxu0 %v900
    %2465 = vmatpush1.msra.mxu0 %v899
    %2466 = vmatprep.subr.mxu0 %v904
    %2467 = vmatpush1.msra.mxu0 %v903
    %2468 = vmatprep.subr.mxu0 %v908
    %2469 = vmatpush1.msra.mxu0 %v907
    %2470 = vmatprep.subr.mxu0 %v912
    %2471 = vmatpush1.msra.mxu0 %v911
    %2472 = vmatprep.subr.mxu0 %v916
    %2473 = vmatpush1.msra.mxu0 %v915
    %2474 = vmatprep.subr.mxu0 %v920
    %2475 = vmatpush1.msra.mxu0 %v919
    %2476 = vmatprep.subr.mxu0 %v924
    %2477 = vmatpush1.msra.mxu0 %v923
    %2478 = vmatprep.subr.mxu0 %v928
    %2479 = vmatpush1.msra.mxu0 %v927
    %2480 = vmatprep.subr.mxu0 0.0
    %2481 = vmatpush1.msra.mxu0 0.0
    %2482 = vmatprep.subr.mxu0 0.0
    %2483 = vmatpush1.msra.mxu0 0.0
    %2484 = vmatprep.subr.mxu0 0.0
    %2485 = vmatpush1.msra.mxu0 0.0
    %2486 = vmatprep.subr.mxu0 0.0
    %2487 = vmatpush1.msra.mxu0 0.0
    %2488 = vmatprep.subr.mxu0 0.0
    %2489 = vmatpush1.msra.mxu0 0.0
    %2490 = vmatprep.subr.mxu0 0.0
    %2491 = vmatpush1.msra.mxu0 0.0
    %2492 = vmatprep.subr.mxu0 0.0
    %2493 = vmatpush1.msra.mxu0 0.0
    %2494 = vmatprep.subr.mxu0 0.0
    %2495 = vmatpush1.msra.mxu0 0.0
    %2496 = vmatprep.subr.mxu0 0.0
    %2497 = vmatpush1.msra.mxu0 0.0
    %2498 = vmatprep.subr.mxu0 0.0
    %2499 = vmatpush1.msra.mxu0 0.0
    %2500 = vmatprep.subr.mxu0 0.0
    %2501 = vmatpush1.msra.mxu0 0.0
    %2502 = vmatprep.subr.mxu0 0.0
    %2503 = vmatpush1.msra.mxu0 0.0
    %2504 = vmatprep.subr.mxu0 0.0
    %2505 = vmatpush1.msra.mxu0 0.0
    %2506 = vmatprep.subr.mxu0 0.0
    %2507 = vmatpush1.msra.mxu0 0.0
    %2508 = vmatprep.subr.mxu0 0.0
    %2509 = vmatpush1.msra.mxu0 0.0
    %2510 = vmatprep.subr.mxu0 0.0
    %2511 = vmatpush1.msra.mxu0 0.0
    %2512 = vmatprep.mubr.f32.mxu0 0.0
    %2513 = vmatmul.mubr.f32.gmra.mrb[0].mxu0 %v2152
    %v2514 = vpop.f32.mrb[0].mxu0
    %v2515 = vadd.f32 0.0, %v2514
    %v2516 = vpop.f32.mrb[0].mxu0
    %v2517 = vadd.f32 0.0, %v2516
    %2518 = vmatprep.mubr.f32.mxu0 0.0
    %2519 = vmatmul.mubr.f32.gmra.mrb[0].mxu0 %v2153
    %v2520 = vpop.f32.mrb[0].mxu0
    %v2521 = vadd.f32 0.0, %v2520
    %v2522 = vpop.f32.mrb[0].mxu0
    %v2523 = vadd.f32 0.0, %v2522
    %2524 = vdwg.mxu0
    %v2525 = vadd.f32 %v2363, %v2438
    %v2526 = vadd.f32 %v2364, %v2440
    %v2527 = vadd.f32 %v2365, %v2515
    %v2528 = vadd.f32 %v2366, %v2517
    %v2529 = vadd.f32 %v2367, %v2444
    %v2530 = vadd.f32 %v2368, %v2446
    %v2531 = vadd.f32 %v2369, %v2521
    %v2532 = vadd.f32 %v2370, %v2523
    %v2533 = vxor.u32 %v2525, 2147483648
    %v2534 = vxor.u32 %v2526, 2147483648
    %v2535 = vxor.u32 %v2527, 2147483648
    %v2536 = vxor.u32 %v2529, 2147483648
    %v2537 = vxor.u32 %v2530, 2147483648
    %v2538 = vxor.u32 %v2531, 2147483648
    %v2539 = vmul.f32 %v2533, 1.442695
    %v2540 = vpow.pop %v2539
    %v2541 = vmul.f32 %v2534, 1.442695
    %v2542 = vpow.pop %v2541
    %v2543 = vmul.f32 %v2535, 1.442695
    %v2544 = vpow.pop %v2543
    %v2545 = vmul.f32 %v2536, 1.442695
    %v2546 = vpow.pop %v2545
    %v2547 = vmul.f32 %v2537, 1.442695
    %v2548 = vpow.pop %v2547
    %v2549 = vmul.f32 %v2538, 1.442695
    %v2550 = vpow.pop %v2549
    %v2551 = vadd.f32 %v2540, 1.0
    %v2552 = vadd.f32 %v2542, 1.0
    %v2553 = vadd.f32 %v2544, 1.0
    %v2554 = vadd.f32 %v2546, 1.0
    %v2555 = vadd.f32 %v2548, 1.0
    %v2556 = vadd.f32 %v2550, 1.0
    %v2557 = vrcp.pop %v2551
    %v2558 = vmul.f32 1.0, %v2557
    %v2559 = vrcp.pop %v2552
    %v2560 = vmul.f32 1.0, %v2559
    %v2561 = vrcp.pop %v2553
    %v2562 = vmul.f32 1.0, %v2561
    %v2563 = vrcp.pop %v2554
    %v2564 = vmul.f32 1.0, %v2563
    %v2565 = vrcp.pop %v2555
    %v2566 = vmul.f32 1.0, %v2565
    %v2567 = vrcp.pop %v2556
    %v2568 = vmul.f32 1.0, %v2567
    %v2569 = vtanh.pop %v2528
    %v2570 = vtanh.pop %v2532
    %v2571 = vmul.f32 %v2560, %v2148
    %v2572 = vmul.f32 %v2566, %v2149
    %v2573 = vmul.f32 %v2558, %v2569
    %v2574 = vmul.f32 %v2564, %v2570
    %v2575 = vadd.f32 %v2571, %v2573
    %v2576 = vadd.f32 %v2572, %v2574
    %v2577 = vtanh.pop %v2575
    %v2578 = vtanh.pop %v2576
    %v2579 = vmul.f32 %v2562, %v2577
    %v2580 = vmul.f32 %v2568, %v2578
    %2581 = vmatprep.subr.mxu0 %v930
    %2582 = vmatpush1.msra.mxu0 %v929
    %2583 = vmatprep.subr.mxu0 %v934
    %2584 = vmatpush1.msra.mxu0 %v933
    %2585 = vmatprep.subr.mxu0 %v938
    %2586 = vmatpush1.msra.mxu0 %v937
    %2587 = vmatprep.subr.mxu0 %v942
    %2588 = vmatpush1.msra.mxu0 %v941
    %2589 = vmatprep.subr.mxu0 %v946
    %2590 = vmatpush1.msra.mxu0 %v945
    %2591 = vmatprep.subr.mxu0 %v950
    %2592 = vmatpush1.msra.mxu0 %v949
    %2593 = vmatprep.subr.mxu0 %v954
    %2594 = vmatpush1.msra.mxu0 %v953
    %2595 = vmatprep.subr.mxu0 %v958
    %2596 = vmatpush1.msra.mxu0 %v957
    %2597 = vmatprep.subr.mxu0 %v962
    %2598 = vmatpush1.msra.mxu0 %v961
    %2599 = vmatprep.subr.mxu0 %v966
    %2600 = vmatpush1.msra.mxu0 %v965
    %2601 = vmatprep.subr.mxu0 %v970
    %2602 = vmatpush1.msra.mxu0 %v969
    %2603 = vmatprep.subr.mxu0 %v974
    %2604 = vmatpush1.msra.mxu0 %v973
    %2605 = vmatprep.subr.mxu0 %v978
    %2606 = vmatpush1.msra.mxu0 %v977
    %2607 = vmatprep.subr.mxu0 %v982
    %2608 = vmatpush1.msra.mxu0 %v981
    %2609 = vmatprep.subr.mxu0 %v986
    %2610 = vmatpush1.msra.mxu0 %v985
    %2611 = vmatprep.subr.mxu0 %v990
    %2612 = vmatpush1.msra.mxu0 %v989
    %2613 = vmatprep.subr.mxu0 %v994
    %2614 = vmatpush1.msra.mxu0 %v993
    %2615 = vmatprep.subr.mxu0 %v998
    %2616 = vmatpush1.msra.mxu0 %v997
    %2617 = vmatprep.subr.mxu0 %v1002
    %2618 = vmatpush1.msra.mxu0 %v1001
    %2619 = vmatprep.subr.mxu0 %v1006
    %2620 = vmatpush1.msra.mxu0 %v1005
    %2621 = vmatprep.subr.mxu0 %v1010
    %2622 = vmatpush1.msra.mxu0 %v1009
    %2623 = vmatprep.subr.mxu0 %v1014
    %2624 = vmatpush1.msra.mxu0 %v1013
    %2625 = vmatprep.subr.mxu0 %v1018
    %2626 = vmatpush1.msra.mxu0 %v1017
    %2627 = vmatprep.subr.mxu0 %v1022
    %2628 = vmatpush1.msra.mxu0 %v1021
    %2629 = vmatprep.subr.mxu0 %v1026
    %2630 = vmatpush1.msra.mxu0 %v1025
    %2631 = vmatprep.subr.mxu0 %v1030
    %2632 = vmatpush1.msra.mxu0 %v1029
    %2633 = vmatprep.subr.mxu0 %v1034
    %2634 = vmatpush1.msra.mxu0 %v1033
    %2635 = vmatprep.subr.mxu0 %v1038
    %2636 = vmatpush1.msra.mxu0 %v1037
    %2637 = vmatprep.subr.mxu0 %v1042
    %2638 = vmatpush1.msra.mxu0 %v1041
    %2639 = vmatprep.subr.mxu0 %v1046
    %2640 = vmatpush1.msra.mxu0 %v1045
    %2641 = vmatprep.subr.mxu0 %v1050
    %2642 = vmatpush1.msra.mxu0 %v1049
    %2643 = vmatprep.subr.mxu0 %v1054
    %2644 = vmatpush1.msra.mxu0 %v1053
    %2645 = vmatprep.mubr.f32.mxu0 %v2354
    %2646 = vmatmul.mubr.f32.gmra.mrb[0].mxu0 %v2579
    %v2647 = vpop.f32.mrb[0].mxu0
    %v2648 = vadd.f32 %v1283, %v2647
    %v2649 = vpop.f32.mrb[0].mxu0
    %v2650 = vadd.f32 %v1287, %v2649
    %2651 = vmatprep.mubr.f32.mxu0 %v2355
    %2652 = vmatmul.mubr.f32.gmra.mrb[0].mxu0 %v2580
    %v2653 = vpop.f32.mrb[0].mxu0
    %v2654 = vadd.f32 %v1283, %v2653
    %v2655 = vpop.f32.mrb[0].mxu0
    %v2656 = vadd.f32 %v1287, %v2655
    %2657 = vdwg.mxu0
    %2658 = vmatprep.subr.mxu0 %v932
    %2659 = vmatpush1.msra.mxu0 %v931
    %2660 = vmatprep.subr.mxu0 %v936
    %2661 = vmatpush1.msra.mxu0 %v935
    %2662 = vmatprep.subr.mxu0 %v940
    %2663 = vmatpush1.msra.mxu0 %v939
    %2664 = vmatprep.subr.mxu0 %v944
    %2665 = vmatpush1.msra.mxu0 %v943
    %2666 = vmatprep.subr.mxu0 %v948
    %2667 = vmatpush1.msra.mxu0 %v947
    %2668 = vmatprep.subr.mxu0 %v952
    %2669 = vmatpush1.msra.mxu0 %v951
    %2670 = vmatprep.subr.mxu0 %v956
    %2671 = vmatpush1.msra.mxu0 %v955
    %2672 = vmatprep.subr.mxu0 %v960
    %2673 = vmatpush1.msra.mxu0 %v959
    %2674 = vmatprep.subr.mxu0 %v964
    %2675 = vmatpush1.msra.mxu0 %v963
    %2676 = vmatprep.subr.mxu0 %v968
    %2677 = vmatpush1.msra.mxu0 %v967
    %2678 = vmatprep.subr.mxu0 %v972
    %2679 = vmatpush1.msra.mxu0 %v971
    %2680 = vmatprep.subr.mxu0 %v976
    %2681 = vmatpush1.msra.mxu0 %v975
    %2682 = vmatprep.subr.mxu0 %v980
    %2683 = vmatpush1.msra.mxu0 %v979
    %2684 = vmatprep.subr.mxu0 %v984
    %2685 = vmatpush1.msra.mxu0 %v983
    %2686 = vmatprep.subr.mxu0 %v988
    %2687 = vmatpush1.msra.mxu0 %v987
    %2688 = vmatprep.subr.mxu0 %v992
    %2689 = vmatpush1.msra.mxu0 %v991
    %2690 = vmatprep.subr.mxu0 %v996
    %2691 = vmatpush1.msra.mxu0 %v995
    %2692 = vmatprep.subr.mxu0 %v1000
    %2693 = vmatpush1.msra.mxu0 %v999
    %2694 = vmatprep.subr.mxu0 %v1004
    %2695 = vmatpush1.msra.mxu0 %v1003
    %2696 = vmatprep.subr.mxu0 %v1008
    %2697 = vmatpush1.msra.mxu0 %v1007
    %2698 = vmatprep.subr.mxu0 %v1012
    %2699 = vmatpush1.msra.mxu0 %v1011
    %2700 = vmatprep.subr.mxu0 %v1016
    %2701 = vmatpush1.msra.mxu0 %v1015
    %2702 = vmatprep.subr.mxu0 %v1020
    %2703 = vmatpush1.msra.mxu0 %v1019
    %2704 = vmatprep.subr.mxu0 %v1024
    %2705 = vmatpush1.msra.mxu0 %v1023
    %2706 = vmatprep.subr.mxu0 %v1028
    %2707 = vmatpush1.msra.mxu0 %v1027
    %2708 = vmatprep.subr.mxu0 %v1032
    %2709 = vmatpush1.msra.mxu0 %v1031
    %2710 = vmatprep.subr.mxu0 %v1036
    %2711 = vmatpush1.msra.mxu0 %v1035
    %2712 = vmatprep.subr.mxu0 %v1040
    %2713 = vmatpush1.msra.mxu0 %v1039
    %2714 = vmatprep.subr.mxu0 %v1044
    %2715 = vmatpush1.msra.mxu0 %v1043
    %2716 = vmatprep.subr.mxu0 %v1048
    %2717 = vmatpush1.msra.mxu0 %v1047
    %2718 = vmatprep.subr.mxu0 %v1052
    %2719 = vmatpush1.msra.mxu0 %v1051
    %2720 = vmatprep.subr.mxu0 %v1056
    %2721 = vmatpush1.msra.mxu0 %v1055
    %2722 = vmatprep.mubr.f32.mxu0 %v2354
    %2723 = vmatmul.mubr.f32.gmra.mrb[0].mxu0 %v2579
    %v2724 = vpop.f32.mrb[0].mxu0
    %v2725 = vadd.f32 %v1291, %v2724
    %v2726 = vpop.f32.mrb[0].mxu0
    %v2727 = vadd.f32 %v1295, %v2726
    %2728 = vmatprep.mubr.f32.mxu0 %v2355
    %2729 = vmatmul.mubr.f32.gmra.mrb[0].mxu0 %v2580
    %v2730 = vpop.f32.mrb[0].mxu0
    %v2731 = vadd.f32 %v1291, %v2730
    %v2732 = vpop.f32.mrb[0].mxu0
    %v2733 = vadd.f32 %v1295, %v2732
    %2734 = vdwg.mxu0
    %v2735 = vxor.u32 %v2648, 2147483648
    %v2736 = vxor.u32 %v2650, 2147483648
    %v2737 = vxor.u32 %v2725, 2147483648
    %v2738 = vxor.u32 %v2654, 2147483648
    %v2739 = vxor.u32 %v2656, 2147483648
    %v2740 = vxor.u32 %v2731, 2147483648
    %v2741 = vmul.f32 %v2735, 1.442695
    %v2742 = vpow.pop %v2741
    %v2743 = vmul.f32 %v2736, 1.442695
    %v2744 = vpow.pop %v2743
    %v2745 = vmul.f32 %v2737, 1.442695
    %v2746 = vpow.pop %v2745
    %v2747 = vmul.f32 %v2738, 1.442695
    %v2748 = vpow.pop %v2747
    %v2749 = vmul.f32 %v2739, 1.442695
    %v2750 = vpow.pop %v2749
    %v2751 = vmul.f32 %v2740, 1.442695
    %v2752 = vpow.pop %v2751
    %v2753 = vadd.f32 %v2742, 1.0
    %v2754 = vadd.f32 %v2744, 1.0
    %v2755 = vadd.f32 %v2746, 1.0
    %v2756 = vadd.f32 %v2748, 1.0
    %v2757 = vadd.f32 %v2750, 1.0
    %v2758 = vadd.f32 %v2752, 1.0
    %v2759 = vrcp.pop %v2753
    %v2760 = vmul.f32 1.0, %v2759
    %v2761 = vrcp.pop %v2754
    %v2762 = vmul.f32 1.0, %v2761
    %v2763 = vrcp.pop %v2755
    %v2764 = vmul.f32 1.0, %v2763
    %v2765 = vrcp.pop %v2756
    %v2766 = vmul.f32 1.0, %v2765
    %v2767 = vrcp.pop %v2757
    %v2768 = vmul.f32 1.0, %v2767
    %v2769 = vrcp.pop %v2758
    %v2770 = vmul.f32 1.0, %v2769
    %v2771 = vtanh.pop %v2727
    %v2772 = vtanh.pop %v2733
    %v2773 = vmul.f32 %v2762, %v2350
    %v2774 = vmul.f32 %v2768, %v2351
    %v2775 = vmul.f32 %v2760, %v2771
    %v2776 = vmul.f32 %v2766, %v2772
    %v2777 = vadd.f32 %v2773, %v2775
    %v2778 = vadd.f32 %v2774, %v2776
    %v2779 = vtanh.pop %v2777
    %v2780 = vtanh.pop %v2778
    %v2781 = vmul.f32 %v2764, %v2779
    %v2782 = vmul.f32 %v2770, %v2780
    %vm2783 = vcmp.eq.s32.totalorder %v861, 4
    %vm2784 = vcmp.eq.s32.totalorder %v864, 4
    %v2785 = vsel %vm2783, %v2781, %v2358
    %v2786 = vsel %vm2784, %v2782, %v2359
    %s2787 = smul.u32 8, 4
    %s2788 = smul.addr %s2787, 8
    %s2789 = scalar_lea.vmem [#allocation2], %s2788
    %v2790 = vld [vmem:[%s2789] sm:$0xff]
    %v2791 = vld [vmem:[%s2789 + $0x8] sm:$0xff]
    %v2792 = vld [vmem:[%s2789 + $0x10] sm:$0xff]
    %v2793 = vld [vmem:[%s2789 + $0x18] sm:$0xff]
    %v2794 = vld [vmem:[%s2789 + $0x20] sm:$0xff]
    %v2795 = vld [vmem:[%s2789 + $0x28] sm:$0xff]
    %v2796 = vld [vmem:[%s2789 + $0x30] sm:$0xff]
    %v2797 = vld [vmem:[%s2789 + $0x38] sm:$0xff]
    %2798 = vmatprep.subr.mxu0 %v866
    %2799 = vmatpush1.msra.mxu0 %v865
    %2800 = vmatprep.subr.mxu0 %v870
    %2801 = vmatpush1.msra.mxu0 %v869
    %2802 = vmatprep.subr.mxu0 %v874
    %2803 = vmatpush1.msra.mxu0 %v873
    %2804 = vmatprep.subr.mxu0 %v878
    %2805 = vmatpush1.msra.mxu0 %v877
    %2806 = vmatprep.subr.mxu0 %v882
    %2807 = vmatpush1.msra.mxu0 %v881
    %2808 = vmatprep.subr.mxu0 %v886
    %2809 = vmatpush1.msra.mxu0 %v885
    %2810 = vmatprep.subr.mxu0 %v890
    %2811 = vmatpush1.msra.mxu0 %v889
    %2812 = vmatprep.subr.mxu0 %v894
    %2813 = vmatpush1.msra.mxu0 %v893
    %2814 = vmatprep.subr.mxu0 %v898
    %2815 = vmatpush1.msra.mxu0 %v897
    %2816 = vmatprep.subr.mxu0 %v902
    %2817 = vmatpush1.msra.mxu0 %v901
    %2818 = vmatprep.subr.mxu0 %v906
    %2819 = vmatpush1.msra.mxu0 %v905
    %2820 = vmatprep.subr.mxu0 %v910
    %2821 = vmatpush1.msra.mxu0 %v909
    %2822 = vmatprep.subr.mxu0 %v914
    %2823 = vmatpush1.msra.mxu0 %v913
    %2824 = vmatprep.subr.mxu0 %v918
    %2825 = vmatpush1.msra.mxu0 %v917
    %2826 = vmatprep.subr.mxu0 %v922
    %2827 = vmatpush1.msra.mxu0 %v921
    %2828 = vmatprep.subr.mxu0 %v926
    %2829 = vmatpush1.msra.mxu0 %v925
    %2830 = vmatprep.subr.mxu0 0.0
    %2831 = vmatpush1.msra.mxu0 0.0
    %2832 = vmatprep.subr.mxu0 0.0
    %2833 = vmatpush1.msra.mxu0 0.0
    %2834 = vmatprep.subr.mxu0 0.0
    %2835 = vmatpush1.msra.mxu0 0.0
    %2836 = vmatprep.subr.mxu0 0.0
    %2837 = vmatpush1.msra.mxu0 0.0
    %2838 = vmatprep.subr.mxu0 0.0
    %2839 = vmatpush1.msra.mxu0 0.0
    %2840 = vmatprep.subr.mxu0 0.0
    %2841 = vmatpush1.msra.mxu0 0.0
    %2842 = vmatprep.subr.mxu0 0.0
    %2843 = vmatpush1.msra.mxu0 0.0
    %2844 = vmatprep.subr.mxu0 0.0
    %2845 = vmatpush1.msra.mxu0 0.0
    %2846 = vmatprep.subr.mxu0 0.0
    %2847 = vmatpush1.msra.mxu0 0.0
    %2848 = vmatprep.subr.mxu0 0.0
    %2849 = vmatpush1.msra.mxu0 0.0
    %2850 = vmatprep.subr.mxu0 0.0
    %2851 = vmatpush1.msra.mxu0 0.0
    %2852 = vmatprep.subr.mxu0 0.0
    %2853 = vmatpush1.msra.mxu0 0.0
    %2854 = vmatprep.subr.mxu0 0.0
    %2855 = vmatpush1.msra.mxu0 0.0
    %2856 = vmatprep.subr.mxu0 0.0
    %2857 = vmatpush1.msra.mxu0 0.0
    %2858 = vmatprep.subr.mxu0 0.0
    %2859 = vmatpush1.msra.mxu0 0.0
    %2860 = vmatprep.subr.mxu0 0.0
    %2861 = vmatpush1.msra.mxu0 0.0
    %2862 = vmatprep.mubr.f32.mxu0 0.0
    %2863 = vmatmul.mubr.f32.gmra.mrb[0].mxu0 %v2579
    %v2864 = vpop.f32.mrb[0].mxu0
    %v2865 = vadd.f32 0.0, %v2864
    %v2866 = vpop.f32.mrb[0].mxu0
    %v2867 = vadd.f32 0.0, %v2866
    %2868 = vmatprep.mubr.f32.mxu0 0.0
    %2869 = vmatmul.mubr.f32.gmra.mrb[0].mxu0 %v2580
    %v2870 = vpop.f32.mrb[0].mxu0
    %v2871 = vadd.f32 0.0, %v2870
    %v2872 = vpop.f32.mrb[0].mxu0
    %v2873 = vadd.f32 0.0, %v2872
    %2874 = vdwg.mxu0
    %2875 = vmatprep.subr.mxu0 %v868
    %2876 = vmatpush1.msra.mxu0 %v867
    %2877 = vmatprep.subr.mxu0 %v872
    %2878 = vmatpush1.msra.mxu0 %v871
    %2879 = vmatprep.subr.mxu0 %v876
    %2880 = vmatpush1.msra.mxu0 %v875
    %2881 = vmatprep.subr.mxu0 %v880
    %2882 = vmatpush1.msra.mxu0 %v879
    %2883 = vmatprep.subr.mxu0 %v884
    %2884 = vmatpush1.msra.mxu0 %v883
    %2885 = vmatprep.subr.mxu0 %v888
    %2886 = vmatpush1.msra.mxu0 %v887
    %2887 = vmatprep.subr.mxu0 %v892
    %2888 = vmatpush1.msra.mxu0 %v891
    %2889 = vmatprep.subr.mxu0 %v896
    %2890 = vmatpush1.msra.mxu0 %v895
    %2891 = vmatprep.subr.mxu0 %v900
    %2892 = vmatpush1.msra.mxu0 %v899
    %2893 = vmatprep.subr.mxu0 %v904
    %2894 = vmatpush1.msra.mxu0 %v903
    %2895 = vmatprep.subr.mxu0 %v908
    %2896 = vmatpush1.msra.mxu0 %v907
    %2897 = vmatprep.subr.mxu0 %v912
    %2898 = vmatpush1.msra.mxu0 %v911
    %2899 = vmatprep.subr.mxu0 %v916
    %2900 = vmatpush1.msra.mxu0 %v915
    %2901 = vmatprep.subr.mxu0 %v920
    %2902 = vmatpush1.msra.mxu0 %v919
    %2903 = vmatprep.subr.mxu0 %v924
    %2904 = vmatpush1.msra.mxu0 %v923
    %2905 = vmatprep.subr.mxu0 %v928
    %2906 = vmatpush1.msra.mxu0 %v927
    %2907 = vmatprep.subr.mxu0 0.0
    %2908 = vmatpush1.msra.mxu0 0.0
    %2909 = vmatprep.subr.mxu0 0.0
    %2910 = vmatpush1.msra.mxu0 0.0
    %2911 = vmatprep.subr.mxu0 0.0
    %2912 = vmatpush1.msra.mxu0 0.0
    %2913 = vmatprep.subr.mxu0 0.0
    %2914 = vmatpush1.msra.mxu0 0.0
    %2915 = vmatprep.subr.mxu0 0.0
    %2916 = vmatpush1.msra.mxu0 0.0
    %2917 = vmatprep.subr.mxu0 0.0
    %2918 = vmatpush1.msra.mxu0 0.0
    %2919 = vmatprep.subr.mxu0 0.0
    %2920 = vmatpush1.msra.mxu0 0.0
    %2921 = vmatprep.subr.mxu0 0.0
    %2922 = vmatpush1.msra.mxu0 0.0
    %2923 = vmatprep.subr.mxu0 0.0
    %2924 = vmatpush1.msra.mxu0 0.0
    %2925 = vmatprep.subr.mxu0 0.0
    %2926 = vmatpush1.msra.mxu0 0.0
    %2927 = vmatprep.subr.mxu0 0.0
    %2928 = vmatpush1.msra.mxu0 0.0
    %2929 = vmatprep.subr.mxu0 0.0
    %2930 = vmatpush1.msra.mxu0 0.0
    %2931 = vmatprep.subr.mxu0 0.0
    %2932 = vmatpush1.msra.mxu0 0.0
    %2933 = vmatprep.subr.mxu0 0.0
    %2934 = vmatpush1.msra.mxu0 0.0
    %2935 = vmatprep.subr.mxu0 0.0
    %2936 = vmatpush1.msra.mxu0 0.0
    %2937 = vmatprep.subr.mxu0 0.0
    %2938 = vmatpush1.msra.mxu0 0.0
    %2939 = vmatprep.mubr.f32.mxu0 0.0
    %2940 = vmatmul.mubr.f32.gmra.mrb[0].mxu0 %v2579
    %v2941 = vpop.f32.mrb[0].mxu0
    %v2942 = vadd.f32 0.0, %v2941
    %v2943 = vpop.f32.mrb[0].mxu0
    %v2944 = vadd.f32 0.0, %v2943
    %2945 = vmatprep.mubr.f32.mxu0 0.0
    %2946 = vmatmul.mubr.f32.gmra.mrb[0].mxu0 %v2580
    %v2947 = vpop.f32.mrb[0].mxu0
    %v2948 = vadd.f32 0.0, %v2947
    %v2949 = vpop.f32.mrb[0].mxu0
    %v2950 = vadd.f32 0.0, %v2949
    %2951 = vdwg.mxu0
    %v2952 = vadd.f32 %v2790, %v2865
    %v2953 = vadd.f32 %v2791, %v2867
    %v2954 = vadd.f32 %v2792, %v2942
    %v2955 = vadd.f32 %v2793, %v2944
    %v2956 = vadd.f32 %v2794, %v2871
    %v2957 = vadd.f32 %v2795, %v2873
    %v2958 = vadd.f32 %v2796, %v2948
    %v2959 = vadd.f32 %v2797, %v2950
    %v2960 = vxor.u32 %v2952, 2147483648
    %v2961 = vxor.u32 %v2953, 2147483648
    %v2962 = vxor.u32 %v2954, 2147483648
    %v2963 = vxor.u32 %v2956, 2147483648
    %v2964 = vxor.u32 %v2957, 2147483648
    %v2965 = vxor.u32 %v2958, 2147483648
    %v2966 = vmul.f32 %v2960, 1.442695
    %v2967 = vpow.pop %v2966
    %v2968 = vmul.f32 %v2961, 1.442695
    %v2969 = vpow.pop %v2968
    %v2970 = vmul.f32 %v2962, 1.442695
    %v2971 = vpow.pop %v2970
    %v2972 = vmul.f32 %v2963, 1.442695
    %v2973 = vpow.pop %v2972
    %v2974 = vmul.f32 %v2964, 1.442695
    %v2975 = vpow.pop %v2974
    %v2976 = vmul.f32 %v2965, 1.442695
    %v2977 = vpow.pop %v2976
    %v2978 = vadd.f32 %v2967, 1.0
    %v2979 = vadd.f32 %v2969, 1.0
    %v2980 = vadd.f32 %v2971, 1.0
    %v2981 = vadd.f32 %v2973, 1.0
    %v2982 = vadd.f32 %v2975, 1.0
    %v2983 = vadd.f32 %v2977, 1.0
    %v2984 = vrcp.pop %v2978
    %v2985 = vmul.f32 1.0, %v2984
    %v2986 = vrcp.pop %v2979
    %v2987 = vmul.f32 1.0, %v2986
    %v2988 = vrcp.pop %v2980
    %v2989 = vmul.f32 1.0, %v2988
    %v2990 = vrcp.pop %v2981
    %v2991 = vmul.f32 1.0, %v2990
    %v2992 = vrcp.pop %v2982
    %v2993 = vmul.f32 1.0, %v2992
    %v2994 = vrcp.pop %v2983
    %v2995 = vmul.f32 1.0, %v2994
    %v2996 = vtanh.pop %v2955
    %v2997 = vtanh.pop %v2959
    %v2998 = vmul.f32 %v2987, %v2575
    %v2999 = vmul.f32 %v2993, %v2576
    %v3000 = vmul.f32 %v2985, %v2996
    %v3001 = vmul.f32 %v2991, %v2997
    %v3002 = vadd.f32 %v2998, %v3000
    %v3003 = vadd.f32 %v2999, %v3001
    %v3004 = vtanh.pop %v3002
    %v3005 = vtanh.pop %v3003
    %v3006 = vmul.f32 %v2989, %v3004
    %v3007 = vmul.f32 %v2995, %v3005
    %3008 = vmatprep.subr.mxu0 %v930
    %3009 = vmatpush1.msra.mxu0 %v929
    %3010 = vmatprep.subr.mxu0 %v934
    %3011 = vmatpush1.msra.mxu0 %v933
    %3012 = vmatprep.subr.mxu0 %v938
    %3013 = vmatpush1.msra.mxu0 %v937
    %3014 = vmatprep.subr.mxu0 %v942
    %3015 = vmatpush1.msra.mxu0 %v941
    %3016 = vmatprep.subr.mxu0 %v946
    %3017 = vmatpush1.msra.mxu0 %v945
    %3018 = vmatprep.subr.mxu0 %v950
    %3019 = vmatpush1.msra.mxu0 %v949
    %3020 = vmatprep.subr.mxu0 %v954
    %3021 = vmatpush1.msra.mxu0 %v953
    %3022 = vmatprep.subr.mxu0 %v958
    %3023 = vmatpush1.msra.mxu0 %v957
    %3024 = vmatprep.subr.mxu0 %v962
    %3025 = vmatpush1.msra.mxu0 %v961
    %3026 = vmatprep.subr.mxu0 %v966
    %3027 = vmatpush1.msra.mxu0 %v965
    %3028 = vmatprep.subr.mxu0 %v970
    %3029 = vmatpush1.msra.mxu0 %v969
    %3030 = vmatprep.subr.mxu0 %v974
    %3031 = vmatpush1.msra.mxu0 %v973
    %3032 = vmatprep.subr.mxu0 %v978
    %3033 = vmatpush1.msra.mxu0 %v977
    %3034 = vmatprep.subr.mxu0 %v982
    %3035 = vmatpush1.msra.mxu0 %v981
    %3036 = vmatprep.subr.mxu0 %v986
    %3037 = vmatpush1.msra.mxu0 %v985
    %3038 = vmatprep.subr.mxu0 %v990
    %3039 = vmatpush1.msra.mxu0 %v989
    %3040 = vmatprep.subr.mxu0 %v994
    %3041 = vmatpush1.msra.mxu0 %v993
    %3042 = vmatprep.subr.mxu0 %v998
    %3043 = vmatpush1.msra.mxu0 %v997
    %3044 = vmatprep.subr.mxu0 %v1002
    %3045 = vmatpush1.msra.mxu0 %v1001
    %3046 = vmatprep.subr.mxu0 %v1006
    %3047 = vmatpush1.msra.mxu0 %v1005
    %3048 = vmatprep.subr.mxu0 %v1010
    %3049 = vmatpush1.msra.mxu0 %v1009
    %3050 = vmatprep.subr.mxu0 %v1014
    %3051 = vmatpush1.msra.mxu0 %v1013
    %3052 = vmatprep.subr.mxu0 %v1018
    %3053 = vmatpush1.msra.mxu0 %v1017
    %3054 = vmatprep.subr.mxu0 %v1022
    %3055 = vmatpush1.msra.mxu0 %v1021
    %3056 = vmatprep.subr.mxu0 %v1026
    %3057 = vmatpush1.msra.mxu0 %v1025
    %3058 = vmatprep.subr.mxu0 %v1030
    %3059 = vmatpush1.msra.mxu0 %v1029
    %3060 = vmatprep.subr.mxu0 %v1034
    %3061 = vmatpush1.msra.mxu0 %v1033
    %3062 = vmatprep.subr.mxu0 %v1038
    %3063 = vmatpush1.msra.mxu0 %v1037
    %3064 = vmatprep.subr.mxu0 %v1042
    %3065 = vmatpush1.msra.mxu0 %v1041
    %3066 = vmatprep.subr.mxu0 %v1046
    %3067 = vmatpush1.msra.mxu0 %v1045
    %3068 = vmatprep.subr.mxu0 %v1050
    %3069 = vmatpush1.msra.mxu0 %v1049
    %3070 = vmatprep.subr.mxu0 %v1054
    %3071 = vmatpush1.msra.mxu0 %v1053
    %3072 = vmatprep.mubr.f32.mxu0 %v2781
    %3073 = vmatmul.mubr.f32.gmra.mrb[0].mxu0 %v3006
    %v3074 = vpop.f32.mrb[0].mxu0
    %v3075 = vadd.f32 %v1283, %v3074
    %v3076 = vpop.f32.mrb[0].mxu0
    %v3077 = vadd.f32 %v1287, %v3076
    %3078 = vmatprep.mubr.f32.mxu0 %v2782
    %3079 = vmatmul.mubr.f32.gmra.mrb[0].mxu0 %v3007
    %v3080 = vpop.f32.mrb[0].mxu0
    %v3081 = vadd.f32 %v1283, %v3080
    %v3082 = vpop.f32.mrb[0].mxu0
    %v3083 = vadd.f32 %v1287, %v3082
    %3084 = vdwg.mxu0
    %3085 = vmatprep.subr.mxu0 %v932
    %3086 = vmatpush1.msra.mxu0 %v931
    %3087 = vmatprep.subr.mxu0 %v936
    %3088 = vmatpush1.msra.mxu0 %v935
    %3089 = vmatprep.subr.mxu0 %v940
    %3090 = vmatpush1.msra.mxu0 %v939
    %3091 = vmatprep.subr.mxu0 %v944
    %3092 = vmatpush1.msra.mxu0 %v943
    %3093 = vmatprep.subr.mxu0 %v948
    %3094 = vmatpush1.msra.mxu0 %v947
    %3095 = vmatprep.subr.mxu0 %v952
    %3096 = vmatpush1.msra.mxu0 %v951
    %3097 = vmatprep.subr.mxu0 %v956
    %3098 = vmatpush1.msra.mxu0 %v955
    %3099 = vmatprep.subr.mxu0 %v960
    %3100 = vmatpush1.msra.mxu0 %v959
    %3101 = vmatprep.subr.mxu0 %v964
    %3102 = vmatpush1.msra.mxu0 %v963
    %3103 = vmatprep.subr.mxu0 %v968
    %3104 = vmatpush1.msra.mxu0 %v967
    %3105 = vmatprep.subr.mxu0 %v972
    %3106 = vmatpush1.msra.mxu0 %v971
    %3107 = vmatprep.subr.mxu0 %v976
    %3108 = vmatpush1.msra.mxu0 %v975
    %3109 = vmatprep.subr.mxu0 %v980
    %3110 = vmatpush1.msra.mxu0 %v979
    %3111 = vmatprep.subr.mxu0 %v984
    %3112 = vmatpush1.msra.mxu0 %v983
    %3113 = vmatprep.subr.mxu0 %v988
    %3114 = vmatpush1.msra.mxu0 %v987
    %3115 = vmatprep.subr.mxu0 %v992
    %3116 = vmatpush1.msra.mxu0 %v991
    %3117 = vmatprep.subr.mxu0 %v996
    %3118 = vmatpush1.msra.mxu0 %v995
    %3119 = vmatprep.subr.mxu0 %v1000
    %3120 = vmatpush1.msra.mxu0 %v999
    %3121 = vmatprep.subr.mxu0 %v1004
    %3122 = vmatpush1.msra.mxu0 %v1003
    %3123 = vmatprep.subr.mxu0 %v1008
    %3124 = vmatpush1.msra.mxu0 %v1007
    %3125 = vmatprep.subr.mxu0 %v1012
    %3126 = vmatpush1.msra.mxu0 %v1011
    %3127 = vmatprep.subr.mxu0 %v1016
    %3128 = vmatpush1.msra.mxu0 %v1015
    %3129 = vmatprep.subr.mxu0 %v1020
    %3130 = vmatpush1.msra.mxu0 %v1019
    %3131 = vmatprep.subr.mxu0 %v1024
    %3132 = vmatpush1.msra.mxu0 %v1023
    %3133 = vmatprep.subr.mxu0 %v1028
    %3134 = vmatpush1.msra.mxu0 %v1027
    %3135 = vmatprep.subr.mxu0 %v1032
    %3136 = vmatpush1.msra.mxu0 %v1031
    %3137 = vmatprep.subr.mxu0 %v1036
    %3138 = vmatpush1.msra.mxu0 %v1035
    %3139 = vmatprep.subr.mxu0 %v1040
    %3140 = vmatpush1.msra.mxu0 %v1039
    %3141 = vmatprep.subr.mxu0 %v1044
    %3142 = vmatpush1.msra.mxu0 %v1043
    %3143 = vmatprep.subr.mxu0 %v1048
    %3144 = vmatpush1.msra.mxu0 %v1047
    %3145 = vmatprep.subr.mxu0 %v1052
    %3146 = vmatpush1.msra.mxu0 %v1051
    %3147 = vmatprep.subr.mxu0 %v1056
    %3148 = vmatpush1.msra.mxu0 %v1055
    %3149 = vmatprep.mubr.f32.mxu0 %v2781
    %3150 = vmatmul.mubr.f32.gmra.mrb[0].mxu0 %v3006
    %v3151 = vpop.f32.mrb[0].mxu0
    %v3152 = vadd.f32 %v1291, %v3151
    %v3153 = vpop.f32.mrb[0].mxu0
    %v3154 = vadd.f32 %v1295, %v3153
    %3155 = vmatprep.mubr.f32.mxu0 %v2782
    %3156 = vmatmul.mubr.f32.gmra.mrb[0].mxu0 %v3007
    %v3157 = vpop.f32.mrb[0].mxu0
    %v3158 = vadd.f32 %v1291, %v3157
    %v3159 = vpop.f32.mrb[0].mxu0
    %v3160 = vadd.f32 %v1295, %v3159
    %3161 = vdwg.mxu0
    %v3162 = vxor.u32 %v3075, 2147483648
    %v3163 = vxor.u32 %v3077, 2147483648
    %v3164 = vxor.u32 %v3152, 2147483648
    %v3165 = vxor.u32 %v3081, 2147483648
    %v3166 = vxor.u32 %v3083, 2147483648
    %v3167 = vxor.u32 %v3158, 2147483648
    %v3168 = vmul.f32 %v3162, 1.442695
    %v3169 = vpow.pop %v3168
    %v3170 = vmul.f32 %v3163, 1.442695
    %v3171 = vpow.pop %v3170
    %v3172 = vmul.f32 %v3164, 1.442695
    %v3173 = vpow.pop %v3172
    %v3174 = vmul.f32 %v3165, 1.442695
    %v3175 = vpow.pop %v3174
    %v3176 = vmul.f32 %v3166, 1.442695
    %v3177 = vpow.pop %v3176
    %v3178 = vmul.f32 %v3167, 1.442695
    %v3179 = vpow.pop %v3178
    %v3180 = vadd.f32 %v3169, 1.0
    %v3181 = vadd.f32 %v3171, 1.0
    %v3182 = vadd.f32 %v3173, 1.0
    %v3183 = vadd.f32 %v3175, 1.0
    %v3184 = vadd.f32 %v3177, 1.0
    %v3185 = vadd.f32 %v3179, 1.0
    %v3186 = vrcp.pop %v3180
    %v3187 = vmul.f32 1.0, %v3186
    %v3188 = vrcp.pop %v3181
    %v3189 = vmul.f32 1.0, %v3188
    %v3190 = vrcp.pop %v3182
    %v3191 = vmul.f32 1.0, %v3190
    %v3192 = vrcp.pop %v3183
    %v3193 = vmul.f32 1.0, %v3192
    %v3194 = vrcp.pop %v3184
    %v3195 = vmul.f32 1.0, %v3194
    %v3196 = vrcp.pop %v3185
    %v3197 = vmul.f32 1.0, %v3196
    %v3198 = vtanh.pop %v3154
    %v3199 = vtanh.pop %v3160
    %v3200 = vmul.f32 %v3189, %v2777
    %v3201 = vmul.f32 %v3195, %v2778
    %v3202 = vmul.f32 %v3187, %v3198
    %v3203 = vmul.f32 %v3193, %v3199
    %v3204 = vadd.f32 %v3200, %v3202
    %v3205 = vadd.f32 %v3201, %v3203
    %v3206 = vtanh.pop %v3204
    %v3207 = vtanh.pop %v3205
    %v3208 = vmul.f32 %v3191, %v3206
    %v3209 = vmul.f32 %v3197, %v3207
    %vm3210 = vcmp.eq.s32.totalorder %v861, 5
    %vm3211 = vcmp.eq.s32.totalorder %v864, 5
    %v3212 = vsel %vm3210, %v3208, %v2785
    %v3213 = vsel %vm3211, %v3209, %v2786
    %s3214 = smul.u32 10, 4
    %s3215 = smul.addr %s3214, 8
    %s3216 = scalar_lea.vmem [#allocation2], %s3215
    %v3217 = vld [vmem:[%s3216] sm:$0xff]
    %v3218 = vld [vmem:[%s3216 + $0x8] sm:$0xff]
    %v3219 = vld [vmem:[%s3216 + $0x10] sm:$0xff]
    %v3220 = vld [vmem:[%s3216 + $0x18] sm:$0xff]
    %v3221 = vld [vmem:[%s3216 + $0x20] sm:$0xff]
    %v3222 = vld [vmem:[%s3216 + $0x28] sm:$0xff]
    %v3223 = vld [vmem:[%s3216 + $0x30] sm:$0xff]
    %v3224 = vld [vmem:[%s3216 + $0x38] sm:$0xff]
    %3225 = vmatprep.subr.mxu0 %v866
    %3226 = vmatpush1.msra.mxu0 %v865
    %3227 = vmatprep.subr.mxu0 %v870
    %3228 = vmatpush1.msra.mxu0 %v869
    %3229 = vmatprep.subr.mxu0 %v874
    %3230 = vmatpush1.msra.mxu0 %v873
    %3231 = vmatprep.subr.mxu0 %v878
    %3232 = vmatpush1.msra.mxu0 %v877
    %3233 = vmatprep.subr.mxu0 %v882
    %3234 = vmatpush1.msra.mxu0 %v881
    %3235 = vmatprep.subr.mxu0 %v886
    %3236 = vmatpush1.msra.mxu0 %v885
    %3237 = vmatprep.subr.mxu0 %v890
    %3238 = vmatpush1.msra.mxu0 %v889
    %3239 = vmatprep.subr.mxu0 %v894
    %3240 = vmatpush1.msra.mxu0 %v893
    %3241 = vmatprep.subr.mxu0 %v898
    %3242 = vmatpush1.msra.mxu0 %v897
    %3243 = vmatprep.subr.mxu0 %v902
    %3244 = vmatpush1.msra.mxu0 %v901
    %3245 = vmatprep.subr.mxu0 %v906
    %3246 = vmatpush1.msra.mxu0 %v905
    %3247 = vmatprep.subr.mxu0 %v910
    %3248 = vmatpush1.msra.mxu0 %v909
    %3249 = vmatprep.subr.mxu0 %v914
    %3250 = vmatpush1.msra.mxu0 %v913
    %3251 = vmatprep.subr.mxu0 %v918
    %3252 = vmatpush1.msra.mxu0 %v917
    %3253 = vmatprep.subr.mxu0 %v922
    %3254 = vmatpush1.msra.mxu0 %v921
    %3255 = vmatprep.subr.mxu0 %v926
    %3256 = vmatpush1.msra.mxu0 %v925
    %3257 = vmatprep.subr.mxu0 0.0
    %3258 = vmatpush1.msra.mxu0 0.0
    %3259 = vmatprep.subr.mxu0 0.0
    %3260 = vmatpush1.msra.mxu0 0.0
    %3261 = vmatprep.subr.mxu0 0.0
    %3262 = vmatpush1.msra.mxu0 0.0
    %3263 = vmatprep.subr.mxu0 0.0
    %3264 = vmatpush1.msra.mxu0 0.0
    %3265 = vmatprep.subr.mxu0 0.0
    %3266 = vmatpush1.msra.mxu0 0.0
    %3267 = vmatprep.subr.mxu0 0.0
    %3268 = vmatpush1.msra.mxu0 0.0
    %3269 = vmatprep.subr.mxu0 0.0
    %3270 = vmatpush1.msra.mxu0 0.0
    %3271 = vmatprep.subr.mxu0 0.0
    %3272 = vmatpush1.msra.mxu0 0.0
    %3273 = vmatprep.subr.mxu0 0.0
    %3274 = vmatpush1.msra.mxu0 0.0
    %3275 = vmatprep.subr.mxu0 0.0
    %3276 = vmatpush1.msra.mxu0 0.0
    %3277 = vmatprep.subr.mxu0 0.0
    %3278 = vmatpush1.msra.mxu0 0.0
    %3279 = vmatprep.subr.mxu0 0.0
    %3280 = vmatpush1.msra.mxu0 0.0
    %3281 = vmatprep.subr.mxu0 0.0
    %3282 = vmatpush1.msra.mxu0 0.0
    %3283 = vmatprep.subr.mxu0 0.0
    %3284 = vmatpush1.msra.mxu0 0.0
    %3285 = vmatprep.subr.mxu0 0.0
    %3286 = vmatpush1.msra.mxu0 0.0
    %3287 = vmatprep.subr.mxu0 0.0
    %3288 = vmatpush1.msra.mxu0 0.0
    %3289 = vmatprep.mubr.f32.mxu0 0.0
    %3290 = vmatmul.mubr.f32.gmra.mrb[0].mxu0 %v3006
    %v3291 = vpop.f32.mrb[0].mxu0
    %v3292 = vadd.f32 0.0, %v3291
    %v3293 = vpop.f32.mrb[0].mxu0
    %v3294 = vadd.f32 0.0, %v3293
    %3295 = vmatprep.mubr.f32.mxu0 0.0
    %3296 = vmatmul.mubr.f32.gmra.mrb[0].mxu0 %v3007
    %v3297 = vpop.f32.mrb[0].mxu0
    %v3298 = vadd.f32 0.0, %v3297
    %v3299 = vpop.f32.mrb[0].mxu0
    %v3300 = vadd.f32 0.0, %v3299
    %3301 = vdwg.mxu0
    %3302 = vmatprep.subr.mxu0 %v868
    %3303 = vmatpush1.msra.mxu0 %v867
    %3304 = vmatprep.subr.mxu0 %v872
    %3305 = vmatpush1.msra.mxu0 %v871
    %3306 = vmatprep.subr.mxu0 %v876
    %3307 = vmatpush1.msra.mxu0 %v875
    %3308 = vmatprep.subr.mxu0 %v880
    %3309 = vmatpush1.msra.mxu0 %v879
    %3310 = vmatprep.subr.mxu0 %v884
    %3311 = vmatpush1.msra.mxu0 %v883
    %3312 = vmatprep.subr.mxu0 %v888
    %3313 = vmatpush1.msra.mxu0 %v887
    %3314 = vmatprep.subr.mxu0 %v892
    %3315 = vmatpush1.msra.mxu0 %v891
    %3316 = vmatprep.subr.mxu0 %v896
    %3317 = vmatpush1.msra.mxu0 %v895
    %3318 = vmatprep.subr.mxu0 %v900
    %3319 = vmatpush1.msra.mxu0 %v899
    %3320 = vmatprep.subr.mxu0 %v904
    %3321 = vmatpush1.msra.mxu0 %v903
    %3322 = vmatprep.subr.mxu0 %v908
    %3323 = vmatpush1.msra.mxu0 %v907
    %3324 = vmatprep.subr.mxu0 %v912
    %3325 = vmatpush1.msra.mxu0 %v911
    %3326 = vmatprep.subr.mxu0 %v916
    %3327 = vmatpush1.msra.mxu0 %v915
    %3328 = vmatprep.subr.mxu0 %v920
    %3329 = vmatpush1.msra.mxu0 %v919
    %3330 = vmatprep.subr.mxu0 %v924
    %3331 = vmatpush1.msra.mxu0 %v923
    %3332 = vmatprep.subr.mxu0 %v928
    %3333 = vmatpush1.msra.mxu0 %v927
    %3334 = vmatprep.subr.mxu0 0.0
    %3335 = vmatpush1.msra.mxu0 0.0
    %3336 = vmatprep.subr.mxu0 0.0
    %3337 = vmatpush1.msra.mxu0 0.0
    %3338 = vmatprep.subr.mxu0 0.0
    %3339 = vmatpush1.msra.mxu0 0.0
    %3340 = vmatprep.subr.mxu0 0.0
    %3341 = vmatpush1.msra.mxu0 0.0
    %3342 = vmatprep.subr.mxu0 0.0
    %3343 = vmatpush1.msra.mxu0 0.0
    %3344 = vmatprep.subr.mxu0 0.0
    %3345 = vmatpush1.msra.mxu0 0.0
    %3346 = vmatprep.subr.mxu0 0.0
    %3347 = vmatpush1.msra.mxu0 0.0
    %3348 = vmatprep.subr.mxu0 0.0
    %3349 = vmatpush1.msra.mxu0 0.0
    %3350 = vmatprep.subr.mxu0 0.0
    %3351 = vmatpush1.msra.mxu0 0.0
    %3352 = vmatprep.subr.mxu0 0.0
    %3353 = vmatpush1.msra.mxu0 0.0
    %3354 = vmatprep.subr.mxu0 0.0
    %3355 = vmatpush1.msra.mxu0 0.0
    %3356 = vmatprep.subr.mxu0 0.0
    %3357 = vmatpush1.msra.mxu0 0.0
    %3358 = vmatprep.subr.mxu0 0.0
    %3359 = vmatpush1.msra.mxu0 0.0
    %3360 = vmatprep.subr.mxu0 0.0
    %3361 = vmatpush1.msra.mxu0 0.0
    %3362 = vmatprep.subr.mxu0 0.0
    %3363 = vmatpush1.msra.mxu0 0.0
    %3364 = vmatprep.subr.mxu0 0.0
    %3365 = vmatpush1.msra.mxu0 0.0
    %3366 = vmatprep.mubr.f32.mxu0 0.0
    %3367 = vmatmul.mubr.f32.gmra.mrb[0].mxu0 %v3006
    %v3368 = vpop.f32.mrb[0].mxu0
    %v3369 = vadd.f32 0.0, %v3368
    %v3370 = vpop.f32.mrb[0].mxu0
    %v3371 = vadd.f32 0.0, %v3370
    %3372 = vmatprep.mubr.f32.mxu0 0.0
    %3373 = vmatmul.mubr.f32.gmra.mrb[0].mxu0 %v3007
    %v3374 = vpop.f32.mrb[0].mxu0
    %v3375 = vadd.f32 0.0, %v3374
    %v3376 = vpop.f32.mrb[0].mxu0
    %v3377 = vadd.f32 0.0, %v3376
    %3378 = vdwg.mxu0
    %v3379 = vadd.f32 %v3217, %v3292
    %v3380 = vadd.f32 %v3218, %v3294
    %v3381 = vadd.f32 %v3219, %v3369
    %v3382 = vadd.f32 %v3220, %v3371
    %v3383 = vadd.f32 %v3221, %v3298
    %v3384 = vadd.f32 %v3222, %v3300
    %v3385 = vadd.f32 %v3223, %v3375
    %v3386 = vadd.f32 %v3224, %v3377
    %v3387 = vxor.u32 %v3379, 2147483648
    %v3388 = vxor.u32 %v3380, 2147483648
    %v3389 = vxor.u32 %v3381, 2147483648
    %v3390 = vxor.u32 %v3383, 2147483648
    %v3391 = vxor.u32 %v3384, 2147483648
    %v3392 = vxor.u32 %v3385, 2147483648
    %v3393 = vmul.f32 %v3387, 1.442695
    %v3394 = vpow.pop %v3393
    %v3395 = vmul.f32 %v3388, 1.442695
    %v3396 = vpow.pop %v3395
    %v3397 = vmul.f32 %v3389, 1.442695
    %v3398 = vpow.pop %v3397
    %v3399 = vmul.f32 %v3390, 1.442695
    %v3400 = vpow.pop %v3399
    %v3401 = vmul.f32 %v3391, 1.442695
    %v3402 = vpow.pop %v3401
    %v3403 = vmul.f32 %v3392, 1.442695
    %v3404 = vpow.pop %v3403
    %v3405 = vadd.f32 %v3394, 1.0
    %v3406 = vadd.f32 %v3396, 1.0
    %v3407 = vadd.f32 %v3398, 1.0
    %v3408 = vadd.f32 %v3400, 1.0
    %v3409 = vadd.f32 %v3402, 1.0
    %v3410 = vadd.f32 %v3404, 1.0
    %v3411 = vrcp.pop %v3405
    %v3412 = vmul.f32 1.0, %v3411
    %v3413 = vrcp.pop %v3406
    %v3414 = vmul.f32 1.0, %v3413
    %v3415 = vrcp.pop %v3407
    %v3416 = vmul.f32 1.0, %v3415
    %v3417 = vrcp.pop %v3408
    %v3418 = vmul.f32 1.0, %v3417
    %v3419 = vrcp.pop %v3409
    %v3420 = vmul.f32 1.0, %v3419
    %v3421 = vrcp.pop %v3410
    %v3422 = vmul.f32 1.0, %v3421
    %v3423 = vtanh.pop %v3382
    %v3424 = vtanh.pop %v3386
    %v3425 = vmul.f32 %v3414, %v3002
    %v3426 = vmul.f32 %v3420, %v3003
    %v3427 = vmul.f32 %v3412, %v3423
    %v3428 = vmul.f32 %v3418, %v3424
    %v3429 = vadd.f32 %v3425, %v3427
    %v3430 = vadd.f32 %v3426, %v3428
    %v3431 = vtanh.pop %v3429
    %v3432 = vtanh.pop %v3430
    %v3433 = vmul.f32 %v3416, %v3431
    %v3434 = vmul.f32 %v3422, %v3432
    %3435 = vmatprep.subr.mxu0 %v930
    %3436 = vmatpush1.msra.mxu0 %v929
    %3437 = vmatprep.subr.mxu0 %v934
    %3438 = vmatpush1.msra.mxu0 %v933
    %3439 = vmatprep.subr.mxu0 %v938
    %3440 = vmatpush1.msra.mxu0 %v937
    %3441 = vmatprep.subr.mxu0 %v942
    %3442 = vmatpush1.msra.mxu0 %v941
    %3443 = vmatprep.subr.mxu0 %v946
    %3444 = vmatpush1.msra.mxu0 %v945
    %3445 = vmatprep.subr.mxu0 %v950
    %3446 = vmatpush1.msra.mxu0 %v949
    %3447 = vmatprep.subr.mxu0 %v954
    %3448 = vmatpush1.msra.mxu0 %v953
    %3449 = vmatprep.subr.mxu0 %v958
    %3450 = vmatpush1.msra.mxu0 %v957
    %3451 = vmatprep.subr.mxu0 %v962
    %3452 = vmatpush1.msra.mxu0 %v961
    %3453 = vmatprep.subr.mxu0 %v966
    %3454 = vmatpush1.msra.mxu0 %v965
    %3455 = vmatprep.subr.mxu0 %v970
    %3456 = vmatpush1.msra.mxu0 %v969
    %3457 = vmatprep.subr.mxu0 %v974
    %3458 = vmatpush1.msra.mxu0 %v973
    %3459 = vmatprep.subr.mxu0 %v978
    %3460 = vmatpush1.msra.mxu0 %v977
    %3461 = vmatprep.subr.mxu0 %v982
    %3462 = vmatpush1.msra.mxu0 %v981
    %3463 = vmatprep.subr.mxu0 %v986
    %3464 = vmatpush1.msra.mxu0 %v985
    %3465 = vmatprep.subr.mxu0 %v990
    %3466 = vmatpush1.msra.mxu0 %v989
    %3467 = vmatprep.subr.mxu0 %v994
    %3468 = vmatpush1.msra.mxu0 %v993
    %3469 = vmatprep.subr.mxu0 %v998
    %3470 = vmatpush1.msra.mxu0 %v997
    %3471 = vmatprep.subr.mxu0 %v1002
    %3472 = vmatpush1.msra.mxu0 %v1001
    %3473 = vmatprep.subr.mxu0 %v1006
    %3474 = vmatpush1.msra.mxu0 %v1005
    %3475 = vmatprep.subr.mxu0 %v1010
    %3476 = vmatpush1.msra.mxu0 %v1009
    %3477 = vmatprep.subr.mxu0 %v1014
    %3478 = vmatpush1.msra.mxu0 %v1013
    %3479 = vmatprep.subr.mxu0 %v1018
    %3480 = vmatpush1.msra.mxu0 %v1017
    %3481 = vmatprep.subr.mxu0 %v1022
    %3482 = vmatpush1.msra.mxu0 %v1021
    %3483 = vmatprep.subr.mxu0 %v1026
    %3484 = vmatpush1.msra.mxu0 %v1025
    %3485 = vmatprep.subr.mxu0 %v1030
    %3486 = vmatpush1.msra.mxu0 %v1029
    %3487 = vmatprep.subr.mxu0 %v1034
    %3488 = vmatpush1.msra.mxu0 %v1033
    %3489 = vmatprep.subr.mxu0 %v1038
    %3490 = vmatpush1.msra.mxu0 %v1037
    %3491 = vmatprep.subr.mxu0 %v1042
    %3492 = vmatpush1.msra.mxu0 %v1041
    %3493 = vmatprep.subr.mxu0 %v1046
    %3494 = vmatpush1.msra.mxu0 %v1045
    %3495 = vmatprep.subr.mxu0 %v1050
    %3496 = vmatpush1.msra.mxu0 %v1049
    %3497 = vmatprep.subr.mxu0 %v1054
    %3498 = vmatpush1.msra.mxu0 %v1053
    %3499 = vmatprep.mubr.f32.mxu0 %v3208
    %3500 = vmatmul.mubr.f32.gmra.mrb[0].mxu0 %v3433
    %v3501 = vpop.f32.mrb[0].mxu0
    %v3502 = vadd.f32 %v1283, %v3501
    %v3503 = vpop.f32.mrb[0].mxu0
    %v3504 = vadd.f32 %v1287, %v3503
    %3505 = vmatprep.mubr.f32.mxu0 %v3209
    %3506 = vmatmul.mubr.f32.gmra.mrb[0].mxu0 %v3434
    %v3507 = vpop.f32.mrb[0].mxu0
    %v3508 = vadd.f32 %v1283, %v3507
    %v3509 = vpop.f32.mrb[0].mxu0
    %v3510 = vadd.f32 %v1287, %v3509
    %3511 = vdwg.mxu0
    %3512 = vmatprep.subr.mxu0 %v932
    %3513 = vmatpush1.msra.mxu0 %v931
    %3514 = vmatprep.subr.mxu0 %v936
    %3515 = vmatpush1.msra.mxu0 %v935
    %3516 = vmatprep.subr.mxu0 %v940
    %3517 = vmatpush1.msra.mxu0 %v939
    %3518 = vmatprep.subr.mxu0 %v944
    %3519 = vmatpush1.msra.mxu0 %v943
    %3520 = vmatprep.subr.mxu0 %v948
    %3521 = vmatpush1.msra.mxu0 %v947
    %3522 = vmatprep.subr.mxu0 %v952
    %3523 = vmatpush1.msra.mxu0 %v951
    %3524 = vmatprep.subr.mxu0 %v956
    %3525 = vmatpush1.msra.mxu0 %v955
    %3526 = vmatprep.subr.mxu0 %v960
    %3527 = vmatpush1.msra.mxu0 %v959
    %3528 = vmatprep.subr.mxu0 %v964
    %3529 = vmatpush1.msra.mxu0 %v963
    %3530 = vmatprep.subr.mxu0 %v968
    %3531 = vmatpush1.msra.mxu0 %v967
    %3532 = vmatprep.subr.mxu0 %v972
    %3533 = vmatpush1.msra.mxu0 %v971
    %3534 = vmatprep.subr.mxu0 %v976
    %3535 = vmatpush1.msra.mxu0 %v975
    %3536 = vmatprep.subr.mxu0 %v980
    %3537 = vmatpush1.msra.mxu0 %v979
    %3538 = vmatprep.subr.mxu0 %v984
    %3539 = vmatpush1.msra.mxu0 %v983
    %3540 = vmatprep.subr.mxu0 %v988
    %3541 = vmatpush1.msra.mxu0 %v987
    %3542 = vmatprep.subr.mxu0 %v992
    %3543 = vmatpush1.msra.mxu0 %v991
    %3544 = vmatprep.subr.mxu0 %v996
    %3545 = vmatpush1.msra.mxu0 %v995
    %3546 = vmatprep.subr.mxu0 %v1000
    %3547 = vmatpush1.msra.mxu0 %v999
    %3548 = vmatprep.subr.mxu0 %v1004
    %3549 = vmatpush1.msra.mxu0 %v1003
    %3550 = vmatprep.subr.mxu0 %v1008
    %3551 = vmatpush1.msra.mxu0 %v1007
    %3552 = vmatprep.subr.mxu0 %v1012
    %3553 = vmatpush1.msra.mxu0 %v1011
    %3554 = vmatprep.subr.mxu0 %v1016
    %3555 = vmatpush1.msra.mxu0 %v1015
    %3556 = vmatprep.subr.mxu0 %v1020
    %3557 = vmatpush1.msra.mxu0 %v1019
    %3558 = vmatprep.subr.mxu0 %v1024
    %3559 = vmatpush1.msra.mxu0 %v1023
    %3560 = vmatprep.subr.mxu0 %v1028
    %3561 = vmatpush1.msra.mxu0 %v1027
    %3562 = vmatprep.subr.mxu0 %v1032
    %3563 = vmatpush1.msra.mxu0 %v1031
    %3564 = vmatprep.subr.mxu0 %v1036
    %3565 = vmatpush1.msra.mxu0 %v1035
    %3566 = vmatprep.subr.mxu0 %v1040
    %3567 = vmatpush1.msra.mxu0 %v1039
    %3568 = vmatprep.subr.mxu0 %v1044
    %3569 = vmatpush1.msra.mxu0 %v1043
    %3570 = vmatprep.subr.mxu0 %v1048
    %3571 = vmatpush1.msra.mxu0 %v1047
    %3572 = vmatprep.subr.mxu0 %v1052
    %3573 = vmatpush1.msra.mxu0 %v1051
    %3574 = vmatprep.subr.mxu0 %v1056
    %3575 = vmatpush1.msra.mxu0 %v1055
    %3576 = vmatprep.mubr.f32.mxu0 %v3208
    %3577 = vmatmul.mubr.f32.gmra.mrb[0].mxu0 %v3433
    %v3578 = vpop.f32.mrb[0].mxu0
    %v3579 = vadd.f32 %v1291, %v3578
    %v3580 = vpop.f32.mrb[0].mxu0
    %v3581 = vadd.f32 %v1295, %v3580
    %3582 = vmatprep.mubr.f32.mxu0 %v3209
    %3583 = vmatmul.mubr.f32.gmra.mrb[0].mxu0 %v3434
    %v3584 = vpop.f32.mrb[0].mxu0
    %v3585 = vadd.f32 %v1291, %v3584
    %v3586 = vpop.f32.mrb[0].mxu0
    %v3587 = vadd.f32 %v1295, %v3586
    %3588 = vdwg.mxu0
    %v3589 = vxor.u32 %v3502, 2147483648
    %v3590 = vxor.u32 %v3504, 2147483648
    %v3591 = vxor.u32 %v3579, 2147483648
    %v3592 = vxor.u32 %v3508, 2147483648
    %v3593 = vxor.u32 %v3510, 2147483648
    %v3594 = vxor.u32 %v3585, 2147483648
    %v3595 = vmul.f32 %v3589, 1.442695
    %v3596 = vpow.pop %v3595
    %v3597 = vmul.f32 %v3590, 1.442695
    %v3598 = vpow.pop %v3597
    %v3599 = vmul.f32 %v3591, 1.442695
    %v3600 = vpow.pop %v3599
    %v3601 = vmul.f32 %v3592, 1.442695
    %v3602 = vpow.pop %v3601
    %v3603 = vmul.f32 %v3593, 1.442695
    %v3604 = vpow.pop %v3603
    %v3605 = vmul.f32 %v3594, 1.442695
    %v3606 = vpow.pop %v3605
    %v3607 = vadd.f32 %v3596, 1.0
    %v3608 = vadd.f32 %v3598, 1.0
    %v3609 = vadd.f32 %v3600, 1.0
    %v3610 = vadd.f32 %v3602, 1.0
    %v3611 = vadd.f32 %v3604, 1.0
    %v3612 = vadd.f32 %v3606, 1.0
    %v3613 = vrcp.pop %v3607
    %v3614 = vmul.f32 1.0, %v3613
    %v3615 = vrcp.pop %v3608
    %v3616 = vmul.f32 1.0, %v3615
    %v3617 = vrcp.pop %v3609
    %v3618 = vmul.f32 1.0, %v3617
    %v3619 = vrcp.pop %v3610
    %v3620 = vmul.f32 1.0, %v3619
    %v3621 = vrcp.pop %v3611
    %v3622 = vmul.f32 1.0, %v3621
    %v3623 = vrcp.pop %v3612
    %v3624 = vmul.f32 1.0, %v3623
    %v3625 = vtanh.pop %v3581
    %v3626 = vtanh.pop %v3587
    %v3627 = vmul.f32 %v3616, %v3204
    %v3628 = vmul.f32 %v3622, %v3205
    %v3629 = vmul.f32 %v3614, %v3625
    %v3630 = vmul.f32 %v3620, %v3626
    %v3631 = vadd.f32 %v3627, %v3629
    %v3632 = vadd.f32 %v3628, %v3630
    %v3633 = vtanh.pop %v3631
    %v3634 = vtanh.pop %v3632
    %v3635 = vmul.f32 %v3618, %v3633
    %v3636 = vmul.f32 %v3624, %v3634
    %vm3637 = vcmp.eq.s32.totalorder %v861, 6
    %vm3638 = vcmp.eq.s32.totalorder %v864, 6
    %v3639 = vsel %vm3637, %v3635, %v3212
    %v3640 = vsel %vm3638, %v3636, %v3213
    %s3641 = smul.u32 12, 4
    %s3642 = smul.addr %s3641, 8
    %s3643 = scalar_lea.vmem [#allocation2], %s3642
    %v3644 = vld [vmem:[%s3643] sm:$0xff]
    %v3645 = vld [vmem:[%s3643 + $0x8] sm:$0xff]
    %v3646 = vld [vmem:[%s3643 + $0x10] sm:$0xff]
    %v3647 = vld [vmem:[%s3643 + $0x18] sm:$0xff]
    %v3648 = vld [vmem:[%s3643 + $0x20] sm:$0xff]
    %v3649 = vld [vmem:[%s3643 + $0x28] sm:$0xff]
    %v3650 = vld [vmem:[%s3643 + $0x30] sm:$0xff]
    %v3651 = vld [vmem:[%s3643 + $0x38] sm:$0xff]
    %3652 = vmatprep.subr.mxu0 %v866
    %3653 = vmatpush1.msra.mxu0 %v865
    %3654 = vmatprep.subr.mxu0 %v870
    %3655 = vmatpush1.msra.mxu0 %v869
    %3656 = vmatprep.subr.mxu0 %v874
    %3657 = vmatpush1.msra.mxu0 %v873
    %3658 = vmatprep.subr.mxu0 %v878
    %3659 = vmatpush1.msra.mxu0 %v877
    %3660 = vmatprep.subr.mxu0 %v882
    %3661 = vmatpush1.msra.mxu0 %v881
    %3662 = vmatprep.subr.mxu0 %v886
    %3663 = vmatpush1.msra.mxu0 %v885
    %3664 = vmatprep.subr.mxu0 %v890
    %3665 = vmatpush1.msra.mxu0 %v889
    %3666 = vmatprep.subr.mxu0 %v894
    %3667 = vmatpush1.msra.mxu0 %v893
    %3668 = vmatprep.subr.mxu0 %v898
    %3669 = vmatpush1.msra.mxu0 %v897
    %3670 = vmatprep.subr.mxu0 %v902
    %3671 = vmatpush1.msra.mxu0 %v901
    %3672 = vmatprep.subr.mxu0 %v906
    %3673 = vmatpush1.msra.mxu0 %v905
    %3674 = vmatprep.subr.mxu0 %v910
    %3675 = vmatpush1.msra.mxu0 %v909
    %3676 = vmatprep.subr.mxu0 %v914
    %3677 = vmatpush1.msra.mxu0 %v913
    %3678 = vmatprep.subr.mxu0 %v918
    %3679 = vmatpush1.msra.mxu0 %v917
    %3680 = vmatprep.subr.mxu0 %v922
    %3681 = vmatpush1.msra.mxu0 %v921
    %3682 = vmatprep.subr.mxu0 %v926
    %3683 = vmatpush1.msra.mxu0 %v925
    %3684 = vmatprep.subr.mxu0 0.0
    %3685 = vmatpush1.msra.mxu0 0.0
    %3686 = vmatprep.subr.mxu0 0.0
    %3687 = vmatpush1.msra.mxu0 0.0
    %3688 = vmatprep.subr.mxu0 0.0
    %3689 = vmatpush1.msra.mxu0 0.0
    %3690 = vmatprep.subr.mxu0 0.0
    %3691 = vmatpush1.msra.mxu0 0.0
    %3692 = vmatprep.subr.mxu0 0.0
    %3693 = vmatpush1.msra.mxu0 0.0
    %3694 = vmatprep.subr.mxu0 0.0
    %3695 = vmatpush1.msra.mxu0 0.0
    %3696 = vmatprep.subr.mxu0 0.0
    %3697 = vmatpush1.msra.mxu0 0.0
    %3698 = vmatprep.subr.mxu0 0.0
    %3699 = vmatpush1.msra.mxu0 0.0
    %3700 = vmatprep.subr.mxu0 0.0
    %3701 = vmatpush1.msra.mxu0 0.0
    %3702 = vmatprep.subr.mxu0 0.0
    %3703 = vmatpush1.msra.mxu0 0.0
    %3704 = vmatprep.subr.mxu0 0.0
    %3705 = vmatpush1.msra.mxu0 0.0
    %3706 = vmatprep.subr.mxu0 0.0
    %3707 = vmatpush1.msra.mxu0 0.0
    %3708 = vmatprep.subr.mxu0 0.0
    %3709 = vmatpush1.msra.mxu0 0.0
    %3710 = vmatprep.subr.mxu0 0.0
    %3711 = vmatpush1.msra.mxu0 0.0
    %3712 = vmatprep.subr.mxu0 0.0
    %3713 = vmatpush1.msra.mxu0 0.0
    %3714 = vmatprep.subr.mxu0 0.0
    %3715 = vmatpush1.msra.mxu0 0.0
    %3716 = vmatprep.mubr.f32.mxu0 0.0
    %3717 = vmatmul.mubr.f32.gmra.mrb[0].mxu0 %v3433
    %v3718 = vpop.f32.mrb[0].mxu0
    %v3719 = vadd.f32 0.0, %v3718
    %v3720 = vpop.f32.mrb[0].mxu0
    %v3721 = vadd.f32 0.0, %v3720
    %3722 = vmatprep.mubr.f32.mxu0 0.0
    %3723 = vmatmul.mubr.f32.gmra.mrb[0].mxu0 %v3434
    %v3724 = vpop.f32.mrb[0].mxu0
    %v3725 = vadd.f32 0.0, %v3724
    %v3726 = vpop.f32.mrb[0].mxu0
    %v3727 = vadd.f32 0.0, %v3726
    %3728 = vdwg.mxu0
    %3729 = vmatprep.subr.mxu0 %v868
    %3730 = vmatpush1.msra.mxu0 %v867
    %3731 = vmatprep.subr.mxu0 %v872
    %3732 = vmatpush1.msra.mxu0 %v871
    %3733 = vmatprep.subr.mxu0 %v876
    %3734 = vmatpush1.msra.mxu0 %v875
    %3735 = vmatprep.subr.mxu0 %v880
    %3736 = vmatpush1.msra.mxu0 %v879
    %3737 = vmatprep.subr.mxu0 %v884
    %3738 = vmatpush1.msra.mxu0 %v883
    %3739 = vmatprep.subr.mxu0 %v888
    %3740 = vmatpush1.msra.mxu0 %v887
    %3741 = vmatprep.subr.mxu0 %v892
    %3742 = vmatpush1.msra.mxu0 %v891
    %3743 = vmatprep.subr.mxu0 %v896
    %3744 = vmatpush1.msra.mxu0 %v895
    %3745 = vmatprep.subr.mxu0 %v900
    %3746 = vmatpush1.msra.mxu0 %v899
    %3747 = vmatprep.subr.mxu0 %v904
    %3748 = vmatpush1.msra.mxu0 %v903
    %3749 = vmatprep.subr.mxu0 %v908
    %3750 = vmatpush1.msra.mxu0 %v907
    %3751 = vmatprep.subr.mxu0 %v912
    %3752 = vmatpush1.msra.mxu0 %v911
    %3753 = vmatprep.subr.mxu0 %v916
    %3754 = vmatpush1.msra.mxu0 %v915
    %3755 = vmatprep.subr.mxu0 %v920
    %3756 = vmatpush1.msra.mxu0 %v919
    %3757 = vmatprep.subr.mxu0 %v924
    %3758 = vmatpush1.msra.mxu0 %v923
    %3759 = vmatprep.subr.mxu0 %v928
    %3760 = vmatpush1.msra.mxu0 %v927
    %3761 = vmatprep.subr.mxu0 0.0
    %3762 = vmatpush1.msra.mxu0 0.0
    %3763 = vmatprep.subr.mxu0 0.0
    %3764 = vmatpush1.msra.mxu0 0.0
    %3765 = vmatprep.subr.mxu0 0.0
    %3766 = vmatpush1.msra.mxu0 0.0
    %3767 = vmatprep.subr.mxu0 0.0
    %3768 = vmatpush1.msra.mxu0 0.0
    %3769 = vmatprep.subr.mxu0 0.0
    %3770 = vmatpush1.msra.mxu0 0.0
    %3771 = vmatprep.subr.mxu0 0.0
    %3772 = vmatpush1.msra.mxu0 0.0
    %3773 = vmatprep.subr.mxu0 0.0
    %3774 = vmatpush1.msra.mxu0 0.0
    %3775 = vmatprep.subr.mxu0 0.0
    %3776 = vmatpush1.msra.mxu0 0.0
    %3777 = vmatprep.subr.mxu0 0.0
    %3778 = vmatpush1.msra.mxu0 0.0
    %3779 = vmatprep.subr.mxu0 0.0
    %3780 = vmatpush1.msra.mxu0 0.0
    %3781 = vmatprep.subr.mxu0 0.0
    %3782 = vmatpush1.msra.mxu0 0.0
    %3783 = vmatprep.subr.mxu0 0.0
    %3784 = vmatpush1.msra.mxu0 0.0
    %3785 = vmatprep.subr.mxu0 0.0
    %3786 = vmatpush1.msra.mxu0 0.0
    %3787 = vmatprep.subr.mxu0 0.0
    %3788 = vmatpush1.msra.mxu0 0.0
    %3789 = vmatprep.subr.mxu0 0.0
    %3790 = vmatpush1.msra.mxu0 0.0
    %3791 = vmatprep.subr.mxu0 0.0
    %3792 = vmatpush1.msra.mxu0 0.0
    %3793 = vmatprep.mubr.f32.mxu0 0.0
    %3794 = vmatmul.mubr.f32.gmra.mrb[0].mxu0 %v3433
    %v3795 = vpop.f32.mrb[0].mxu0
    %v3796 = vadd.f32 0.0, %v3795
    %v3797 = vpop.f32.mrb[0].mxu0
    %v3798 = vadd.f32 0.0, %v3797
    %3799 = vmatprep.mubr.f32.mxu0 0.0
    %3800 = vmatmul.mubr.f32.gmra.mrb[0].mxu0 %v3434
    %v3801 = vpop.f32.mrb[0].mxu0
    %v3802 = vadd.f32 0.0, %v3801
    %v3803 = vpop.f32.mrb[0].mxu0
    %v3804 = vadd.f32 0.0, %v3803
    %3805 = vdwg.mxu0
    %v3806 = vadd.f32 %v3644, %v3719
    %v3807 = vadd.f32 %v3645, %v3721
    %v3808 = vadd.f32 %v3646, %v3796
    %v3809 = vadd.f32 %v3647, %v3798
    %v3810 = vadd.f32 %v3648, %v3725
    %v3811 = vadd.f32 %v3649, %v3727
    %v3812 = vadd.f32 %v3650, %v3802
    %v3813 = vadd.f32 %v3651, %v3804
    %v3814 = vxor.u32 %v3806, 2147483648
    %v3815 = vxor.u32 %v3807, 2147483648
    %v3816 = vxor.u32 %v3808, 2147483648
    %v3817 = vxor.u32 %v3810, 2147483648
    %v3818 = vxor.u32 %v3811, 2147483648
    %v3819 = vxor.u32 %v3812, 2147483648
    %v3820 = vmul.f32 %v3814, 1.442695
    %v3821 = vpow.pop %v3820
    %v3822 = vmul.f32 %v3815, 1.442695
    %v3823 = vpow.pop %v3822
    %v3824 = vmul.f32 %v3816, 1.442695
    %v3825 = vpow.pop %v3824
    %v3826 = vmul.f32 %v3817, 1.442695
    %v3827 = vpow.pop %v3826
    %v3828 = vmul.f32 %v3818, 1.442695
    %v3829 = vpow.pop %v3828
    %v3830 = vmul.f32 %v3819, 1.442695
    %v3831 = vpow.pop %v3830
    %v3832 = vadd.f32 %v3821, 1.0
    %v3833 = vadd.f32 %v3823, 1.0
    %v3834 = vadd.f32 %v3825, 1.0
    %v3835 = vadd.f32 %v3827, 1.0
    %v3836 = vadd.f32 %v3829, 1.0
    %v3837 = vadd.f32 %v3831, 1.0
    %v3838 = vrcp.pop %v3832
    %v3839 = vmul.f32 1.0, %v3838
    %v3840 = vrcp.pop %v3833
    %v3841 = vmul.f32 1.0, %v3840
    %v3842 = vrcp.pop %v3834
    %v3843 = vmul.f32 1.0, %v3842
    %v3844 = vrcp.pop %v3835
    %v3845 = vmul.f32 1.0, %v3844
    %v3846 = vrcp.pop %v3836
    %v3847 = vmul.f32 1.0, %v3846
    %v3848 = vrcp.pop %v3837
    %v3849 = vmul.f32 1.0, %v3848
    %v3850 = vtanh.pop %v3809
    %v3851 = vtanh.pop %v3813
    %v3852 = vmul.f32 %v3841, %v3429
    %v3853 = vmul.f32 %v3847, %v3430
    %v3854 = vmul.f32 %v3839, %v3850
    %v3855 = vmul.f32 %v3845, %v3851
    %v3856 = vadd.f32 %v3852, %v3854
    %v3857 = vadd.f32 %v3853, %v3855
    %v3858 = vtanh.pop %v3856
    %v3859 = vtanh.pop %v3857
    %v3860 = vmul.f32 %v3843, %v3858
    %v3861 = vmul.f32 %v3849, %v3859
    %3862 = vmatprep.subr.mxu0 %v930
    %3863 = vmatpush1.msra.mxu0 %v929
    %3864 = vmatprep.subr.mxu0 %v934
    %3865 = vmatpush1.msra.mxu0 %v933
    %3866 = vmatprep.subr.mxu0 %v938
    %3867 = vmatpush1.msra.mxu0 %v937
    %3868 = vmatprep.subr.mxu0 %v942
    %3869 = vmatpush1.msra.mxu0 %v941
    %3870 = vmatprep.subr.mxu0 %v946
    %3871 = vmatpush1.msra.mxu0 %v945
    %3872 = vmatprep.subr.mxu0 %v950
    %3873 = vmatpush1.msra.mxu0 %v949
    %3874 = vmatprep.subr.mxu0 %v954
    %3875 = vmatpush1.msra.mxu0 %v953
    %3876 = vmatprep.subr.mxu0 %v958
    %3877 = vmatpush1.msra.mxu0 %v957
    %3878 = vmatprep.subr.mxu0 %v962
    %3879 = vmatpush1.msra.mxu0 %v961
    %3880 = vmatprep.subr.mxu0 %v966
    %3881 = vmatpush1.msra.mxu0 %v965
    %3882 = vmatprep.subr.mxu0 %v970
    %3883 = vmatpush1.msra.mxu0 %v969
    %3884 = vmatprep.subr.mxu0 %v974
    %3885 = vmatpush1.msra.mxu0 %v973
    %3886 = vmatprep.subr.mxu0 %v978
    %3887 = vmatpush1.msra.mxu0 %v977
    %3888 = vmatprep.subr.mxu0 %v982
    %3889 = vmatpush1.msra.mxu0 %v981
    %3890 = vmatprep.subr.mxu0 %v986
    %3891 = vmatpush1.msra.mxu0 %v985
    %3892 = vmatprep.subr.mxu0 %v990
    %3893 = vmatpush1.msra.mxu0 %v989
    %3894 = vmatprep.subr.mxu0 %v994
    %3895 = vmatpush1.msra.mxu0 %v993
    %3896 = vmatprep.subr.mxu0 %v998
    %3897 = vmatpush1.msra.mxu0 %v997
    %3898 = vmatprep.subr.mxu0 %v1002
    %3899 = vmatpush1.msra.mxu0 %v1001
    %3900 = vmatprep.subr.mxu0 %v1006
    %3901 = vmatpush1.msra.mxu0 %v1005
    %3902 = vmatprep.subr.mxu0 %v1010
    %3903 = vmatpush1.msra.mxu0 %v1009
    %3904 = vmatprep.subr.mxu0 %v1014
    %3905 = vmatpush1.msra.mxu0 %v1013
    %3906 = vmatprep.subr.mxu0 %v1018
    %3907 = vmatpush1.msra.mxu0 %v1017
    %3908 = vmatprep.subr.mxu0 %v1022
    %3909 = vmatpush1.msra.mxu0 %v1021
    %3910 = vmatprep.subr.mxu0 %v1026
    %3911 = vmatpush1.msra.mxu0 %v1025
    %3912 = vmatprep.subr.mxu0 %v1030
    %3913 = vmatpush1.msra.mxu0 %v1029
    %3914 = vmatprep.subr.mxu0 %v1034
    %3915 = vmatpush1.msra.mxu0 %v1033
    %3916 = vmatprep.subr.mxu0 %v1038
    %3917 = vmatpush1.msra.mxu0 %v1037
    %3918 = vmatprep.subr.mxu0 %v1042
    %3919 = vmatpush1.msra.mxu0 %v1041
    %3920 = vmatprep.subr.mxu0 %v1046
    %3921 = vmatpush1.msra.mxu0 %v1045
    %3922 = vmatprep.subr.mxu0 %v1050
    %3923 = vmatpush1.msra.mxu0 %v1049
    %3924 = vmatprep.subr.mxu0 %v1054
    %3925 = vmatpush1.msra.mxu0 %v1053
    %3926 = vmatprep.mubr.f32.mxu0 %v3635
    %3927 = vmatmul.mubr.f32.gmra.mrb[0].mxu0 %v3860
    %v3928 = vpop.f32.mrb[0].mxu0
    %v3929 = vadd.f32 %v1283, %v3928
    %v3930 = vpop.f32.mrb[0].mxu0
    %v3931 = vadd.f32 %v1287, %v3930
    %3932 = vmatprep.mubr.f32.mxu0 %v3636
    %3933 = vmatmul.mubr.f32.gmra.mrb[0].mxu0 %v3861
    %v3934 = vpop.f32.mrb[0].mxu0
    %v3935 = vadd.f32 %v1283, %v3934
    %v3936 = vpop.f32.mrb[0].mxu0
    %v3937 = vadd.f32 %v1287, %v3936
    %3938 = vdwg.mxu0
    %3939 = vmatprep.subr.mxu0 %v932
    %3940 = vmatpush1.msra.mxu0 %v931
    %3941 = vmatprep.subr.mxu0 %v936
    %3942 = vmatpush1.msra.mxu0 %v935
    %3943 = vmatprep.subr.mxu0 %v940
    %3944 = vmatpush1.msra.mxu0 %v939
    %3945 = vmatprep.subr.mxu0 %v944
    %3946 = vmatpush1.msra.mxu0 %v943
    %3947 = vmatprep.subr.mxu0 %v948
    %3948 = vmatpush1.msra.mxu0 %v947
    %3949 = vmatprep.subr.mxu0 %v952
    %3950 = vmatpush1.msra.mxu0 %v951
    %3951 = vmatprep.subr.mxu0 %v956
    %3952 = vmatpush1.msra.mxu0 %v955
    %3953 = vmatprep.subr.mxu0 %v960
    %3954 = vmatpush1.msra.mxu0 %v959
    %3955 = vmatprep.subr.mxu0 %v964
    %3956 = vmatpush1.msra.mxu0 %v963
    %3957 = vmatprep.subr.mxu0 %v968
    %3958 = vmatpush1.msra.mxu0 %v967
    %3959 = vmatprep.subr.mxu0 %v972
    %3960 = vmatpush1.msra.mxu0 %v971
    %3961 = vmatprep.subr.mxu0 %v976
    %3962 = vmatpush1.msra.mxu0 %v975
    %3963 = vmatprep.subr.mxu0 %v980
    %3964 = vmatpush1.msra.mxu0 %v979
    %3965 = vmatprep.subr.mxu0 %v984
    %3966 = vmatpush1.msra.mxu0 %v983
    %3967 = vmatprep.subr.mxu0 %v988
    %3968 = vmatpush1.msra.mxu0 %v987
    %3969 = vmatprep.subr.mxu0 %v992
    %3970 = vmatpush1.msra.mxu0 %v991
    %3971 = vmatprep.subr.mxu0 %v996
    %3972 = vmatpush1.msra.mxu0 %v995
    %3973 = vmatprep.subr.mxu0 %v1000
    %3974 = vmatpush1.msra.mxu0 %v999
    %3975 = vmatprep.subr.mxu0 %v1004
    %3976 = vmatpush1.msra.mxu0 %v1003
    %3977 = vmatprep.subr.mxu0 %v1008
    %3978 = vmatpush1.msra.mxu0 %v1007
    %3979 = vmatprep.subr.mxu0 %v1012
    %3980 = vmatpush1.msra.mxu0 %v1011
    %3981 = vmatprep.subr.mxu0 %v1016
    %3982 = vmatpush1.msra.mxu0 %v1015
    %3983 = vmatprep.subr.mxu0 %v1020
    %3984 = vmatpush1.msra.mxu0 %v1019
    %3985 = vmatprep.subr.mxu0 %v1024
    %3986 = vmatpush1.msra.mxu0 %v1023
    %3987 = vmatprep.subr.mxu0 %v1028
    %3988 = vmatpush1.msra.mxu0 %v1027
    %3989 = vmatprep.subr.mxu0 %v1032
    %3990 = vmatpush1.msra.mxu0 %v1031
    %3991 = vmatprep.subr.mxu0 %v1036
    %3992 = vmatpush1.msra.mxu0 %v1035
    %3993 = vmatprep.subr.mxu0 %v1040
    %3994 = vmatpush1.msra.mxu0 %v1039
    %3995 = vmatprep.subr.mxu0 %v1044
    %3996 = vmatpush1.msra.mxu0 %v1043
    %3997 = vmatprep.subr.mxu0 %v1048
    %3998 = vmatpush1.msra.mxu0 %v1047
    %3999 = vmatprep.subr.mxu0 %v1052
    %4000 = vmatpush1.msra.mxu0 %v1051
    %4001 = vmatprep.subr.mxu0 %v1056
    %4002 = vmatpush1.msra.mxu0 %v1055
    %4003 = vmatprep.mubr.f32.mxu0 %v3635
    %4004 = vmatmul.mubr.f32.gmra.mrb[0].mxu0 %v3860
    %v4005 = vpop.f32.mrb[0].mxu0
    %v4006 = vadd.f32 %v1291, %v4005
    %v4007 = vpop.f32.mrb[0].mxu0
    %v4008 = vadd.f32 %v1295, %v4007
    %4009 = vmatprep.mubr.f32.mxu0 %v3636
    %4010 = vmatmul.mubr.f32.gmra.mrb[0].mxu0 %v3861
    %v4011 = vpop.f32.mrb[0].mxu0
    %v4012 = vadd.f32 %v1291, %v4011
    %v4013 = vpop.f32.mrb[0].mxu0
    %v4014 = vadd.f32 %v1295, %v4013
    %4015 = vdwg.mxu0
    %v4016 = vxor.u32 %v3929, 2147483648
    %v4017 = vxor.u32 %v3931, 2147483648
    %v4018 = vxor.u32 %v4006, 2147483648
    %v4019 = vxor.u32 %v3935, 2147483648
    %v4020 = vxor.u32 %v3937, 2147483648
    %v4021 = vxor.u32 %v4012, 2147483648
    %v4022 = vmul.f32 %v4016, 1.442695
    %v4023 = vpow.pop %v4022
    %v4024 = vmul.f32 %v4017, 1.442695
    %v4025 = vpow.pop %v4024
    %v4026 = vmul.f32 %v4018, 1.442695
    %v4027 = vpow.pop %v4026
    %v4028 = vmul.f32 %v4019, 1.442695
    %v4029 = vpow.pop %v4028
    %v4030 = vmul.f32 %v4020, 1.442695
    %v4031 = vpow.pop %v4030
    %v4032 = vmul.f32 %v4021, 1.442695
    %v4033 = vpow.pop %v4032
    %v4034 = vadd.f32 %v4023, 1.0
    %v4035 = vadd.f32 %v4025, 1.0
    %v4036 = vadd.f32 %v4027, 1.0
    %v4037 = vadd.f32 %v4029, 1.0
    %v4038 = vadd.f32 %v4031, 1.0
    %v4039 = vadd.f32 %v4033, 1.0
    %v4040 = vrcp.pop %v4034
    %v4041 = vmul.f32 1.0, %v4040
    %v4042 = vrcp.pop %v4035
    %v4043 = vmul.f32 1.0, %v4042
    %v4044 = vrcp.pop %v4036
    %v4045 = vmul.f32 1.0, %v4044
    %v4046 = vrcp.pop %v4037
    %v4047 = vmul.f32 1.0, %v4046
    %v4048 = vrcp.pop %v4038
    %v4049 = vmul.f32 1.0, %v4048
    %v4050 = vrcp.pop %v4039
    %v4051 = vmul.f32 1.0, %v4050
    %v4052 = vtanh.pop %v4008
    %v4053 = vtanh.pop %v4014
    %v4054 = vmul.f32 %v4043, %v3631
    %v4055 = vmul.f32 %v4049, %v3632
    %v4056 = vmul.f32 %v4041, %v4052
    %v4057 = vmul.f32 %v4047, %v4053
    %v4058 = vadd.f32 %v4054, %v4056
    %v4059 = vadd.f32 %v4055, %v4057
    %v4060 = vtanh.pop %v4058
    %v4061 = vtanh.pop %v4059
    %v4062 = vmul.f32 %v4045, %v4060
    %v4063 = vmul.f32 %v4051, %v4061
    %vm4064 = vcmp.eq.s32.totalorder %v861, 7
    %vm4065 = vcmp.eq.s32.totalorder %v864, 7
    %v4066 = vsel %vm4064, %v4062, %v3639
    %v4067 = vsel %vm4065, %v4063, %v3640
    %s4068 = smul.u32 14, 4
    %s4069 = smul.addr %s4068, 8
    %s4070 = scalar_lea.vmem [#allocation2], %s4069
    %v4071 = vld [vmem:[%s4070] sm:$0xff]
    %v4072 = vld [vmem:[%s4070 + $0x8] sm:$0xff]
    %v4073 = vld [vmem:[%s4070 + $0x10] sm:$0xff]
    %v4074 = vld [vmem:[%s4070 + $0x18] sm:$0xff]
    %v4075 = vld [vmem:[%s4070 + $0x20] sm:$0xff]
    %v4076 = vld [vmem:[%s4070 + $0x28] sm:$0xff]
    %v4077 = vld [vmem:[%s4070 + $0x30] sm:$0xff]
    %v4078 = vld [vmem:[%s4070 + $0x38] sm:$0xff]
    %4079 = vmatprep.subr.mxu0 %v866
    %4080 = vmatpush1.msra.mxu0 %v865
    %4081 = vmatprep.subr.mxu0 %v870
    %4082 = vmatpush1.msra.mxu0 %v869
    %4083 = vmatprep.subr.mxu0 %v874
    %4084 = vmatpush1.msra.mxu0 %v873
    %4085 = vmatprep.subr.mxu0 %v878
    %4086 = vmatpush1.msra.mxu0 %v877
    %4087 = vmatprep.subr.mxu0 %v882
    %4088 = vmatpush1.msra.mxu0 %v881
    %4089 = vmatprep.subr.mxu0 %v886
    %4090 = vmatpush1.msra.mxu0 %v885
    %4091 = vmatprep.subr.mxu0 %v890
    %4092 = vmatpush1.msra.mxu0 %v889
    %4093 = vmatprep.subr.mxu0 %v894
    %4094 = vmatpush1.msra.mxu0 %v893
    %4095 = vmatprep.subr.mxu0 %v898
    %4096 = vmatpush1.msra.mxu0 %v897
    %4097 = vmatprep.subr.mxu0 %v902
    %4098 = vmatpush1.msra.mxu0 %v901
    %4099 = vmatprep.subr.mxu0 %v906
    %4100 = vmatpush1.msra.mxu0 %v905
    %4101 = vmatprep.subr.mxu0 %v910
    %4102 = vmatpush1.msra.mxu0 %v909
    %4103 = vmatprep.subr.mxu0 %v914
    %4104 = vmatpush1.msra.mxu0 %v913
    %4105 = vmatprep.subr.mxu0 %v918
    %4106 = vmatpush1.msra.mxu0 %v917
    %4107 = vmatprep.subr.mxu0 %v922
    %4108 = vmatpush1.msra.mxu0 %v921
    %4109 = vmatprep.subr.mxu0 %v926
    %4110 = vmatpush1.msra.mxu0 %v925
    %4111 = vmatprep.subr.mxu0 0.0
    %4112 = vmatpush1.msra.mxu0 0.0
    %4113 = vmatprep.subr.mxu0 0.0
    %4114 = vmatpush1.msra.mxu0 0.0
    %4115 = vmatprep.subr.mxu0 0.0
    %4116 = vmatpush1.msra.mxu0 0.0
    %4117 = vmatprep.subr.mxu0 0.0
    %4118 = vmatpush1.msra.mxu0 0.0
    %4119 = vmatprep.subr.mxu0 0.0
    %4120 = vmatpush1.msra.mxu0 0.0
    %4121 = vmatprep.subr.mxu0 0.0
    %4122 = vmatpush1.msra.mxu0 0.0
    %4123 = vmatprep.subr.mxu0 0.0
    %4124 = vmatpush1.msra.mxu0 0.0
    %4125 = vmatprep.subr.mxu0 0.0
    %4126 = vmatpush1.msra.mxu0 0.0
    %4127 = vmatprep.subr.mxu0 0.0
    %4128 = vmatpush1.msra.mxu0 0.0
    %4129 = vmatprep.subr.mxu0 0.0
    %4130 = vmatpush1.msra.mxu0 0.0
    %4131 = vmatprep.subr.mxu0 0.0
    %4132 = vmatpush1.msra.mxu0 0.0
    %4133 = vmatprep.subr.mxu0 0.0
    %4134 = vmatpush1.msra.mxu0 0.0
    %4135 = vmatprep.subr.mxu0 0.0
    %4136 = vmatpush1.msra.mxu0 0.0
    %4137 = vmatprep.subr.mxu0 0.0
    %4138 = vmatpush1.msra.mxu0 0.0
    %4139 = vmatprep.subr.mxu0 0.0
    %4140 = vmatpush1.msra.mxu0 0.0
    %4141 = vmatprep.subr.mxu0 0.0
    %4142 = vmatpush1.msra.mxu0 0.0
    %4143 = vmatprep.mubr.f32.mxu0 0.0
    %4144 = vmatmul.mubr.f32.gmra.mrb[0].mxu0 %v3860
    %v4145 = vpop.f32.mrb[0].mxu0
    %v4146 = vadd.f32 0.0, %v4145
    %v4147 = vpop.f32.mrb[0].mxu0
    %v4148 = vadd.f32 0.0, %v4147
    %4149 = vmatprep.mubr.f32.mxu0 0.0
    %4150 = vmatmul.mubr.f32.gmra.mrb[0].mxu0 %v3861
    %v4151 = vpop.f32.mrb[0].mxu0
    %v4152 = vadd.f32 0.0, %v4151
    %v4153 = vpop.f32.mrb[0].mxu0
    %v4154 = vadd.f32 0.0, %v4153
    %4155 = vdwg.mxu0
    %4156 = vmatprep.subr.mxu0 %v868
    %4157 = vmatpush1.msra.mxu0 %v867
    %4158 = vmatprep.subr.mxu0 %v872
    %4159 = vmatpush1.msra.mxu0 %v871
    %4160 = vmatprep.subr.mxu0 %v876
    %4161 = vmatpush1.msra.mxu0 %v875
    %4162 = vmatprep.subr.mxu0 %v880
    %4163 = vmatpush1.msra.mxu0 %v879
    %4164 = vmatprep.subr.mxu0 %v884
    %4165 = vmatpush1.msra.mxu0 %v883
    %4166 = vmatprep.subr.mxu0 %v888
    %4167 = vmatpush1.msra.mxu0 %v887
    %4168 = vmatprep.subr.mxu0 %v892
    %4169 = vmatpush1.msra.mxu0 %v891
    %4170 = vmatprep.subr.mxu0 %v896
    %4171 = vmatpush1.msra.mxu0 %v895
    %4172 = vmatprep.subr.mxu0 %v900
    %4173 = vmatpush1.msra.mxu0 %v899
    %4174 = vmatprep.subr.mxu0 %v904
    %4175 = vmatpush1.msra.mxu0 %v903
    %4176 = vmatprep.subr.mxu0 %v908
    %4177 = vmatpush1.msra.mxu0 %v907
    %4178 = vmatprep.subr.mxu0 %v912
    %4179 = vmatpush1.msra.mxu0 %v911
    %4180 = vmatprep.subr.mxu0 %v916
    %4181 = vmatpush1.msra.mxu0 %v915
    %4182 = vmatprep.subr.mxu0 %v920
    %4183 = vmatpush1.msra.mxu0 %v919
    %4184 = vmatprep.subr.mxu0 %v924
    %4185 = vmatpush1.msra.mxu0 %v923
    %4186 = vmatprep.subr.mxu0 %v928
    %4187 = vmatpush1.msra.mxu0 %v927
    %4188 = vmatprep.subr.mxu0 0.0
    %4189 = vmatpush1.msra.mxu0 0.0
    %4190 = vmatprep.subr.mxu0 0.0
    %4191 = vmatpush1.msra.mxu0 0.0
    %4192 = vmatprep.subr.mxu0 0.0
    %4193 = vmatpush1.msra.mxu0 0.0
    %4194 = vmatprep.subr.mxu0 0.0
    %4195 = vmatpush1.msra.mxu0 0.0
    %4196 = vmatprep.subr.mxu0 0.0
    %4197 = vmatpush1.msra.mxu0 0.0
    %4198 = vmatprep.subr.mxu0 0.0
    %4199 = vmatpush1.msra.mxu0 0.0
    %4200 = vmatprep.subr.mxu0 0.0
    %4201 = vmatpush1.msra.mxu0 0.0
    %4202 = vmatprep.subr.mxu0 0.0
    %4203 = vmatpush1.msra.mxu0 0.0
    %4204 = vmatprep.subr.mxu0 0.0
    %4205 = vmatpush1.msra.mxu0 0.0
    %4206 = vmatprep.subr.mxu0 0.0
    %4207 = vmatpush1.msra.mxu0 0.0
    %4208 = vmatprep.subr.mxu0 0.0
    %4209 = vmatpush1.msra.mxu0 0.0
    %4210 = vmatprep.subr.mxu0 0.0
    %4211 = vmatpush1.msra.mxu0 0.0
    %4212 = vmatprep.subr.mxu0 0.0
    %4213 = vmatpush1.msra.mxu0 0.0
    %4214 = vmatprep.subr.mxu0 0.0
    %4215 = vmatpush1.msra.mxu0 0.0
    %4216 = vmatprep.subr.mxu0 0.0
    %4217 = vmatpush1.msra.mxu0 0.0
    %4218 = vmatprep.subr.mxu0 0.0
    %4219 = vmatpush1.msra.mxu0 0.0
    %4220 = vmatprep.mubr.f32.mxu0 0.0
    %4221 = vmatmul.mubr.f32.gmra.mrb[0].mxu0 %v3860
    %v4222 = vpop.f32.mrb[0].mxu0
    %v4223 = vadd.f32 0.0, %v4222
    %v4224 = vpop.f32.mrb[0].mxu0
    %v4225 = vadd.f32 0.0, %v4224
    %4226 = vmatprep.mubr.f32.mxu0 0.0
    %4227 = vmatmul.mubr.f32.gmra.mrb[0].mxu0 %v3861
    %v4228 = vpop.f32.mrb[0].mxu0
    %v4229 = vadd.f32 0.0, %v4228
    %v4230 = vpop.f32.mrb[0].mxu0
    %v4231 = vadd.f32 0.0, %v4230
    %4232 = vdwg.mxu0
    %v4233 = vadd.f32 %v4071, %v4146
    %v4234 = vadd.f32 %v4072, %v4148
    %v4235 = vadd.f32 %v4073, %v4223
    %v4236 = vadd.f32 %v4074, %v4225
    %v4237 = vadd.f32 %v4075, %v4152
    %v4238 = vadd.f32 %v4076, %v4154
    %v4239 = vadd.f32 %v4077, %v4229
    %v4240 = vadd.f32 %v4078, %v4231
    %v4241 = vxor.u32 %v4233, 2147483648
    %v4242 = vxor.u32 %v4234, 2147483648
    %v4243 = vxor.u32 %v4235, 2147483648
    %v4244 = vxor.u32 %v4237, 2147483648
    %v4245 = vxor.u32 %v4238, 2147483648
    %v4246 = vxor.u32 %v4239, 2147483648
    %v4247 = vmul.f32 %v4241, 1.442695
    %v4248 = vpow.pop %v4247
    %v4249 = vmul.f32 %v4242, 1.442695
    %v4250 = vpow.pop %v4249
    %v4251 = vmul.f32 %v4243, 1.442695
    %v4252 = vpow.pop %v4251
    %v4253 = vmul.f32 %v4244, 1.442695
    %v4254 = vpow.pop %v4253
    %v4255 = vmul.f32 %v4245, 1.442695
    %v4256 = vpow.pop %v4255
    %v4257 = vmul.f32 %v4246, 1.442695
    %v4258 = vpow.pop %v4257
    %v4259 = vadd.f32 %v4248, 1.0
    %v4260 = vadd.f32 %v4250, 1.0
    %v4261 = vadd.f32 %v4252, 1.0
    %v4262 = vadd.f32 %v4254, 1.0
    %v4263 = vadd.f32 %v4256, 1.0
    %v4264 = vadd.f32 %v4258, 1.0
    %v4265 = vrcp.pop %v4259
    %v4266 = vmul.f32 1.0, %v4265
    %v4267 = vrcp.pop %v4260
    %v4268 = vmul.f32 1.0, %v4267
    %v4269 = vrcp.pop %v4261
    %v4270 = vmul.f32 1.0, %v4269
    %v4271 = vrcp.pop %v4262
    %v4272 = vmul.f32 1.0, %v4271
    %v4273 = vrcp.pop %v4263
    %v4274 = vmul.f32 1.0, %v4273
    %v4275 = vrcp.pop %v4264
    %v4276 = vmul.f32 1.0, %v4275
    %v4277 = vtanh.pop %v4236
    %v4278 = vtanh.pop %v4240
    %v4279 = vmul.f32 %v4268, %v3856
    %v4280 = vmul.f32 %v4274, %v3857
    %v4281 = vmul.f32 %v4266, %v4277
    %v4282 = vmul.f32 %v4272, %v4278
    %v4283 = vadd.f32 %v4279, %v4281
    %v4284 = vadd.f32 %v4280, %v4282
    %v4285 = vtanh.pop %v4283
    %v4286 = vtanh.pop %v4284
    %v4287 = vmul.f32 %v4270, %v4285
    %v4288 = vmul.f32 %v4276, %v4286
    %4289 = vmatprep.subr.mxu0 %v930
    %4290 = vmatpush1.msra.mxu0 %v929
    %4291 = vmatprep.subr.mxu0 %v934
    %4292 = vmatpush1.msra.mxu0 %v933
    %4293 = vmatprep.subr.mxu0 %v938
    %4294 = vmatpush1.msra.mxu0 %v937
    %4295 = vmatprep.subr.mxu0 %v942
    %4296 = vmatpush1.msra.mxu0 %v941
    %4297 = vmatprep.subr.mxu0 %v946
    %4298 = vmatpush1.msra.mxu0 %v945
    %4299 = vmatprep.subr.mxu0 %v950
    %4300 = vmatpush1.msra.mxu0 %v949
    %4301 = vmatprep.subr.mxu0 %v954
    %4302 = vmatpush1.msra.mxu0 %v953
    %4303 = vmatprep.subr.mxu0 %v958
    %4304 = vmatpush1.msra.mxu0 %v957
    %4305 = vmatprep.subr.mxu0 %v962
    %4306 = vmatpush1.msra.mxu0 %v961
    %4307 = vmatprep.subr.mxu0 %v966
    %4308 = vmatpush1.msra.mxu0 %v965
    %4309 = vmatprep.subr.mxu0 %v970
    %4310 = vmatpush1.msra.mxu0 %v969
    %4311 = vmatprep.subr.mxu0 %v974
    %4312 = vmatpush1.msra.mxu0 %v973
    %4313 = vmatprep.subr.mxu0 %v978
    %4314 = vmatpush1.msra.mxu0 %v977
    %4315 = vmatprep.subr.mxu0 %v982
    %4316 = vmatpush1.msra.mxu0 %v981
    %4317 = vmatprep.subr.mxu0 %v986
    %4318 = vmatpush1.msra.mxu0 %v985
    %4319 = vmatprep.subr.mxu0 %v990
    %4320 = vmatpush1.msra.mxu0 %v989
    %4321 = vmatprep.subr.mxu0 %v994
    %4322 = vmatpush1.msra.mxu0 %v993
    %4323 = vmatprep.subr.mxu0 %v998
    %4324 = vmatpush1.msra.mxu0 %v997
    %4325 = vmatprep.subr.mxu0 %v1002
    %4326 = vmatpush1.msra.mxu0 %v1001
    %4327 = vmatprep.subr.mxu0 %v1006
    %4328 = vmatpush1.msra.mxu0 %v1005
    %4329 = vmatprep.subr.mxu0 %v1010
    %4330 = vmatpush1.msra.mxu0 %v1009
    %4331 = vmatprep.subr.mxu0 %v1014
    %4332 = vmatpush1.msra.mxu0 %v1013
    %4333 = vmatprep.subr.mxu0 %v1018
    %4334 = vmatpush1.msra.mxu0 %v1017
    %4335 = vmatprep.subr.mxu0 %v1022
    %4336 = vmatpush1.msra.mxu0 %v1021
    %4337 = vmatprep.subr.mxu0 %v1026
    %4338 = vmatpush1.msra.mxu0 %v1025
    %4339 = vmatprep.subr.mxu0 %v1030
    %4340 = vmatpush1.msra.mxu0 %v1029
    %4341 = vmatprep.subr.mxu0 %v1034
    %4342 = vmatpush1.msra.mxu0 %v1033
    %4343 = vmatprep.subr.mxu0 %v1038
    %4344 = vmatpush1.msra.mxu0 %v1037
    %4345 = vmatprep.subr.mxu0 %v1042
    %4346 = vmatpush1.msra.mxu0 %v1041
    %4347 = vmatprep.subr.mxu0 %v1046
    %4348 = vmatpush1.msra.mxu0 %v1045
    %4349 = vmatprep.subr.mxu0 %v1050
    %4350 = vmatpush1.msra.mxu0 %v1049
    %4351 = vmatprep.subr.mxu0 %v1054
    %4352 = vmatpush1.msra.mxu0 %v1053
    %4353 = vmatprep.mubr.f32.mxu0 %v4062
    %4354 = vmatmul.mubr.f32.gmra.mrb[0].mxu0 %v4287
    %v4355 = vpop.f32.mrb[0].mxu0
    %v4356 = vadd.f32 %v1283, %v4355
    %v4357 = vpop.f32.mrb[0].mxu0
    %v4358 = vadd.f32 %v1287, %v4357
    %4359 = vmatprep.mubr.f32.mxu0 %v4063
    %4360 = vmatmul.mubr.f32.gmra.mrb[0].mxu0 %v4288
    %v4361 = vpop.f32.mrb[0].mxu0
    %v4362 = vadd.f32 %v1283, %v4361
    %v4363 = vpop.f32.mrb[0].mxu0
    %v4364 = vadd.f32 %v1287, %v4363
    %4365 = vdwg.mxu0
    %4366 = vmatprep.subr.mxu0 %v932
    %4367 = vmatpush1.msra.mxu0 %v931
    %4368 = vmatprep.subr.mxu0 %v936
    %4369 = vmatpush1.msra.mxu0 %v935
    %4370 = vmatprep.subr.mxu0 %v940
    %4371 = vmatpush1.msra.mxu0 %v939
    %4372 = vmatprep.subr.mxu0 %v944
    %4373 = vmatpush1.msra.mxu0 %v943
    %4374 = vmatprep.subr.mxu0 %v948
    %4375 = vmatpush1.msra.mxu0 %v947
    %4376 = vmatprep.subr.mxu0 %v952
    %4377 = vmatpush1.msra.mxu0 %v951
    %4378 = vmatprep.subr.mxu0 %v956
    %4379 = vmatpush1.msra.mxu0 %v955
    %4380 = vmatprep.subr.mxu0 %v960
    %4381 = vmatpush1.msra.mxu0 %v959
    %4382 = vmatprep.subr.mxu0 %v964
    %4383 = vmatpush1.msra.mxu0 %v963
    %4384 = vmatprep.subr.mxu0 %v968
    %4385 = vmatpush1.msra.mxu0 %v967
    %4386 = vmatprep.subr.mxu0 %v972
    %4387 = vmatpush1.msra.mxu0 %v971
    %4388 = vmatprep.subr.mxu0 %v976
    %4389 = vmatpush1.msra.mxu0 %v975
    %4390 = vmatprep.subr.mxu0 %v980
    %4391 = vmatpush1.msra.mxu0 %v979
    %4392 = vmatprep.subr.mxu0 %v984
    %4393 = vmatpush1.msra.mxu0 %v983
    %4394 = vmatprep.subr.mxu0 %v988
    %4395 = vmatpush1.msra.mxu0 %v987
    %4396 = vmatprep.subr.mxu0 %v992
    %4397 = vmatpush1.msra.mxu0 %v991
    %4398 = vmatprep.subr.mxu0 %v996
    %4399 = vmatpush1.msra.mxu0 %v995
    %4400 = vmatprep.subr.mxu0 %v1000
    %4401 = vmatpush1.msra.mxu0 %v999
    %4402 = vmatprep.subr.mxu0 %v1004
    %4403 = vmatpush1.msra.mxu0 %v1003
    %4404 = vmatprep.subr.mxu0 %v1008
    %4405 = vmatpush1.msra.mxu0 %v1007
    %4406 = vmatprep.subr.mxu0 %v1012
    %4407 = vmatpush1.msra.mxu0 %v1011
    %4408 = vmatprep.subr.mxu0 %v1016
    %4409 = vmatpush1.msra.mxu0 %v1015
    %4410 = vmatprep.subr.mxu0 %v1020
    %4411 = vmatpush1.msra.mxu0 %v1019
    %4412 = vmatprep.subr.mxu0 %v1024
    %4413 = vmatpush1.msra.mxu0 %v1023
    %4414 = vmatprep.subr.mxu0 %v1028
    %4415 = vmatpush1.msra.mxu0 %v1027
    %4416 = vmatprep.subr.mxu0 %v1032
    %4417 = vmatpush1.msra.mxu0 %v1031
    %4418 = vmatprep.subr.mxu0 %v1036
    %4419 = vmatpush1.msra.mxu0 %v1035
    %4420 = vmatprep.subr.mxu0 %v1040
    %4421 = vmatpush1.msra.mxu0 %v1039
    %4422 = vmatprep.subr.mxu0 %v1044
    %4423 = vmatpush1.msra.mxu0 %v1043
    %4424 = vmatprep.subr.mxu0 %v1048
    %4425 = vmatpush1.msra.mxu0 %v1047
    %4426 = vmatprep.subr.mxu0 %v1052
    %4427 = vmatpush1.msra.mxu0 %v1051
    %4428 = vmatprep.subr.mxu0 %v1056
    %4429 = vmatpush1.msra.mxu0 %v1055
    %4430 = vmatprep.mubr.f32.mxu0 %v4062
    %4431 = vmatmul.mubr.f32.gmra.mrb[0].mxu0 %v4287
    %v4432 = vpop.f32.mrb[0].mxu0
    %v4433 = vadd.f32 %v1291, %v4432
    %v4434 = vpop.f32.mrb[0].mxu0
    %v4435 = vadd.f32 %v1295, %v4434
    %4436 = vmatprep.mubr.f32.mxu0 %v4063
    %4437 = vmatmul.mubr.f32.gmra.mrb[0].mxu0 %v4288
    %v4438 = vpop.f32.mrb[0].mxu0
    %v4439 = vadd.f32 %v1291, %v4438
    %v4440 = vpop.f32.mrb[0].mxu0
    %v4441 = vadd.f32 %v1295, %v4440
    %4442 = vdwg.mxu0
    %v4443 = vxor.u32 %v4356, 2147483648
    %v4444 = vxor.u32 %v4358, 2147483648
    %v4445 = vxor.u32 %v4433, 2147483648
    %v4446 = vxor.u32 %v4362, 2147483648
    %v4447 = vxor.u32 %v4364, 2147483648
    %v4448 = vxor.u32 %v4439, 2147483648
    %v4449 = vmul.f32 %v4443, 1.442695
    %v4450 = vpow.pop %v4449
    %v4451 = vmul.f32 %v4444, 1.442695
    %v4452 = vpow.pop %v4451
    %v4453 = vmul.f32 %v4445, 1.442695
    %v4454 = vpow.pop %v4453
    %v4455 = vmul.f32 %v4446, 1.442695
    %v4456 = vpow.pop %v4455
    %v4457 = vmul.f32 %v4447, 1.442695
    %v4458 = vpow.pop %v4457
    %v4459 = vmul.f32 %v4448, 1.442695
    %v4460 = vpow.pop %v4459
    %v4461 = vadd.f32 %v4450, 1.0
    %v4462 = vadd.f32 %v4452, 1.0
    %v4463 = vadd.f32 %v4454, 1.0
    %v4464 = vadd.f32 %v4456, 1.0
    %v4465 = vadd.f32 %v4458, 1.0
    %v4466 = vadd.f32 %v4460, 1.0
    %v4467 = vrcp.pop %v4461
    %v4468 = vmul.f32 1.0, %v4467
    %v4469 = vrcp.pop %v4462
    %v4470 = vmul.f32 1.0, %v4469
    %v4471 = vrcp.pop %v4463
    %v4472 = vmul.f32 1.0, %v4471
    %v4473 = vrcp.pop %v4464
    %v4474 = vmul.f32 1.0, %v4473
    %v4475 = vrcp.pop %v4465
    %v4476 = vmul.f32 1.0, %v4475
    %v4477 = vrcp.pop %v4466
    %v4478 = vmul.f32 1.0, %v4477
    %v4479 = vtanh.pop %v4435
    %v4480 = vtanh.pop %v4441
    %v4481 = vmul.f32 %v4470, %v4058
    %v4482 = vmul.f32 %v4476, %v4059
    %v4483 = vmul.f32 %v4468, %v4479
    %v4484 = vmul.f32 %v4474, %v4480
    %v4485 = vadd.f32 %v4481, %v4483
    %v4486 = vadd.f32 %v4482, %v4484
    %v4487 = vtanh.pop %v4485
    %v4488 = vtanh.pop %v4486
    %v4489 = vmul.f32 %v4472, %v4487
    %v4490 = vmul.f32 %v4478, %v4488
    %vm4491 = vcmp.eq.s32.totalorder %v861, 8
    %vm4492 = vcmp.eq.s32.totalorder %v864, 8
    %v4493 = vsel %vm4491, %v4489, %v4066
    %v4494 = vsel %vm4492, %v4490, %v4067
    %v4495 = vld [vmem:[%s9] sm:$0xff]
    %v4496 = vld [vmem:[%s9 + $0x8] sm:$0xff]
    %v4497 = vld [vmem:[%s9 + $0x10] sm:$0xff]
    %v4498 = vld [vmem:[%s9 + $0x18] sm:$0xff]
    %v4499 = vld [vmem:[%s9 + $0x20] sm:$0xff]
    %v4500 = vld [vmem:[%s9 + $0x28] sm:$0xff]
    %v4501 = vld [vmem:[%s9 + $0x30] sm:$0xff]
    %v4502 = vld [vmem:[%s9 + $0x38] sm:$0xff]
    %v4503 = vld [vmem:[%s9 + $0x40] sm:$0xff]
    %v4504 = vld [vmem:[%s9 + $0x48] sm:$0xff]
    %v4505 = vld [vmem:[%s9 + $0x50] sm:$0xff]
    %v4506 = vld [vmem:[%s9 + $0x58] sm:$0xff]
    %v4507 = vld [vmem:[%s9 + $0x60] sm:$0xff]
    %v4508 = vld [vmem:[%s9 + $0x68] sm:$0xff]
    %v4509 = vld [vmem:[%s9 + $0x70] sm:$0xff]
    %v4510 = vld [vmem:[%s9 + $0x78] sm:$0xff]
    %v4511 = vld [vmem:[%s10] sm:$0x1]
    %v4513 = vlaneseq
    %v4514 = vshrl.u32 %v4513, 7
    %v4515 = vsub.s32 0, %v4514
    %v4516 = vrot.slane %v4511, %v4515
    %4518 = vmatprep.subr.mxu0 0.0
    %4519 = vmatpush1.msra.mxu0 %v4495
    %4520 = vmatprep.subr.mxu0 0.0
    %4521 = vmatpush1.msra.mxu0 %v4496
    %4522 = vmatprep.subr.mxu0 0.0
    %4523 = vmatpush1.msra.mxu0 %v4497
    %4524 = vmatprep.subr.mxu0 0.0
    %4525 = vmatpush1.msra.mxu0 %v4498
    %4526 = vmatprep.subr.mxu0 0.0
    %4527 = vmatpush1.msra.mxu0 %v4499
    %4528 = vmatprep.subr.mxu0 0.0
    %4529 = vmatpush1.msra.mxu0 %v4500
    %4530 = vmatprep.subr.mxu0 0.0
    %4531 = vmatpush1.msra.mxu0 %v4501
    %4532 = vmatprep.subr.mxu0 0.0
    %4533 = vmatpush1.msra.mxu0 %v4502
    %4534 = vmatprep.subr.mxu0 0.0
    %4535 = vmatpush1.msra.mxu0 %v4503
    %4536 = vmatprep.subr.mxu0 0.0
    %4537 = vmatpush1.msra.mxu0 %v4504
    %4538 = vmatprep.subr.mxu0 0.0
    %4539 = vmatpush1.msra.mxu0 %v4505
    %4540 = vmatprep.subr.mxu0 0.0
    %4541 = vmatpush1.msra.mxu0 %v4506
    %4542 = vmatprep.subr.mxu0 0.0
    %4543 = vmatpush1.msra.mxu0 %v4507
    %4544 = vmatprep.subr.mxu0 0.0
    %4545 = vmatpush1.msra.mxu0 %v4508
    %4546 = vmatprep.subr.mxu0 0.0
    %4547 = vmatpush1.msra.mxu0 %v4509
    %4548 = vmatprep.subr.mxu0 0.0
    %4549 = vmatpush1.msra.mxu0 %v4510
    %4550 = vmatprep.subr.mxu0 0.0
    %4551 = vmatpush1.msra.mxu0 0.0
    %4552 = vmatprep.subr.mxu0 0.0
    %4553 = vmatpush1.msra.mxu0 0.0
    %4554 = vmatprep.subr.mxu0 0.0
    %4555 = vmatpush1.msra.mxu0 0.0
    %4556 = vmatprep.subr.mxu0 0.0
    %4557 = vmatpush1.msra.mxu0 0.0
    %4558 = vmatprep.subr.mxu0 0.0
    %4559 = vmatpush1.msra.mxu0 0.0
    %4560 = vmatprep.subr.mxu0 0.0
    %4561 = vmatpush1.msra.mxu0 0.0
    %4562 = vmatprep.subr.mxu0 0.0
    %4563 = vmatpush1.msra.mxu0 0.0
    %4564 = vmatprep.subr.mxu0 0.0
    %4565 = vmatpush1.msra.mxu0 0.0
    %4566 = vmatprep.subr.mxu0 0.0
    %4567 = vmatpush1.msra.mxu0 0.0
    %4568 = vmatprep.subr.mxu0 0.0
    %4569 = vmatpush1.msra.mxu0 0.0
    %4570 = vmatprep.subr.mxu0 0.0
    %4571 = vmatpush1.msra.mxu0 0.0
    %4572 = vmatprep.subr.mxu0 0.0
    %4573 = vmatpush1.msra.mxu0 0.0
    %4574 = vmatprep.subr.mxu0 0.0
    %4575 = vmatpush1.msra.mxu0 0.0
    %4576 = vmatprep.subr.mxu0 0.0
    %4577 = vmatpush1.msra.mxu0 0.0
    %4578 = vmatprep.subr.mxu0 0.0
    %4579 = vmatpush1.msra.mxu0 0.0
    %4580 = vmatprep.subr.mxu0 0.0
    %4581 = vmatpush1.msra.mxu0 0.0
    %4582 = vmatprep.mubr.f32.mxu0 0.0
    %4583 = vmatmul.mubr.f32.gmra.mrb[0].mxu0 %v4493
    %v4584 = vpop.f32.mrb[0].mxu0
    %v4585 = vadd.f32 %v4516, %v4584
    %v4586 = vpop.f32.mrb[0].mxu0
    %4587 = vmatprep.mubr.f32.mxu0 0.0
    %4588 = vmatmul.mubr.f32.gmra.mrb[0].mxu0 %v4494
    %v4589 = vpop.f32.mrb[0].mxu0
    %v4590 = vadd.f32 %v4516, %v4589
    %v4591 = vpop.f32.mrb[0].mxu0
    %4592 = vdwg.mxu0
    %4593 = vst [vmem:[%s11] sm:$0xff] %v4585
    %4594 = vst [vmem:[%s11 + $0x8] sm:$0xff] %v4590
    // Predicated region
    $region54: #{seqback_lstm_forward.1} parent=1 // pred_check
      _
    $region55: #{seqback_lstm_forward.1} parent=1 // pred_check_branch
      %4596 = sbr.rel (0) target = $region57
    $region56: #{seqback_lstm_forward.1} parent=1 // pred_region
      _
    $region57: #{seqback_lstm_forward.1} parent=1 // pred_fallthru
      _
    // Predicated region
    $region58: #{seqback_lstm_forward.1} parent=1 // pred_check
      _
    $region59: #{seqback_lstm_forward.1} parent=1 // pred_check_branch
      %4598 = sbr.rel (0) target = $region61
    $region60: #{seqback_lstm_forward.1} parent=1 // pred_region
      _
    $region61: #{seqback_lstm_forward.1} parent=1 // pred_fallthru
      _
    %4599 = vsyncpa [#allocation4], 1
    %4600 = vsyncpa [#allocation6], 1

</llo_original>
